<compile_context>
chip_gen: v5e
topology: v5e:2x2
jax: 0.10.0
libtpu: 0.0.40
codegen_flags: <defaults>
</compile_context>

<pallas_src>
import numpy as np
import jax
import jax.numpy as jnp
from jax import lax
from jax.experimental import pallas as pl
from jax.experimental.pallas import tpu as pltpu


def _interframe_noiser_kernel(x_ref, flow_ref, u_h_ref, u_w_ref,
                              dct_h_ref, dct_w_ref, qtab_ref, inv_qtab_ref,
                              out_ref):
    C, H, W = x_ref.shape
    f32 = jnp.float32

    # ------------- flow-dependent work: ONCE per batch element -------------
    # TODO(synk): `Warp` source not provided; implemented as the standard
    # pixel-space flow warp (bilinear interpolation, zeros padding).
    dxb = flow_ref[0]                       # (hb, wb) horizontal (W axis)
    dyb = flow_ref[1]                       # (hb, wb) vertical   (H axis)

    fdx = jnp.floor(dxb)
    fdy = jnp.floor(dyb)
    fx = dxb - fdx                          # fractional parts in [0, 1)
    fy = dyb - fdy

    # Weight of integer shift s in {-1, 0, +1}; |flow| <= 1 guarantees these
    # three taps cover every bilinear corner.  Computed at block resolution
    # (the flow is piecewise-constant per blockSize x blockSize block).
    def tap_weights(fd, fr):
        return [jnp.where(fd == float(s), 1.0 - fr, 0.0)
                + jnp.where(fd == float(s - 1), fr, 0.0)
                for s in (-1, 0, 1)]

    wxb = tap_weights(fdx, fx)              # 3 x (hb, wb)
    wyb = tap_weights(fdy, fy)              # 3 x (hb, wb)

    # Exact nearest-upsample (pure block replication) via 0/1 expansion
    # matmuls on the MXU -- bit-identical to computing weights at full res.
    u_h = u_h_ref[...]                      # (H, hb)
    u_w = u_w_ref[...]                      # (W, wb)

    def upsample(blk):
        mid = jnp.dot(u_h, blk, preferred_element_type=f32)         # (H, wb)
        return lax.dot_general(mid, u_w, (((1,), (1,)), ((), ())),
                               preferred_element_type=f32)          # (H, W)

    wx_f = [upsample(w) for w in wxb]       # 3 x (H, W)
    wy_f = [upsample(w) for w in wyb]       # 3 x (H, W)

    # Zeros-padding boundary masks folded into the 4 shifted weight maps
    # (only the first/last row/column differ; the wrapped roll() pixels are
    # multiplied by 0 here, so no per-channel select is needed).
    row = lax.broadcasted_iota(jnp.int32, (H, W), 0)
    col = lax.broadcasted_iota(jnp.int32, (H, W), 1)
    wy_f[0] = jnp.where(row >= 1, wy_f[0], 0.0)         # shift -1 along H
    wy_f[2] = jnp.where(row <= H - 2, wy_f[2], 0.0)     # shift +1 along H
    wx_f[0] = jnp.where(col >= 1, wx_f[0], 0.0)         # shift -1 along W
    wx_f[2] = jnp.where(col <= W - 2, wx_f[2], 0.0)     # shift +1 along W

    # ------------- per-channel warp + JPEG(residual) ------------------------
    # TODO(synk): `JPGQuantizeFun` source not provided; implemented as 8x8
    # block DCT -> quantize (std JPEG luma table @ quality) -> round ->
    # dequantize -> IDCT, applied to residual*255.
    dct_h = dct_h_ref[...]                  # (H, H) = kron(I_{H/8}, dct8)
    dct_w = dct_w_ref[...]                  # (W, W)
    qtab = qtab_ref[...]                    # (H, W) tiled quantization table
    inv_qtab = inv_qtab_ref[...]            # (H, W) precomputed reciprocal

    for c in range(C):                      # static unroll; C is small
        xc = x_ref[c]                       # (H, W)

        # Separable 9-tap accumulation; per tap this is just mul+add since
        # the (masked) weights were precomputed above.  Rolls run on the XLU.
        warped = jnp.zeros((H, W), dtype=f32)
        for iy, sy in enumerate((-1, 0, 1)):
            xs = xc if sy == 0 else pltpu.roll(xc, shift=(-sy) % H, axis=0)
            inner = wx_f[1] * xs
            for ix, sx in ((0, -1), (2, 1)):
                inner = inner + wx_f[ix] * pltpu.roll(xs, shift=(-sx) % W,
                                                      axis=1)
            warped = warped + wy_f[iy] * inner

        residual = (xc - warped) * 255.0
        # coef = dct_h @ residual @ dct_w.T  (transposes via dot_general,
        # so no dct_ht / dct_wt constants are shipped to VMEM)
        t1 = lax.dot_general(residual, dct_w, (((1,), (1,)), ((), ())),
                             preferred_element_type=f32)
        coef = jnp.dot(dct_h, t1, preferred_element_type=f32)
        coef_q = jnp.round(coef * inv_qtab) * qtab
        # res = dct_h.T @ coef_q @ dct_w
        t2 = lax.dot_general(dct_h, coef_q, (((0,), (0,)), ((), ())),
                             preferred_element_type=f32)
        res_jpeg = jnp.dot(t2, dct_w,
                           preferred_element_type=f32) * (1.0 / 255.0)

        out_ref[c] = warped + res_jpeg


# ------------------------------ glue / params --------------------------------

_JPEG_LUMA = np.array(
    [[16, 11, 10, 16, 24, 40, 51, 61],
     [12, 12, 14, 19, 26, 58, 60, 55],
     [14, 13, 16, 24, 40, 57, 69, 56],
     [14, 17, 22, 29, 51, 87, 80, 62],
     [18, 22, 37, 56, 68, 109, 103, 77],
     [24, 35, 55, 64, 81, 104, 113, 92],
     [49, 64, 78, 87, 103, 121, 120, 101],
     [72, 92, 95, 98, 112, 100, 103, 99]], dtype=np.float64)


def _dct8():
    n = np.arange(8, dtype=np.float64)
    k = n[:, None]
    d = np.sqrt(2.0 / 8.0) * np.cos(np.pi * (2.0 * n[None, :] + 1.0) * k / 16.0)
    d[0, :] = np.sqrt(1.0 / 8.0)
    return d


def _jpeg_qtable(quality01):
    q = float(np.clip(quality01 * 100.0, 1.0, 100.0))
    scale = 5000.0 / q if q < 50.0 else 200.0 - 2.0 * q
    t = np.floor((_JPEG_LUMA * scale + 50.0) / 100.0)
    return np.clip(t, 1.0, 255.0)


def make_interframe_noiser(H=256, W=256, blockSize=16, prob=1.0, jpegQuality=0.7):
    assert H % 8 == 0 and W % 8 == 0
    assert H % blockSize == 0 and W % blockSize == 0
    # 9-tap warp enumeration requires every bilinear corner to lie at an
    # integer shift in {-1,0,+1}, i.e. |flow| <= 1.
    assert prob <= 1.0, "InterFrameNoiser Pallas kernel requires prob <= 1"
    hb, wb = H // blockSize, W // blockSize

    d8 = _dct8()
    # TODO(synk): for H,W >= 512 switch to row-strip block-diagonal DCT tiles
    # (kron(I_{strip/8}, d8)) so VMEM stays flat on v7x (64 MiB) instead of
    # growing quadratically with the dense (H,H)/(W,W) constants below.
    dct_h = jnp.asarray(np.kron(np.eye(H // 8), d8), dtype=jnp.float32)
    dct_w = jnp.asarray(np.kron(np.eye(W // 8), d8), dtype=jnp.float32)
    qt = np.tile(_jpeg_qtable(jpegQuality), (H // 8, W // 8))
    qtab = jnp.asarray(qt, dtype=jnp.float32)
    inv_qtab = jnp.asarray(1.0 / qt, dtype=jnp.float32)   # divide -> multiply

    # 0/1 nearest-upsample (block replication) expansion matrices
    u_h = jnp.asarray((np.arange(H)[:, None] // blockSize
                       == np.arange(hb)[None, :]).astype(np.float32))
    u_w = jnp.asarray((np.arange(W)[:, None] // blockSize
                       == np.arange(wb)[None, :]).astype(np.float32))

    def forward(x, key):
        B, C, Hx, Wx = x.shape
        assert (Hx, Wx) == (H, W)
        # Jitter flow at block resolution, uniform in [-1,1]*prob; it is
        # nearest-upsampled inside the kernel (full-res flow never hits HBM).
        flow_blk = (jax.random.uniform(key, (B, 2, hb, wb), jnp.float32)
                    * 2.0 - 1.0) * prob

        kernel = pl.pallas_call(
            _interframe_noiser_kernel,
            out_shape=jax.ShapeDtypeStruct((B, C, H, W), jnp.float32),
            grid_spec=pltpu.PrefetchScalarGridSpec(
                num_scalar_prefetch=0,
                grid=(B,),
                in_specs=[
                    pl.BlockSpec((None, C, H, W), lambda b: (b, 0, 0, 0)),
                    pl.BlockSpec((None, 2, hb, wb), lambda b: (b, 0, 0, 0)),
                    # constants: index_map is grid-invariant, so they are not
                    # re-fetched across grid steps
                    pl.BlockSpec((H, hb), lambda b: (0, 0)),
                    pl.BlockSpec((W, wb), lambda b: (0, 0)),
                    pl.BlockSpec((H, H), lambda b: (0, 0)),
                    pl.BlockSpec((W, W), lambda b: (0, 0)),
                    pl.BlockSpec((H, W), lambda b: (0, 0)),
                    pl.BlockSpec((H, W), lambda b: (0, 0)),
                ],
                out_specs=pl.BlockSpec((None, C, H, W),
                                       lambda b: (b, 0, 0, 0)),
            ),
            compiler_params=pltpu.CompilerParams(
                dimension_semantics=("parallel",)),
        )
        return kernel(x.astype(jnp.float32), flow_blk,
                      u_h, u_w, dct_h, dct_w, qtab, inv_qtab)

    return forward


if __name__ == "__main__":
    # Small but lane-dense demo shapes (W = 128 -> unmasked full-lane stores).
    B, C, H, W = 2, 3, 128, 128
    noiser = make_interframe_noiser(H=H, W=W, blockSize=16, prob=1.0,
                                    jpegQuality=0.7)

    key = jax.random.PRNGKey(0)
    kx, kflow = jax.random.split(key)
    x = jax.random.uniform(kx, (B, C, H, W), jnp.float32)

    out = noiser(x, kflow)
    out = jax.block_until_ready(out)
    assert out.shape == (B, C, H, W) and out.dtype == jnp.float32
    assert bool(jnp.all(jnp.isfinite(out)))
    print("KERNEL_OK")
</pallas_src>

<mosaic_0001>
module attributes {stable_mosaic.version = 11 : i64} {
  func.func @_interframe_noiser_kernel(%arg0: i32, %arg1: memref<1x3x128x128xf32, #tpu.memory_space<vmem>>, %arg2: memref<1x2x8x8xf32, #tpu.memory_space<vmem>>, %arg3: memref<128x8xf32, #tpu.memory_space<vmem>>, %arg4: memref<128x8xf32, #tpu.memory_space<vmem>>, %arg5: memref<128x128xf32, #tpu.memory_space<vmem>>, %arg6: memref<128x128xf32, #tpu.memory_space<vmem>>, %arg7: memref<128x128xf32, #tpu.memory_space<vmem>>, %arg8: memref<128x128xf32, #tpu.memory_space<vmem>>, %arg9: memref<1x3x128x128xf32, #tpu.memory_space<vmem>>) attributes {dimension_semantics = [#tpu.dimension_semantics<parallel>], iteration_bounds = array<i64: 2>, scalar_prefetch = 0 : i64, scratch_operands = 0 : i64, tpu.core_type = #tpu.core_type<tc>, window_params = [{transform_indices = @transform_0, window_bounds = array<i64: 1, 3, 128, 128>}, {transform_indices = @transform_1, window_bounds = array<i64: 1, 2, 8, 8>}, {pipeline_mode = #tpu.pipeline_mode<synchronous>, transform_indices = @transform_2, window_bounds = array<i64: 128, 8>}, {pipeline_mode = #tpu.pipeline_mode<synchronous>, transform_indices = @transform_3, window_bounds = array<i64: 128, 8>}, {pipeline_mode = #tpu.pipeline_mode<synchronous>, transform_indices = @transform_4, window_bounds = array<i64: 128, 128>}, {pipeline_mode = #tpu.pipeline_mode<synchronous>, transform_indices = @transform_5, window_bounds = array<i64: 128, 128>}, {pipeline_mode = #tpu.pipeline_mode<synchronous>, transform_indices = @transform_6, window_bounds = array<i64: 128, 128>}, {pipeline_mode = #tpu.pipeline_mode<synchronous>, transform_indices = @transform_7, window_bounds = array<i64: 128, 128>}, {transform_indices = @transform_8, window_bounds = array<i64: 1, 3, 128, 128>}]} {
    %c0 = arith.constant 0 : index
    %c0_0 = arith.constant 0 : index
    %c0_1 = arith.constant 0 : index
    %c0_2 = arith.constant 0 : index
    %0 = vector.load %arg2[%c0, %c0_0, %c0_1, %c0_2] : memref<1x2x8x8xf32, #tpu.memory_space<vmem>>, vector<1x1x8x8xf32>
    %1 = vector.shape_cast %0 : vector<1x1x8x8xf32> to vector<8x8xf32>
    %c0_3 = arith.constant 0 : index
    %c1 = arith.constant 1 : index
    %c0_4 = arith.constant 0 : index
    %c0_5 = arith.constant 0 : index
    %2 = vector.load %arg2[%c0_3, %c1, %c0_4, %c0_5] : memref<1x2x8x8xf32, #tpu.memory_space<vmem>>, vector<1x1x8x8xf32>
    %3 = vector.shape_cast %2 : vector<1x1x8x8xf32> to vector<8x8xf32>
    %4 = math.floor %1 : vector<8x8xf32>
    %5 = math.floor %3 : vector<8x8xf32>
    %6 = arith.subf %1, %4 : vector<8x8xf32>
    %7 = arith.subf %3, %5 : vector<8x8xf32>
    %cst = arith.constant -1.000000e+00 : f32
    %8 = vector.broadcast %cst : f32 to vector<8x8xf32>
    %9 = arith.cmpf oeq, %4, %8 : vector<8x8xf32>
    %cst_6 = arith.constant 1.000000e+00 : f32
    %10 = vector.broadcast %cst_6 : f32 to vector<8x8xf32>
    %11 = arith.subf %10, %6 : vector<8x8xf32>
    %cst_7 = arith.constant 0.000000e+00 : f32
    %12 = vector.broadcast %cst_7 : f32 to vector<8x8xf32>
    %13 = arith.select %9, %11, %12 : vector<8x8xi1>, vector<8x8xf32>
    %cst_8 = arith.constant -2.000000e+00 : f32
    %14 = vector.broadcast %cst_8 : f32 to vector<8x8xf32>
    %15 = arith.cmpf oeq, %4, %14 : vector<8x8xf32>
    %cst_9 = arith.constant 0.000000e+00 : f32
    %16 = vector.broadcast %cst_9 : f32 to vector<8x8xf32>
    %17 = arith.select %15, %6, %16 : vector<8x8xi1>, vector<8x8xf32>
    %18 = arith.addf %13, %17 : vector<8x8xf32>
    %cst_10 = arith.constant 0.000000e+00 : f32
    %19 = vector.broadcast %cst_10 : f32 to vector<8x8xf32>
    %20 = arith.cmpf oeq, %4, %19 : vector<8x8xf32>
    %cst_11 = arith.constant 1.000000e+00 : f32
    %21 = vector.broadcast %cst_11 : f32 to vector<8x8xf32>
    %22 = arith.subf %21, %6 : vector<8x8xf32>
    %cst_12 = arith.constant 0.000000e+00 : f32
    %23 = vector.broadcast %cst_12 : f32 to vector<8x8xf32>
    %24 = arith.select %20, %22, %23 : vector<8x8xi1>, vector<8x8xf32>
    %cst_13 = arith.constant -1.000000e+00 : f32
    %25 = vector.broadcast %cst_13 : f32 to vector<8x8xf32>
    %26 = arith.cmpf oeq, %4, %25 : vector<8x8xf32>
    %cst_14 = arith.constant 0.000000e+00 : f32
    %27 = vector.broadcast %cst_14 : f32 to vector<8x8xf32>
    %28 = arith.select %26, %6, %27 : vector<8x8xi1>, vector<8x8xf32>
    %29 = arith.addf %24, %28 : vector<8x8xf32>
    %cst_15 = arith.constant 1.000000e+00 : f32
    %30 = vector.broadcast %cst_15 : f32 to vector<8x8xf32>
    %31 = arith.cmpf oeq, %4, %30 : vector<8x8xf32>
    %cst_16 = arith.constant 1.000000e+00 : f32
    %32 = vector.broadcast %cst_16 : f32 to vector<8x8xf32>
    %33 = arith.subf %32, %6 : vector<8x8xf32>
    %cst_17 = arith.constant 0.000000e+00 : f32
    %34 = vector.broadcast %cst_17 : f32 to vector<8x8xf32>
    %35 = arith.select %31, %33, %34 : vector<8x8xi1>, vector<8x8xf32>
    %cst_18 = arith.constant 0.000000e+00 : f32
    %36 = vector.broadcast %cst_18 : f32 to vector<8x8xf32>
    %37 = arith.cmpf oeq, %4, %36 : vector<8x8xf32>
    %cst_19 = arith.constant 0.000000e+00 : f32
    %38 = vector.broadcast %cst_19 : f32 to vector<8x8xf32>
    %39 = arith.select %37, %6, %38 : vector<8x8xi1>, vector<8x8xf32>
    %40 = arith.addf %35, %39 : vector<8x8xf32>
    %cst_20 = arith.constant -1.000000e+00 : f32
    %41 = vector.broadcast %cst_20 : f32 to vector<8x8xf32>
    %42 = arith.cmpf oeq, %5, %41 : vector<8x8xf32>
    %cst_21 = arith.constant 1.000000e+00 : f32
    %43 = vector.broadcast %cst_21 : f32 to vector<8x8xf32>
    %44 = arith.subf %43, %7 : vector<8x8xf32>
    %cst_22 = arith.constant 0.000000e+00 : f32
    %45 = vector.broadcast %cst_22 : f32 to vector<8x8xf32>
    %46 = arith.select %42, %44, %45 : vector<8x8xi1>, vector<8x8xf32>
    %cst_23 = arith.constant -2.000000e+00 : f32
    %47 = vector.broadcast %cst_23 : f32 to vector<8x8xf32>
    %48 = arith.cmpf oeq, %5, %47 : vector<8x8xf32>
    %cst_24 = arith.constant 0.000000e+00 : f32
    %49 = vector.broadcast %cst_24 : f32 to vector<8x8xf32>
    %50 = arith.select %48, %7, %49 : vector<8x8xi1>, vector<8x8xf32>
    %51 = arith.addf %46, %50 : vector<8x8xf32>
    %cst_25 = arith.constant 0.000000e+00 : f32
    %52 = vector.broadcast %cst_25 : f32 to vector<8x8xf32>
    %53 = arith.cmpf oeq, %5, %52 : vector<8x8xf32>
    %cst_26 = arith.constant 1.000000e+00 : f32
    %54 = vector.broadcast %cst_26 : f32 to vector<8x8xf32>
    %55 = arith.subf %54, %7 : vector<8x8xf32>
    %cst_27 = arith.constant 0.000000e+00 : f32
    %56 = vector.broadcast %cst_27 : f32 to vector<8x8xf32>
    %57 = arith.select %53, %55, %56 : vector<8x8xi1>, vector<8x8xf32>
    %cst_28 = arith.constant -1.000000e+00 : f32
    %58 = vector.broadcast %cst_28 : f32 to vector<8x8xf32>
    %59 = arith.cmpf oeq, %5, %58 : vector<8x8xf32>
    %cst_29 = arith.constant 0.000000e+00 : f32
    %60 = vector.broadcast %cst_29 : f32 to vector<8x8xf32>
    %61 = arith.select %59, %7, %60 : vector<8x8xi1>, vector<8x8xf32>
    %62 = arith.addf %57, %61 : vector<8x8xf32>
    %cst_30 = arith.constant 1.000000e+00 : f32
    %63 = vector.broadcast %cst_30 : f32 to vector<8x8xf32>
    %64 = arith.cmpf oeq, %5, %63 : vector<8x8xf32>
    %cst_31 = arith.constant 1.000000e+00 : f32
    %65 = vector.broadcast %cst_31 : f32 to vector<8x8xf32>
    %66 = arith.subf %65, %7 : vector<8x8xf32>
    %cst_32 = arith.constant 0.000000e+00 : f32
    %67 = vector.broadcast %cst_32 : f32 to vector<8x8xf32>
    %68 = arith.select %64, %66, %67 : vector<8x8xi1>, vector<8x8xf32>
    %cst_33 = arith.constant 0.000000e+00 : f32
    %69 = vector.broadcast %cst_33 : f32 to vector<8x8xf32>
    %70 = arith.cmpf oeq, %5, %69 : vector<8x8xf32>
    %cst_34 = arith.constant 0.000000e+00 : f32
    %71 = vector.broadcast %cst_34 : f32 to vector<8x8xf32>
    %72 = arith.select %70, %7, %71 : vector<8x8xi1>, vector<8x8xf32>
    %73 = arith.addf %68, %72 : vector<8x8xf32>
    %c0_35 = arith.constant 0 : index
    %c0_36 = arith.constant 0 : index
    %74 = vector.load %arg3[%c0_35, %c0_36] : memref<128x8xf32, #tpu.memory_space<vmem>>, vector<128x8xf32>
    %c0_37 = arith.constant 0 : index
    %c0_38 = arith.constant 0 : index
    %75 = vector.load %arg4[%c0_37, %c0_38] : memref<128x8xf32, #tpu.memory_space<vmem>>, vector<128x8xf32>
    %cst_39 = arith.constant dense<0.000000e+00> : vector<128x8xf32>
    %76 = tpu.matmul %74, %18, %cst_39 {dimension_numbers = #tpu.dot_dimension_numbers<[1], [0], [0], [1], [0, 0, 1, 1], [], []>} : vector<128x8xf32>, vector<8x8xf32>, vector<128x8xf32> -> vector<128x8xf32>
    %cst_40 = arith.constant dense<0.000000e+00> : vector<128x128xf32>
    %77 = tpu.matmul %76, %75, %cst_40 {dimension_numbers = #tpu.dot_dimension_numbers<[1], [1], [0], [0], [0, 0, 1, 0], [], []>} : vector<128x8xf32>, vector<128x8xf32>, vector<128x128xf32> -> vector<128x128xf32>
    %cst_41 = arith.constant dense<0.000000e+00> : vector<128x8xf32>
    %78 = tpu.matmul %74, %29, %cst_41 {dimension_numbers = #tpu.dot_dimension_numbers<[1], [0], [0], [1], [0, 0, 1, 1], [], []>} : vector<128x8xf32>, vector<8x8xf32>, vector<128x8xf32> -> vector<128x8xf32>
    %cst_42 = arith.constant dense<0.000000e+00> : vector<128x128xf32>
    %79 = tpu.matmul %78, %75, %cst_42 {dimension_numbers = #tpu.dot_dimension_numbers<[1], [1], [0], [0], [0, 0, 1, 0], [], []>} : vector<128x8xf32>, vector<128x8xf32>, vector<128x128xf32> -> vector<128x128xf32>
    %cst_43 = arith.constant dense<0.000000e+00> : vector<128x8xf32>
    %80 = tpu.matmul %74, %40, %cst_43 {dimension_numbers = #tpu.dot_dimension_numbers<[1], [0], [0], [1], [0, 0, 1, 1], [], []>} : vector<128x8xf32>, vector<8x8xf32>, vector<128x8xf32> -> vector<128x8xf32>
    %cst_44 = arith.constant dense<0.000000e+00> : vector<128x128xf32>
    %81 = tpu.matmul %80, %75, %cst_44 {dimension_numbers = #tpu.dot_dimension_numbers<[1], [1], [0], [0], [0, 0, 1, 0], [], []>} : vector<128x8xf32>, vector<128x8xf32>, vector<128x128xf32> -> vector<128x128xf32>
    %cst_45 = arith.constant dense<0.000000e+00> : vector<128x8xf32>
    %82 = tpu.matmul %74, %51, %cst_45 {dimension_numbers = #tpu.dot_dimension_numbers<[1], [0], [0], [1], [0, 0, 1, 1], [], []>} : vector<128x8xf32>, vector<8x8xf32>, vector<128x8xf32> -> vector<128x8xf32>
    %cst_46 = arith.constant dense<0.000000e+00> : vector<128x128xf32>
    %83 = tpu.matmul %82, %75, %cst_46 {dimension_numbers = #tpu.dot_dimension_numbers<[1], [1], [0], [0], [0, 0, 1, 0], [], []>} : vector<128x8xf32>, vector<128x8xf32>, vector<128x128xf32> -> vector<128x128xf32>
    %cst_47 = arith.constant dense<0.000000e+00> : vector<128x8xf32>
    %84 = tpu.matmul %74, %62, %cst_47 {dimension_numbers = #tpu.dot_dimension_numbers<[1], [0], [0], [1], [0, 0, 1, 1], [], []>} : vector<128x8xf32>, vector<8x8xf32>, vector<128x8xf32> -> vector<128x8xf32>
    %cst_48 = arith.constant dense<0.000000e+00> : vector<128x128xf32>
    %85 = tpu.matmul %84, %75, %cst_48 {dimension_numbers = #tpu.dot_dimension_numbers<[1], [1], [0], [0], [0, 0, 1, 0], [], []>} : vector<128x8xf32>, vector<128x8xf32>, vector<128x128xf32> -> vector<128x128xf32>
    %cst_49 = arith.constant dense<0.000000e+00> : vector<128x8xf32>
    %86 = tpu.matmul %74, %73, %cst_49 {dimension_numbers = #tpu.dot_dimension_numbers<[1], [0], [0], [1], [0, 0, 1, 1], [], []>} : vector<128x8xf32>, vector<8x8xf32>, vector<128x8xf32> -> vector<128x8xf32>
    %cst_50 = arith.constant dense<0.000000e+00> : vector<128x128xf32>
    %87 = tpu.matmul %86, %75, %cst_50 {dimension_numbers = #tpu.dot_dimension_numbers<[1], [1], [0], [0], [0, 0, 1, 0], [], []>} : vector<128x8xf32>, vector<128x8xf32>, vector<128x128xf32> -> vector<128x128xf32>
    %88 = tpu.iota {dimensions = array<i32: 0>} : vector<128x128xi32>
    %89 = tpu.iota {dimensions = array<i32: 1>} : vector<128x128xi32>
    %c1_i32 = arith.constant 1 : i32
    %90 = vector.broadcast %c1_i32 : i32 to vector<128x128xi32>
    %91 = arith.cmpi sge, %88, %90 : vector<128x128xi32>
    %cst_51 = arith.constant 0.000000e+00 : f32
    %92 = vector.broadcast %cst_51 : f32 to vector<128x128xf32>
    %93 = arith.select %91, %83, %92 : vector<128x128xi1>, vector<128x128xf32>
    %c126_i32 = arith.constant 126 : i32
    %94 = vector.broadcast %c126_i32 : i32 to vector<128x128xi32>
    %95 = arith.cmpi sle, %88, %94 : vector<128x128xi32>
    %cst_52 = arith.constant 0.000000e+00 : f32
    %96 = vector.broadcast %cst_52 : f32 to vector<128x128xf32>
    %97 = arith.select %95, %87, %96 : vector<128x128xi1>, vector<128x128xf32>
    %c1_i32_53 = arith.constant 1 : i32
    %98 = vector.broadcast %c1_i32_53 : i32 to vector<128x128xi32>
    %99 = arith.cmpi sge, %89, %98 : vector<128x128xi32>
    %cst_54 = arith.constant 0.000000e+00 : f32
    %100 = vector.broadcast %cst_54 : f32 to vector<128x128xf32>
    %101 = arith.select %99, %77, %100 : vector<128x128xi1>, vector<128x128xf32>
    %c126_i32_55 = arith.constant 126 : i32
    %102 = vector.broadcast %c126_i32_55 : i32 to vector<128x128xi32>
    %103 = arith.cmpi sle, %89, %102 : vector<128x128xi32>
    %cst_56 = arith.constant 0.000000e+00 : f32
    %104 = vector.broadcast %cst_56 : f32 to vector<128x128xf32>
    %105 = arith.select %103, %81, %104 : vector<128x128xi1>, vector<128x128xf32>
    %c0_57 = arith.constant 0 : index
    %c0_58 = arith.constant 0 : index
    %106 = vector.load %arg5[%c0_57, %c0_58] : memref<128x128xf32, #tpu.memory_space<vmem>>, vector<128x128xf32>
    %c0_59 = arith.constant 0 : index
    %c0_60 = arith.constant 0 : index
    %107 = vector.load %arg6[%c0_59, %c0_60] : memref<128x128xf32, #tpu.memory_space<vmem>>, vector<128x128xf32>
    %c0_61 = arith.constant 0 : index
    %c0_62 = arith.constant 0 : index
    %108 = vector.load %arg7[%c0_61, %c0_62] : memref<128x128xf32, #tpu.memory_space<vmem>>, vector<128x128xf32>
    %c0_63 = arith.constant 0 : index
    %c0_64 = arith.constant 0 : index
    %109 = vector.load %arg8[%c0_63, %c0_64] : memref<128x128xf32, #tpu.memory_space<vmem>>, vector<128x128xf32>
    %c0_65 = arith.constant 0 : index
    %c0_66 = arith.constant 0 : index
    %c0_67 = arith.constant 0 : index
    %c0_68 = arith.constant 0 : index
    %110 = vector.load %arg1[%c0_65, %c0_66, %c0_67, %c0_68] : memref<1x3x128x128xf32, #tpu.memory_space<vmem>>, vector<1x1x128x128xf32>
    %111 = vector.shape_cast %110 : vector<1x1x128x128xf32> to vector<128x128xf32>
    %cst_69 = arith.constant 0.000000e+00 : f32
    %112 = vector.broadcast %cst_69 : f32 to vector<128x128xf32>
    %c1_i32_70 = arith.constant 1 : i32
    %113 = tpu.dynamic_rotate %111 by %c1_i32_70 dim 0 : vector<128x128xf32>, i32 -> vector<128x128xf32>
    %114 = arith.mulf %79, %113 : vector<128x128xf32>
    %c1_i32_71 = arith.constant 1 : i32
    %115 = tpu.dynamic_rotate %113 by %c1_i32_71 dim 1 : vector<128x128xf32>, i32 -> vector<128x128xf32>
    %116 = arith.mulf %101, %115 : vector<128x128xf32>
    %117 = arith.addf %114, %116 : vector<128x128xf32>
    %c127_i32 = arith.constant 127 : i32
    %118 = tpu.dynamic_rotate %113 by %c127_i32 dim 1 : vector<128x128xf32>, i32 -> vector<128x128xf32>
    %119 = arith.mulf %105, %118 : vector<128x128xf32>
    %120 = arith.addf %117, %119 : vector<128x128xf32>
    %121 = arith.mulf %93, %120 : vector<128x128xf32>
    %122 = arith.addf %112, %121 : vector<128x128xf32>
    %123 = arith.mulf %79, %111 : vector<128x128xf32>
    %c1_i32_72 = arith.constant 1 : i32
    %124 = tpu.dynamic_rotate %111 by %c1_i32_72 dim 1 : vector<128x128xf32>, i32 -> vector<128x128xf32>
    %125 = arith.mulf %101, %124 : vector<128x128xf32>
    %126 = arith.addf %123, %125 : vector<128x128xf32>
    %c127_i32_73 = arith.constant 127 : i32
    %127 = tpu.dynamic_rotate %111 by %c127_i32_73 dim 1 : vector<128x128xf32>, i32 -> vector<128x128xf32>
    %128 = arith.mulf %105, %127 : vector<128x128xf32>
    %129 = arith.addf %126, %128 : vector<128x128xf32>
    %130 = arith.mulf %85, %129 : vector<128x128xf32>
    %131 = arith.addf %122, %130 : vector<128x128xf32>
    %c127_i32_74 = arith.constant 127 : i32
    %132 = tpu.dynamic_rotate %111 by %c127_i32_74 dim 0 : vector<128x128xf32>, i32 -> vector<128x128xf32>
    %133 = arith.mulf %79, %132 : vector<128x128xf32>
    %c1_i32_75 = arith.constant 1 : i32
    %134 = tpu.dynamic_rotate %132 by %c1_i32_75 dim 1 : vector<128x128xf32>, i32 -> vector<128x128xf32>
    %135 = arith.mulf %101, %134 : vector<128x128xf32>
    %136 = arith.addf %133, %135 : vector<128x128xf32>
    %c127_i32_76 = arith.constant 127 : i32
    %137 = tpu.dynamic_rotate %132 by %c127_i32_76 dim 1 : vector<128x128xf32>, i32 -> vector<128x128xf32>
    %138 = arith.mulf %105, %137 : vector<128x128xf32>
    %139 = arith.addf %136, %138 : vector<128x128xf32>
    %140 = arith.mulf %97, %139 : vector<128x128xf32>
    %141 = arith.addf %131, %140 : vector<128x128xf32>
    %142 = arith.subf %111, %141 : vector<128x128xf32>
    %cst_77 = arith.constant 2.550000e+02 : f32
    %143 = vector.broadcast %cst_77 : f32 to vector<128x128xf32>
    %144 = arith.mulf %142, %143 : vector<128x128xf32>
    %cst_78 = arith.constant dense<0.000000e+00> : vector<128x128xf32>
    %145 = tpu.matmul %144, %107, %cst_78 {dimension_numbers = #tpu.dot_dimension_numbers<[1], [1], [0], [0], [0, 0, 1, 0], [], []>} : vector<128x128xf32>, vector<128x128xf32>, vector<128x128xf32> -> vector<128x128xf32>
    %cst_79 = arith.constant dense<0.000000e+00> : vector<128x128xf32>
    %146 = tpu.matmul %106, %145, %cst_79 {dimension_numbers = #tpu.dot_dimension_numbers<[1], [0], [0], [1], [0, 0, 1, 1], [], []>} : vector<128x128xf32>, vector<128x128xf32>, vector<128x128xf32> -> vector<128x128xf32>
    %147 = arith.mulf %146, %109 : vector<128x128xf32>
    %148 = math.roundeven %147 : vector<128x128xf32>
    %149 = arith.mulf %148, %108 : vector<128x128xf32>
    %cst_80 = arith.constant dense<0.000000e+00> : vector<128x128xf32>
    %150 = tpu.matmul %106, %149, %cst_80 {dimension_numbers = #tpu.dot_dimension_numbers<[0], [0], [1], [1], [0, 1, 1, 1], [], []>} : vector<128x128xf32>, vector<128x128xf32>, vector<128x128xf32> -> vector<128x128xf32>
    %cst_81 = arith.constant dense<0.000000e+00> : vector<128x128xf32>
    %151 = tpu.matmul %150, %107, %cst_81 {dimension_numbers = #tpu.dot_dimension_numbers<[1], [0], [0], [1], [0, 0, 1, 1], [], []>} : vector<128x128xf32>, vector<128x128xf32>, vector<128x128xf32> -> vector<128x128xf32>
    %cst_82 = arith.constant 0.00392156886 : f32
    %152 = vector.broadcast %cst_82 : f32 to vector<128x128xf32>
    %153 = arith.mulf %151, %152 : vector<128x128xf32>
    %154 = arith.addf %141, %153 : vector<128x128xf32>
    %c0_83 = arith.constant 0 : index
    %c0_84 = arith.constant 0 : index
    %c0_85 = arith.constant 0 : index
    %c0_86 = arith.constant 0 : index
    %155 = vector.load %arg9[%c0_83, %c0_84, %c0_85, %c0_86] : memref<1x3x128x128xf32, #tpu.memory_space<vmem>>, vector<1x1x128x128xf32>
    %156 = vector.shape_cast %155 : vector<1x1x128x128xf32> to vector<128x128xf32>
    %157 = vector.shape_cast %154 : vector<128x128xf32> to vector<1x1x128x128xf32>
    tpu.vector_store %arg9[%c0_83, %c0_84, %c0_85, %c0_86], %157 {strides = array<i32>} : memref<1x3x128x128xf32, #tpu.memory_space<vmem>>, vector<1x1x128x128xf32>,
    %c0_87 = arith.constant 0 : index
    %c1_88 = arith.constant 1 : index
    %c0_89 = arith.constant 0 : index
    %c0_90 = arith.constant 0 : index
    %158 = vector.load %arg1[%c0_87, %c1_88, %c0_89, %c0_90] : memref<1x3x128x128xf32, #tpu.memory_space<vmem>>, vector<1x1x128x128xf32>
    %159 = vector.shape_cast %158 : vector<1x1x128x128xf32> to vector<128x128xf32>
    %cst_91 = arith.constant 0.000000e+00 : f32
    %160 = vector.broadcast %cst_91 : f32 to vector<128x128xf32>
    %c1_i32_92 = arith.constant 1 : i32
    %161 = tpu.dynamic_rotate %159 by %c1_i32_92 dim 0 : vector<128x128xf32>, i32 -> vector<128x128xf32>
    %162 = arith.mulf %79, %161 : vector<128x128xf32>
    %c1_i32_93 = arith.constant 1 : i32
    %163 = tpu.dynamic_rotate %161 by %c1_i32_93 dim 1 : vector<128x128xf32>, i32 -> vector<128x128xf32>
    %164 = arith.mulf %101, %163 : vector<128x128xf32>
    %165 = arith.addf %162, %164 : vector<128x128xf32>
    %c127_i32_94 = arith.constant 127 : i32
    %166 = tpu.dynamic_rotate %161 by %c127_i32_94 dim 1 : vector<128x128xf32>, i32 -> vector<128x128xf32>
    %167 = arith.mulf %105, %166 : vector<128x128xf32>
    %168 = arith.addf %165, %167 : vector<128x128xf32>
    %169 = arith.mulf %93, %168 : vector<128x128xf32>
    %170 = arith.addf %160, %169 : vector<128x128xf32>
    %171 = arith.mulf %79, %159 : vector<128x128xf32>
    %c1_i32_95 = arith.constant 1 : i32
    %172 = tpu.dynamic_rotate %159 by %c1_i32_95 dim 1 : vector<128x128xf32>, i32 -> vector<128x128xf32>
    %173 = arith.mulf %101, %172 : vector<128x128xf32>
    %174 = arith.addf %171, %173 : vector<128x128xf32>
    %c127_i32_96 = arith.constant 127 : i32
    %175 = tpu.dynamic_rotate %159 by %c127_i32_96 dim 1 : vector<128x128xf32>, i32 -> vector<128x128xf32>
    %176 = arith.mulf %105, %175 : vector<128x128xf32>
    %177 = arith.addf %174, %176 : vector<128x128xf32>
    %178 = arith.mulf %85, %177 : vector<128x128xf32>
    %179 = arith.addf %170, %178 : vector<128x128xf32>
    %c127_i32_97 = arith.constant 127 : i32
    %180 = tpu.dynamic_rotate %159 by %c127_i32_97 dim 0 : vector<128x128xf32>, i32 -> vector<128x128xf32>
    %181 = arith.mulf %79, %180 : vector<128x128xf32>
    %c1_i32_98 = arith.constant 1 : i32
    %182 = tpu.dynamic_rotate %180 by %c1_i32_98 dim 1 : vector<128x128xf32>, i32 -> vector<128x128xf32>
    %183 = arith.mulf %101, %182 : vector<128x128xf32>
    %184 = arith.addf %181, %183 : vector<128x128xf32>
    %c127_i32_99 = arith.constant 127 : i32
    %185 = tpu.dynamic_rotate %180 by %c127_i32_99 dim 1 : vector<128x128xf32>, i32 -> vector<128x128xf32>
    %186 = arith.mulf %105, %185 : vector<128x128xf32>
    %187 = arith.addf %184, %186 : vector<128x128xf32>
    %188 = arith.mulf %97, %187 : vector<128x128xf32>
    %189 = arith.addf %179, %188 : vector<128x128xf32>
    %190 = arith.subf %159, %189 : vector<128x128xf32>
    %cst_100 = arith.constant 2.550000e+02 : f32
    %191 = vector.broadcast %cst_100 : f32 to vector<128x128xf32>
    %192 = arith.mulf %190, %191 : vector<128x128xf32>
    %cst_101 = arith.constant dense<0.000000e+00> : vector<128x128xf32>
    %193 = tpu.matmul %192, %107, %cst_101 {dimension_numbers = #tpu.dot_dimension_numbers<[1], [1], [0], [0], [0, 0, 1, 0], [], []>} : vector<128x128xf32>, vector<128x128xf32>, vector<128x128xf32> -> vector<128x128xf32>
    %cst_102 = arith.constant dense<0.000000e+00> : vector<128x128xf32>
    %194 = tpu.matmul %106, %193, %cst_102 {dimension_numbers = #tpu.dot_dimension_numbers<[1], [0], [0], [1], [0, 0, 1, 1], [], []>} : vector<128x128xf32>, vector<128x128xf32>, vector<128x128xf32> -> vector<128x128xf32>
    %195 = arith.mulf %194, %109 : vector<128x128xf32>
    %196 = math.roundeven %195 : vector<128x128xf32>
    %197 = arith.mulf %196, %108 : vector<128x128xf32>
    %cst_103 = arith.constant dense<0.000000e+00> : vector<128x128xf32>
    %198 = tpu.matmul %106, %197, %cst_103 {dimension_numbers = #tpu.dot_dimension_numbers<[0], [0], [1], [1], [0, 1, 1, 1], [], []>} : vector<128x128xf32>, vector<128x128xf32>, vector<128x128xf32> -> vector<128x128xf32>
    %cst_104 = arith.constant dense<0.000000e+00> : vector<128x128xf32>
    %199 = tpu.matmul %198, %107, %cst_104 {dimension_numbers = #tpu.dot_dimension_numbers<[1], [0], [0], [1], [0, 0, 1, 1], [], []>} : vector<128x128xf32>, vector<128x128xf32>, vector<128x128xf32> -> vector<128x128xf32>
    %cst_105 = arith.constant 0.00392156886 : f32
    %200 = vector.broadcast %cst_105 : f32 to vector<128x128xf32>
    %201 = arith.mulf %199, %200 : vector<128x128xf32>
    %202 = arith.addf %189, %201 : vector<128x128xf32>
    %c0_106 = arith.constant 0 : index
    %c1_107 = arith.constant 1 : index
    %c0_108 = arith.constant 0 : index
    %c0_109 = arith.constant 0 : index
    %203 = vector.load %arg9[%c0_106, %c1_107, %c0_108, %c0_109] : memref<1x3x128x128xf32, #tpu.memory_space<vmem>>, vector<1x1x128x128xf32>
    %204 = vector.shape_cast %203 : vector<1x1x128x128xf32> to vector<128x128xf32>
    %205 = vector.shape_cast %202 : vector<128x128xf32> to vector<1x1x128x128xf32>
    tpu.vector_store %arg9[%c0_106, %c1_107, %c0_108, %c0_109], %205 {strides = array<i32>} : memref<1x3x128x128xf32, #tpu.memory_space<vmem>>, vector<1x1x128x128xf32>,
    %c0_110 = arith.constant 0 : index
    %c2 = arith.constant 2 : index
    %c0_111 = arith.constant 0 : index
    %c0_112 = arith.constant 0 : index
    %206 = vector.load %arg1[%c0_110, %c2, %c0_111, %c0_112] : memref<1x3x128x128xf32, #tpu.memory_space<vmem>>, vector<1x1x128x128xf32>
    %207 = vector.shape_cast %206 : vector<1x1x128x128xf32> to vector<128x128xf32>
    %cst_113 = arith.constant 0.000000e+00 : f32
    %208 = vector.broadcast %cst_113 : f32 to vector<128x128xf32>
    %c1_i32_114 = arith.constant 1 : i32
    %209 = tpu.dynamic_rotate %207 by %c1_i32_114 dim 0 : vector<128x128xf32>, i32 -> vector<128x128xf32>
    %210 = arith.mulf %79, %209 : vector<128x128xf32>
    %c1_i32_115 = arith.constant 1 : i32
    %211 = tpu.dynamic_rotate %209 by %c1_i32_115 dim 1 : vector<128x128xf32>, i32 -> vector<128x128xf32>
    %212 = arith.mulf %101, %211 : vector<128x128xf32>
    %213 = arith.addf %210, %212 : vector<128x128xf32>
    %c127_i32_116 = arith.constant 127 : i32
    %214 = tpu.dynamic_rotate %209 by %c127_i32_116 dim 1 : vector<128x128xf32>, i32 -> vector<128x128xf32>
    %215 = arith.mulf %105, %214 : vector<128x128xf32>
    %216 = arith.addf %213, %215 : vector<128x128xf32>
    %217 = arith.mulf %93, %216 : vector<128x128xf32>
    %218 = arith.addf %208, %217 : vector<128x128xf32>
    %219 = arith.mulf %79, %207 : vector<128x128xf32>
    %c1_i32_117 = arith.constant 1 : i32
    %220 = tpu.dynamic_rotate %207 by %c1_i32_117 dim 1 : vector<128x128xf32>, i32 -> vector<128x128xf32>
    %221 = arith.mulf %101, %220 : vector<128x128xf32>
    %222 = arith.addf %219, %221 : vector<128x128xf32>
    %c127_i32_118 = arith.constant 127 : i32
    %223 = tpu.dynamic_rotate %207 by %c127_i32_118 dim 1 : vector<128x128xf32>, i32 -> vector<128x128xf32>
    %224 = arith.mulf %105, %223 : vector<128x128xf32>
    %225 = arith.addf %222, %224 : vector<128x128xf32>
    %226 = arith.mulf %85, %225 : vector<128x128xf32>
    %227 = arith.addf %218, %226 : vector<128x128xf32>
    %c127_i32_119 = arith.constant 127 : i32
    %228 = tpu.dynamic_rotate %207 by %c127_i32_119 dim 0 : vector<128x128xf32>, i32 -> vector<128x128xf32>
    %229 = arith.mulf %79, %228 : vector<128x128xf32>
    %c1_i32_120 = arith.constant 1 : i32
    %230 = tpu.dynamic_rotate %228 by %c1_i32_120 dim 1 : vector<128x128xf32>, i32 -> vector<128x128xf32>
    %231 = arith.mulf %101, %230 : vector<128x128xf32>
    %232 = arith.addf %229, %231 : vector<128x128xf32>
    %c127_i32_121 = arith.constant 127 : i32
    %233 = tpu.dynamic_rotate %228 by %c127_i32_121 dim 1 : vector<128x128xf32>, i32 -> vector<128x128xf32>
    %234 = arith.mulf %105, %233 : vector<128x128xf32>
    %235 = arith.addf %232, %234 : vector<128x128xf32>
    %236 = arith.mulf %97, %235 : vector<128x128xf32>
    %237 = arith.addf %227, %236 : vector<128x128xf32>
    %238 = arith.subf %207, %237 : vector<128x128xf32>
    %cst_122 = arith.constant 2.550000e+02 : f32
    %239 = vector.broadcast %cst_122 : f32 to vector<128x128xf32>
    %240 = arith.mulf %238, %239 : vector<128x128xf32>
    %cst_123 = arith.constant dense<0.000000e+00> : vector<128x128xf32>
    %241 = tpu.matmul %240, %107, %cst_123 {dimension_numbers = #tpu.dot_dimension_numbers<[1], [1], [0], [0], [0, 0, 1, 0], [], []>} : vector<128x128xf32>, vector<128x128xf32>, vector<128x128xf32> -> vector<128x128xf32>
    %cst_124 = arith.constant dense<0.000000e+00> : vector<128x128xf32>
    %242 = tpu.matmul %106, %241, %cst_124 {dimension_numbers = #tpu.dot_dimension_numbers<[1], [0], [0], [1], [0, 0, 1, 1], [], []>} : vector<128x128xf32>, vector<128x128xf32>, vector<128x128xf32> -> vector<128x128xf32>
    %243 = arith.mulf %242, %109 : vector<128x128xf32>
    %244 = math.roundeven %243 : vector<128x128xf32>
    %245 = arith.mulf %244, %108 : vector<128x128xf32>
    %cst_125 = arith.constant dense<0.000000e+00> : vector<128x128xf32>
    %246 = tpu.matmul %106, %245, %cst_125 {dimension_numbers = #tpu.dot_dimension_numbers<[0], [0], [1], [1], [0, 1, 1, 1], [], []>} : vector<128x128xf32>, vector<128x128xf32>, vector<128x128xf32> -> vector<128x128xf32>
    %cst_126 = arith.constant dense<0.000000e+00> : vector<128x128xf32>
    %247 = tpu.matmul %246, %107, %cst_126 {dimension_numbers = #tpu.dot_dimension_numbers<[1], [0], [0], [1], [0, 0, 1, 1], [], []>} : vector<128x128xf32>, vector<128x128xf32>, vector<128x128xf32> -> vector<128x128xf32>
    %cst_127 = arith.constant 0.00392156886 : f32
    %248 = vector.broadcast %cst_127 : f32 to vector<128x128xf32>
    %249 = arith.mulf %247, %248 : vector<128x128xf32>
    %250 = arith.addf %237, %249 : vector<128x128xf32>
    %c0_128 = arith.constant 0 : index
    %c2_129 = arith.constant 2 : index
    %c0_130 = arith.constant 0 : index
    %c0_131 = arith.constant 0 : index
    %251 = vector.load %arg9[%c0_128, %c2_129, %c0_130, %c0_131] : memref<1x3x128x128xf32, #tpu.memory_space<vmem>>, vector<1x1x128x128xf32>
    %252 = vector.shape_cast %251 : vector<1x1x128x128xf32> to vector<128x128xf32>
    %253 = vector.shape_cast %250 : vector<128x128xf32> to vector<1x1x128x128xf32>
    tpu.vector_store %arg9[%c0_128, %c2_129, %c0_130, %c0_131], %253 {strides = array<i32>} : memref<1x3x128x128xf32, #tpu.memory_space<vmem>>, vector<1x1x128x128xf32>,
    return
  }
  func.func @transform_0(%arg0: i32) -> (i32, i32, i32, i32) {
    %c0_i32 = arith.constant 0 : i32
    %c0_i32_0 = arith.constant 0 : i32
    %c0_i32_1 = arith.constant 0 : i32
    %c0_i32_2 = arith.constant 0 : i32
    return %arg0, %c0_i32, %c0_i32_0, %c0_i32_1 : i32, i32, i32, i32
  }
  func.func @transform_1(%arg0: i32) -> (i32, i32, i32, i32) {
    %c0_i32 = arith.constant 0 : i32
    %c0_i32_0 = arith.constant 0 : i32
    %c0_i32_1 = arith.constant 0 : i32
    %c0_i32_2 = arith.constant 0 : i32
    return %arg0, %c0_i32, %c0_i32_0, %c0_i32_1 : i32, i32, i32, i32
  }
  func.func @transform_2(%arg0: i32) -> (i32, i32) {
    %c0_i32 = arith.constant 0 : i32
    %c0_i32_0 = arith.constant 0 : i32
    %c0_i32_1 = arith.constant 0 : i32
    return %c0_i32, %c0_i32_0 : i32, i32
  }
  func.func @transform_3(%arg0: i32) -> (i32, i32) {
    %c0_i32 = arith.constant 0 : i32
    %c0_i32_0 = arith.constant 0 : i32
    %c0_i32_1 = arith.constant 0 : i32
    return %c0_i32, %c0_i32_0 : i32, i32
  }
  func.func @transform_4(%arg0: i32) -> (i32, i32) {
    %c0_i32 = arith.constant 0 : i32
    %c0_i32_0 = arith.constant 0 : i32
    %c0_i32_1 = arith.constant 0 : i32
    return %c0_i32, %c0_i32_0 : i32, i32
  }
  func.func @transform_5(%arg0: i32) -> (i32, i32) {
    %c0_i32 = arith.constant 0 : i32
    %c0_i32_0 = arith.constant 0 : i32
    %c0_i32_1 = arith.constant 0 : i32
    return %c0_i32, %c0_i32_0 : i32, i32
  }
  func.func @transform_6(%arg0: i32) -> (i32, i32) {
    %c0_i32 = arith.constant 0 : i32
    %c0_i32_0 = arith.constant 0 : i32
    %c0_i32_1 = arith.constant 0 : i32
    return %c0_i32, %c0_i32_0 : i32, i32
  }
  func.func @transform_7(%arg0: i32) -> (i32, i32) {
    %c0_i32 = arith.constant 0 : i32
    %c0_i32_0 = arith.constant 0 : i32
    %c0_i32_1 = arith.constant 0 : i32
    return %c0_i32, %c0_i32_0 : i32, i32
  }
  func.func @transform_8(%arg0: i32) -> (i32, i32, i32, i32) {
    %c0_i32 = arith.constant 0 : i32
    %c0_i32_0 = arith.constant 0 : i32
    %c0_i32_1 = arith.constant 0 : i32
    %c0_i32_2 = arith.constant 0 : i32
    return %arg0, %c0_i32, %c0_i32_0, %c0_i32_1 : i32, i32, i32, i32
  }
}

</mosaic_0001>

<llo_original>
// kernel: tpu_custom_call.1
$region0: #{tpu_custom_call.1}
  #allocation0 [shape = 'u32[]', space=smem, size = 0x4, offset = 0x4, fixed_abs, tag = 'smem constant byte address 0x4 - core index']
  #allocation1 [shape = 'u32[72,128]{1,0:T(1,128)}', space=vmem, size = 0x9000, scoped, tag = 'internal scratch']
  %s0 = inlined_call_operand.hbm [shape: f32[2,3,128,128], index: 0, kind: input, shape index: {}]
  %s1 = inlined_call_operand.hbm [shape: f32[2,2,8,8], index: 1, kind: input, shape index: {}]
  %s2 = inlined_call_operand.vmem [shape: f32[128,8], index: 2, kind: input, shape index: {}]
  %s3 = inlined_call_operand.vmem [shape: f32[128,8], index: 3, kind: input, shape index: {}]
  %s4 = inlined_call_operand.vmem [shape: f32[128,128], index: 4, kind: input, shape index: {}]
  %s5 = inlined_call_operand.vmem [shape: f32[128,128], index: 5, kind: input, shape index: {}]
  %s6 = inlined_call_operand.hbm [shape: f32[128,128], index: 6, kind: input, shape index: {}]
  %s7 = inlined_call_operand.hbm [shape: f32[128,128], index: 7, kind: input, shape index: {}]
  %s8 = inlined_call_operand.hbm [shape: f32[2,3,128,128], index: 8, kind: output, shape index: {}]
  %s9 = sld [smem:[#allocation0]]
  $region81: #{tpu_custom_call.1} parent=0
    _
  %s11 = ssub.s32 1, %s9
  %s12 = scalar_select 0, %s11, %s9
  $region1: #{tpu_custom_call.1} parent=0
    #allocation2 [shape = 'u8[393216]{0}', space=vmem, size = 0x60000, scoped, tag = 'input window, operand 0']
    #allocation3 [shape = 's32[2]{0}', space=sflag, size = 0x8, scoped, tag = 'scoped memory for tpu_custom_call.1']
    #allocation4 [shape = 's32[2]{0}', space=sflag, size = 0x8, scoped, tag = 'scoped memory for tpu_custom_call.1']
    #allocation5 [shape = 'u8[16384]{0}', space=vmem, size = 0x4000, scoped, tag = 'input window, operand 1']
    #allocation6 [shape = 's32[2]{0}', space=sflag, size = 0x8, scoped, tag = 'scoped memory for tpu_custom_call.1']
    #allocation7 [shape = 'u8[65536]{0}', space=vmem, size = 0x10000, scoped, tag = 'input window, operand 6, single buffered']
    #allocation8 [shape = 'u8[65536]{0}', space=vmem, size = 0x10000, scoped, tag = 'input window, operand 7, single buffered']
    #allocation9 [shape = 's32[1]{0}', space=sflag, size = 0x4, scoped, tag = 'scoped memory for tpu_custom_call.1']
    #allocation10 [shape = 'u8[393216]{0}', space=vmem, size = 0x60000, scoped, tag = 'output window, operand 0']
    %13 = vsyncpa [#allocation3], 0
    %s14 = scalar_lea.sflag [#allocation3], 1
    %15 = vsyncpa %s14, 0
    %16 = vsyncpa [#allocation6], 0
    %s17 = scalar_lea.sflag [#allocation6], 1
    %18 = vsyncpa %s17, 0
    %19 = vsyncpa [#allocation9], 0
    %20 = vsyncpa [#allocation4], 0
    %s21 = scalar_lea.sflag [#allocation4], 1
    %22 = vsyncpa %s21, 0
    loop: start=0, step=1, limit=4
    $region2: #{tpu_custom_call.1} parent=1 // loop_pre_header
      _
    $region3: #{tpu_custom_call.1} parent=1 // loop_header
      %s24 = sphi 0, %s28
      %p25 = scmp.ge.s32.totalorder %s24, 4
      %s34 = sphi 0, %s36
      %s37 = sphi 0, %s34
      %s38 = sphi 0, %s37
      %s54 = sphi 0, %s38
      %s60 = sphi 0, %s62
      %s63 = sphi 0, %s60
      %s64 = sphi 0, %s63
      %s80 = sphi 0, %s64
      %s84 = sphi 0, %s84
      %s86 = sphi 0, %s84
      %s87 = sphi 0, %s86
      %s101 = sphi 0, %s87
      %s105 = sphi 0, %s105
      %s107 = sphi 0, %s105
      %s108 = sphi 0, %s107
      %s122 = sphi 0, %s108
      %s126 = sphi 0, %s126
      %s128 = sphi 0, %s126
      %s129 = sphi 0, %s128
      %s143 = sphi 0, %s129
      %s147 = sphi 0, %s147
      %s149 = sphi 0, %s147
      %s150 = sphi 0, %s149
      %s164 = sphi 0, %s150
      %s168 = sphi 0, %s168
      %s170 = sphi 0, %s168
      %s171 = sphi 0, %s170
      %s185 = sphi 0, %s171
      %s189 = sphi 0, %s189
      %s191 = sphi 0, %s189
      %s192 = sphi 0, %s191
      %s206 = sphi 0, %s192
      %s212 = sphi 0, %s214
      %s215 = sphi 0, %s212
      %s216 = sphi 0, %s215
      %s232 = sphi 0, %s216
    $region4: #{tpu_custom_call.1} parent=1 // loop_header_branch
      %27 = sbr.rel (%p25) target = $region8
    $region5: #{tpu_custom_call.1} parent=1 // loop_body
      %s29 = ssub.s32 %s24, 1
      %s30 = ssub.s32 %s24, 2
      %s31 = sadd.s32 %s24, 1
      %s32 = ssub.s32 %s24, %s31
      %p33 = scmp.eq.s32.totalorder %s32, 0
      %s35 = sadd.s32 %s34, 1
      %s36 = scalar_select %p33, %s34, %s35
      %p39 = pneg %p33
      %p40 = scmp.eq.s32.totalorder %s24, 1
      %p41 = por %p39, %p40
      %p42 = scmp.ne.s32.totalorder %s34, %s37
      %p43 = scmp.eq.s32.totalorder %s24, 0
      %p44 = por %p42, %p43
      %p45 = scmp.ne.s32.totalorder %s34, %s37
      %p46 = scmp.eq.s32.totalorder %s29, 1
      %p47 = por %p45, %p46
      %p48 = scmp.ne.s32.totalorder %s37, %s38
      %p49 = scmp.eq.s32.totalorder %s29, 0
      %p50 = por %p48, %p49
      %p51 = scmp.ne.s32.totalorder %s37, %s38
      %p52 = scmp.eq.s32.totalorder %s30, 1
      %p53 = por %p51, %p52
      %p55 = scmp.ne.s32.totalorder %s38, %s54
      %p56 = scmp.eq.s32.totalorder %s30, 0
      %p57 = por %p55, %p56
      %s58 = ssub.s32 %s24, %s31
      %p59 = scmp.eq.s32.totalorder %s58, 0
      %s61 = sadd.s32 %s60, 1
      %s62 = scalar_select %p59, %s60, %s61
      %p65 = pneg %p59
      %p66 = scmp.eq.s32.totalorder %s24, 1
      %p67 = por %p65, %p66
      %p68 = scmp.ne.s32.totalorder %s60, %s63
      %p69 = scmp.eq.s32.totalorder %s24, 0
      %p70 = por %p68, %p69
      %p71 = scmp.ne.s32.totalorder %s60, %s63
      %p72 = scmp.eq.s32.totalorder %s29, 1
      %p73 = por %p71, %p72
      %p74 = scmp.ne.s32.totalorder %s63, %s64
      %p75 = scmp.eq.s32.totalorder %s29, 0
      %p76 = por %p74, %p75
      %p77 = scmp.ne.s32.totalorder %s63, %s64
      %p78 = scmp.eq.s32.totalorder %s30, 1
      %p79 = por %p77, %p78
      %p81 = scmp.ne.s32.totalorder %s64, %s80
      %p82 = scmp.eq.s32.totalorder %s30, 0
      %p83 = por %p81, %p82
      %s85 = sadd.s32 %s84, 1
      %p88 = scmp.eq.s32.totalorder %s24, 1
      %p89 = scmp.ne.s32.totalorder %s84, %s86
      %p90 = scmp.eq.s32.totalorder %s24, 0
      %p91 = por %p89, %p90
      %p92 = scmp.ne.s32.totalorder %s84, %s86
      %p93 = scmp.eq.s32.totalorder %s29, 1
      %p94 = por %p92, %p93
      %p95 = scmp.ne.s32.totalorder %s86, %s87
      %p96 = scmp.eq.s32.totalorder %s29, 0
      %p97 = por %p95, %p96
      %p98 = scmp.ne.s32.totalorder %s86, %s87
      %p99 = scmp.eq.s32.totalorder %s30, 1
      %p100 = por %p98, %p99
      %p102 = scmp.ne.s32.totalorder %s87, %s101
      %p103 = scmp.eq.s32.totalorder %s30, 0
      %p104 = por %p102, %p103
      %s106 = sadd.s32 %s105, 1
      %p109 = scmp.eq.s32.totalorder %s24, 1
      %p110 = scmp.ne.s32.totalorder %s105, %s107
      %p111 = scmp.eq.s32.totalorder %s24, 0
      %p112 = por %p110, %p111
      %p113 = scmp.ne.s32.totalorder %s105, %s107
      %p114 = scmp.eq.s32.totalorder %s29, 1
      %p115 = por %p113, %p114
      %p116 = scmp.ne.s32.totalorder %s107, %s108
      %p117 = scmp.eq.s32.totalorder %s29, 0
      %p118 = por %p116, %p117
      %p119 = scmp.ne.s32.totalorder %s107, %s108
      %p120 = scmp.eq.s32.totalorder %s30, 1
      %p121 = por %p119, %p120
      %p123 = scmp.ne.s32.totalorder %s108, %s122
      %p124 = scmp.eq.s32.totalorder %s30, 0
      %p125 = por %p123, %p124
      %s127 = sadd.s32 %s126, 1
      %p130 = scmp.eq.s32.totalorder %s24, 1
      %p131 = scmp.ne.s32.totalorder %s126, %s128
      %p132 = scmp.eq.s32.totalorder %s24, 0
      %p133 = por %p131, %p132
      %p134 = scmp.ne.s32.totalorder %s126, %s128
      %p135 = scmp.eq.s32.totalorder %s29, 1
      %p136 = por %p134, %p135
      %p137 = scmp.ne.s32.totalorder %s128, %s129
      %p138 = scmp.eq.s32.totalorder %s29, 0
      %p139 = por %p137, %p138
      %p140 = scmp.ne.s32.totalorder %s128, %s129
      %p141 = scmp.eq.s32.totalorder %s30, 1
      %p142 = por %p140, %p141
      %p144 = scmp.ne.s32.totalorder %s129, %s143
      %p145 = scmp.eq.s32.totalorder %s30, 0
      %p146 = por %p144, %p145
      %s148 = sadd.s32 %s147, 1
      %p151 = scmp.eq.s32.totalorder %s24, 1
      %p152 = scmp.ne.s32.totalorder %s147, %s149
      %p153 = scmp.eq.s32.totalorder %s24, 0
      %p154 = por %p152, %p153
      %p155 = scmp.ne.s32.totalorder %s147, %s149
      %p156 = scmp.eq.s32.totalorder %s29, 1
      %p157 = por %p155, %p156
      %p158 = scmp.ne.s32.totalorder %s149, %s150
      %p159 = scmp.eq.s32.totalorder %s29, 0
      %p160 = por %p158, %p159
      %p161 = scmp.ne.s32.totalorder %s149, %s150
      %p162 = scmp.eq.s32.totalorder %s30, 1
      %p163 = por %p161, %p162
      %p165 = scmp.ne.s32.totalorder %s150, %s164
      %p166 = scmp.eq.s32.totalorder %s30, 0
      %p167 = por %p165, %p166
      %s169 = sadd.s32 %s168, 1
      %p172 = scmp.eq.s32.totalorder %s24, 1
      %p173 = scmp.ne.s32.totalorder %s168, %s170
      %p174 = scmp.eq.s32.totalorder %s24, 0
      %p175 = por %p173, %p174
      %p176 = scmp.ne.s32.totalorder %s168, %s170
      %p177 = scmp.eq.s32.totalorder %s29, 1
      %p178 = por %p176, %p177
      %p179 = scmp.ne.s32.totalorder %s170, %s171
      %p180 = scmp.eq.s32.totalorder %s29, 0
      %p181 = por %p179, %p180
      %p182 = scmp.ne.s32.totalorder %s170, %s171
      %p183 = scmp.eq.s32.totalorder %s30, 1
      %p184 = por %p182, %p183
      %p186 = scmp.ne.s32.totalorder %s171, %s185
      %p187 = scmp.eq.s32.totalorder %s30, 0
      %p188 = por %p186, %p187
      %s190 = sadd.s32 %s189, 1
      %p193 = scmp.eq.s32.totalorder %s24, 1
      %p194 = scmp.ne.s32.totalorder %s189, %s191
      %p195 = scmp.eq.s32.totalorder %s24, 0
      %p196 = por %p194, %p195
      %p197 = scmp.ne.s32.totalorder %s189, %s191
      %p198 = scmp.eq.s32.totalorder %s29, 1
      %p199 = por %p197, %p198
      %p200 = scmp.ne.s32.totalorder %s191, %s192
      %p201 = scmp.eq.s32.totalorder %s29, 0
      %p202 = por %p200, %p201
      %p203 = scmp.ne.s32.totalorder %s191, %s192
      %p204 = scmp.eq.s32.totalorder %s30, 1
      %p205 = por %p203, %p204
      %p207 = scmp.ne.s32.totalorder %s192, %s206
      %p208 = scmp.eq.s32.totalorder %s30, 0
      %p209 = por %p207, %p208
      %s210 = ssub.s32 %s24, %s31
      %p211 = scmp.eq.s32.totalorder %s210, 0
      %s213 = sadd.s32 %s212, 1
      %s214 = scalar_select %p211, %s212, %s213
      %p217 = pneg %p211
      %p218 = scmp.eq.s32.totalorder %s24, 1
      %p219 = por %p217, %p218
      %p220 = scmp.ne.s32.totalorder %s212, %s215
      %p221 = scmp.eq.s32.totalorder %s24, 0
      %p222 = por %p220, %p221
      %p223 = scmp.ne.s32.totalorder %s212, %s215
      %p224 = scmp.eq.s32.totalorder %s29, 1
      %p225 = por %p223, %p224
      %p226 = scmp.ne.s32.totalorder %s215, %s216
      %p227 = scmp.eq.s32.totalorder %s29, 0
      %p228 = por %p226, %p227
      %p229 = scmp.ne.s32.totalorder %s215, %s216
      %p230 = scmp.eq.s32.totalorder %s30, 1
      %p231 = por %p229, %p230
      %p233 = scmp.ne.s32.totalorder %s216, %s232
      %p234 = scmp.eq.s32.totalorder %s30, 0
      %p235 = por %p233, %p234
      %p236 = scmp.le.s32.totalorder 1, %s24
      %p237 = scmp.lt.s32.totalorder %s24, 3
      %p238 = pnand %p236, %p237
      %p239 = pneg %p238
      // Predicated region
      $region9: #{tpu_custom_call.1} parent=5 // pred_check
        _
      $region10: #{tpu_custom_call.1} parent=5 // pred_check_branch
        %241 = sbr.rel (%p238) target = $region12
      $region11: #{tpu_custom_call.1} parent=5 // pred_region
        %s242 = ssub.s32 %s24, 1
        // Predicated region
        $region13: #{tpu_custom_call.1} parent=11 // pred_check
          %p243 = pneg %p97
        $region14: #{tpu_custom_call.1} parent=11 // pred_check_branch
          %245 = sbr.rel (%p243) target = $region16
        $region15: #{tpu_custom_call.1} parent=11 // pred_region
          _
        $region16: #{tpu_custom_call.1} parent=11 // pred_fallthru
          _
        // Predicated region
        $region17: #{tpu_custom_call.1} parent=11 // pred_check
          %p246 = pneg %p118
        $region18: #{tpu_custom_call.1} parent=11 // pred_check_branch
          %248 = sbr.rel (%p246) target = $region20
        $region19: #{tpu_custom_call.1} parent=11 // pred_region
          _
        $region20: #{tpu_custom_call.1} parent=11 // pred_fallthru
          _
        // Predicated region
        $region21: #{tpu_custom_call.1} parent=11 // pred_check
          %p249 = pneg %p139
        $region22: #{tpu_custom_call.1} parent=11 // pred_check_branch
          %251 = sbr.rel (%p249) target = $region24
        $region23: #{tpu_custom_call.1} parent=11 // pred_region
          _
        $region24: #{tpu_custom_call.1} parent=11 // pred_fallthru
          _
        // Predicated region
        $region25: #{tpu_custom_call.1} parent=11 // pred_check
          %p252 = pneg %p160
        $region26: #{tpu_custom_call.1} parent=11 // pred_check_branch
          %254 = sbr.rel (%p252) target = $region28
        $region27: #{tpu_custom_call.1} parent=11 // pred_region
          _
        $region28: #{tpu_custom_call.1} parent=11 // pred_fallthru
          _
        // Predicated region
        $region29: #{tpu_custom_call.1} parent=11 // pred_check
          %p255 = pneg %p181
        $region30: #{tpu_custom_call.1} parent=11 // pred_check_branch
          %257 = sbr.rel (%p255) target = $region32
        $region31: #{tpu_custom_call.1} parent=11 // pred_region
          %259 = vsyncadd [#allocation6], 0
          %s260 = sshll.u32 %s6, 4
          %s261 = int_to_ptr.hbm [resolvable:$true] %s260
          %s262 = sshll.u32 [#allocation7], 4
          %s263 = int_to_ptr.vmem [resolvable:$true] %s262
          %268 = dma.hbm_to_vmem [thread:$0]  %s261, 2048, %s263, [#allocation6], 128, 128, 8
        $region32: #{tpu_custom_call.1} parent=11 // pred_fallthru
          _
        // Predicated region
        $region33: #{tpu_custom_call.1} parent=11 // pred_check
          %p269 = pneg %p202
        $region34: #{tpu_custom_call.1} parent=11 // pred_check_branch
          %271 = sbr.rel (%p269) target = $region36
        $region35: #{tpu_custom_call.1} parent=11 // pred_region
          %273 = vsyncadd [#allocation9], 0
          %s274 = sshll.u32 %s7, 4
          %s275 = int_to_ptr.hbm [resolvable:$true] %s274
          %s276 = sshll.u32 [#allocation8], 4
          %s277 = int_to_ptr.vmem [resolvable:$true] %s276
          %282 = dma.hbm_to_vmem [thread:$0]  %s275, 2048, %s277, [#allocation9], 128, 128, 8
        $region36: #{tpu_custom_call.1} parent=11 // pred_fallthru
          _
      $region12: #{tpu_custom_call.1} parent=5 // pred_fallthru
        _
      %p283 = scmp.lt.s32.totalorder %s24, 2
      // Predicated region
      $region37: #{tpu_custom_call.1} parent=5 // pred_check
        %p284 = pneg %p283
      $region38: #{tpu_custom_call.1} parent=5 // pred_check_branch
        %286 = sbr.rel (%p284) target = $region40
      $region39: #{tpu_custom_call.1} parent=5 // pred_region
        // Predicated region
        $region41: #{tpu_custom_call.1} parent=39 // pred_check
          %p287 = pneg %p44
        $region42: #{tpu_custom_call.1} parent=39 // pred_check_branch
          %289 = sbr.rel (%p287) target = $region44
        $region43: #{tpu_custom_call.1} parent=39 // pred_region
          %s290 = sand.u32 %s34, 1
          %s291 = scalar_lea.sflag [#allocation3], %s290
          %s292 = sand.u32 %s34, 1
          %s293 = smul.addr %s292, 384
          %s294 = scalar_lea.vmem [#allocation2], %s293
          %296 = vsyncadd %s291, 0
          %s297 = smul.addr %s24, 48
          %s298 = smul.addr %s297, 8
          %s299 = scalar_lea.hbm %s0, %s298
          %s300 = sshll.u32 %s299, 4
          %s301 = int_to_ptr.hbm [resolvable:$true] %s300
          %s302 = sshll.u32 %s294, 4
          %s303 = int_to_ptr.vmem [resolvable:$true] %s302
          %308 = dma.hbm_to_vmem [thread:$0]  %s301, 6144, %s303, %s291, 128, 128, 8
        $region44: #{tpu_custom_call.1} parent=39 // pred_fallthru
          _
        // Predicated region
        $region45: #{tpu_custom_call.1} parent=39 // pred_check
          %p309 = pneg %p70
        $region46: #{tpu_custom_call.1} parent=39 // pred_check_branch
          %311 = sbr.rel (%p309) target = $region48
        $region47: #{tpu_custom_call.1} parent=39 // pred_region
          %s312 = sand.u32 %s24, 1
          %s313 = scalar_lea.sflag [#allocation6], %s312
          %s314 = sand.u32 %s60, 1
          %s315 = smul.addr %s314, 16
          %s316 = scalar_lea.vmem [#allocation5], %s315
          %318 = vsyncadd %s313, 0
          %s319 = smul.addr %s24, 2
          %s320 = smul.addr %s319, 8
          %s321 = scalar_lea.hbm %s1, %s320
          %s322 = sshll.u32 %s321, 4
          %s323 = int_to_ptr.hbm [resolvable:$true] %s322
          %s324 = sshll.u32 %s316, 4
          %s325 = int_to_ptr.vmem [resolvable:$true] %s324
          %330 = dma.hbm_to_vmem [thread:$0]  %s323, 256, %s325, %s313, 128, 128, 8
        $region48: #{tpu_custom_call.1} parent=39 // pred_fallthru
          _
      $region40: #{tpu_custom_call.1} parent=5 // pred_fallthru
        _
      %p331 = scmp.le.s32.totalorder 1, %s24
      %p332 = scmp.lt.s32.totalorder %s24, 3
      %p333 = pnand %p331, %p332
      %p334 = pneg %p333
      // Predicated region
      $region49: #{tpu_custom_call.1} parent=5 // pred_check
        _
      $region50: #{tpu_custom_call.1} parent=5 // pred_check_branch
        %336 = sbr.rel (%p333) target = $region52
      $region51: #{tpu_custom_call.1} parent=5 // pred_region
        %s337 = ssub.s32 %s24, 1
        %s338 = sand.u32 %s37, 1
        %s339 = scalar_lea.sflag [#allocation3], %s338
        %s340 = sand.u32 %s37, 1
        %s341 = smul.addr %s340, 384
        %s342 = scalar_lea.vmem [#allocation2], %s341
        // Predicated region
        $region53: #{tpu_custom_call.1} parent=51 // pred_check
          %p343 = pneg %p50
        $region54: #{tpu_custom_call.1} parent=51 // pred_check_branch
          %345 = sbr.rel (%p343) target = $region56
        $region55: #{tpu_custom_call.1} parent=51 // pred_region
          %347 = dma.done %s339, 6144
        $region56: #{tpu_custom_call.1} parent=51 // pred_fallthru
          _
        %s348 = sand.u32 %s29, 1
        %s349 = scalar_lea.sflag [#allocation6], %s348
        %s350 = sand.u32 %s63, 1
        %s351 = smul.addr %s350, 16
        %s352 = scalar_lea.vmem [#allocation5], %s351
        // Predicated region
        $region57: #{tpu_custom_call.1} parent=51 // pred_check
          %p353 = pneg %p76
        $region58: #{tpu_custom_call.1} parent=51 // pred_check_branch
          %355 = sbr.rel (%p353) target = $region60
        $region59: #{tpu_custom_call.1} parent=51 // pred_region
          %357 = dma.done %s349, 256
        $region60: #{tpu_custom_call.1} parent=51 // pred_fallthru
          _
        // Predicated region
        $region61: #{tpu_custom_call.1} parent=51 // pred_check
          %p358 = pneg %p181
        $region62: #{tpu_custom_call.1} parent=51 // pred_check_branch
          %360 = sbr.rel (%p358) target = $region64
        $region63: #{tpu_custom_call.1} parent=51 // pred_region
          %362 = dma.done [#allocation6], 2048
        $region64: #{tpu_custom_call.1} parent=51 // pred_fallthru
          _
        // Predicated region
        $region65: #{tpu_custom_call.1} parent=51 // pred_check
          %p363 = pneg %p202
        $region66: #{tpu_custom_call.1} parent=51 // pred_check_branch
          %365 = sbr.rel (%p363) target = $region68
        $region67: #{tpu_custom_call.1} parent=51 // pred_region
          %367 = dma.done [#allocation9], 2048
        $region68: #{tpu_custom_call.1} parent=51 // pred_fallthru
          _
        %s368 = sand.u32 %s37, 1
        %s369 = scalar_lea.sflag [#allocation3], %s368
        %s370 = sand.u32 %s37, 1
        %s371 = smul.addr %s370, 384
        %s372 = scalar_lea.vmem [#allocation2], %s371
        %p373 = pneg %p50
        %p374 = pneg %p47
        %s375 = sand.u32 %s29, 1
        %s376 = scalar_lea.sflag [#allocation6], %s375
        %s377 = sand.u32 %s63, 1
        %s378 = smul.addr %s377, 16
        %s379 = scalar_lea.vmem [#allocation5], %s378
        %p380 = pneg %p76
        %p381 = pneg %p73
        %p382 = pneg %p97
        %p383 = pneg %p94
        %p384 = pneg %p118
        %p385 = pneg %p115
        %p386 = pneg %p139
        %p387 = pneg %p136
        %p388 = pneg %p160
        %p389 = pneg %p157
        %p390 = pneg %p181
        %p391 = pneg %p178
        %p392 = pneg %p202
        %p393 = pneg %p199
        %p394 = pneg %p228
        %p395 = pneg %p225
        %s396 = sand.u32 %s215, 1
        %s397 = scalar_lea.sflag [#allocation4], %s396
        %s398 = sand.u32 %s215, 1
        %s399 = smul.addr %s398, 384
        %s400 = scalar_lea.vmem [#allocation10], %s399
        %v401 = vld [vmem:[%s352] sm:$0xff]
        %s402 = scalar_lea.vmem %s352, 8 [#allocation5]
        %v403 = vld [vmem:[%s402] sm:$0xff]
        %v404 = vfloor.f32 %v401
        %v405 = vfloor.f32 %v403
        %v406 = vsub.f32 %v401, %v404
        %v407 = vsub.f32 %v403, %v405
        %vm408 = vcmp.eq.f32.partialorder %v404, -1.0
        %v409 = vsub.f32 1.0, %v406
        %v410 = vsel %vm408, %v409, 0.0
        %vm411 = vcmp.eq.f32.partialorder %v404, -2.0
        %v412 = vsel %vm411, %v406, 0.0
        %v413 = vadd.f32 %v410, %v412
        %vm414 = vcmp.eq.f32.partialorder %v404, 0.0
        %v415 = vsel %vm414, %v409, 0.0
        %v416 = vsel %vm408, %v406, 0.0
        %v417 = vadd.f32 %v415, %v416
        %vm418 = vcmp.eq.f32.partialorder %v404, 1.0
        %v419 = vsel %vm418, %v409, 0.0
        %v420 = vsel %vm414, %v406, 0.0
        %v421 = vadd.f32 %v419, %v420
        %vm422 = vcmp.eq.f32.partialorder %v405, -1.0
        %v423 = vsub.f32 1.0, %v407
        %v424 = vsel %vm422, %v423, 0.0
        %vm425 = vcmp.eq.f32.partialorder %v405, -2.0
        %v426 = vsel %vm425, %v407, 0.0
        %v427 = vadd.f32 %v424, %v426
        %vm428 = vcmp.eq.f32.partialorder %v405, 0.0
        %v429 = vsel %vm428, %v423, 0.0
        %v430 = vsel %vm422, %v407, 0.0
        %v431 = vadd.f32 %v429, %v430
        %vm432 = vcmp.eq.f32.partialorder %v405, 1.0
        %v433 = vsel %vm432, %v423, 0.0
        %v434 = vsel %vm428, %v407, 0.0
        %v435 = vadd.f32 %v433, %v434
        %v436 = vld [vmem:[%s2] sm:$0xff]
        %v437 = vld [vmem:[%s2 + $0x8] sm:$0xff]
        %v438 = vld [vmem:[%s2 + $0x10] sm:$0xff]
        %v439 = vld [vmem:[%s2 + $0x18] sm:$0xff]
        %v440 = vld [vmem:[%s2 + $0x20] sm:$0xff]
        %v441 = vld [vmem:[%s2 + $0x28] sm:$0xff]
        %v442 = vld [vmem:[%s2 + $0x30] sm:$0xff]
        %v443 = vld [vmem:[%s2 + $0x38] sm:$0xff]
        %v444 = vld [vmem:[%s2 + $0x40] sm:$0xff]
        %v445 = vld [vmem:[%s2 + $0x48] sm:$0xff]
        %v446 = vld [vmem:[%s2 + $0x50] sm:$0xff]
        %v447 = vld [vmem:[%s2 + $0x58] sm:$0xff]
        %v448 = vld [vmem:[%s2 + $0x60] sm:$0xff]
        %v449 = vld [vmem:[%s2 + $0x68] sm:$0xff]
        %v450 = vld [vmem:[%s2 + $0x70] sm:$0xff]
        %v451 = vld [vmem:[%s2 + $0x78] sm:$0xff]
        %v452 = vld [vmem:[%s3] sm:$0xff]
        %v453 = vld [vmem:[%s3 + $0x8] sm:$0xff]
        %v454 = vld [vmem:[%s3 + $0x10] sm:$0xff]
        %v455 = vld [vmem:[%s3 + $0x18] sm:$0xff]
        %v456 = vld [vmem:[%s3 + $0x20] sm:$0xff]
        %v457 = vld [vmem:[%s3 + $0x28] sm:$0xff]
        %v458 = vld [vmem:[%s3 + $0x30] sm:$0xff]
        %v459 = vld [vmem:[%s3 + $0x38] sm:$0xff]
        %v460 = vld [vmem:[%s3 + $0x40] sm:$0xff]
        %v461 = vld [vmem:[%s3 + $0x48] sm:$0xff]
        %v462 = vld [vmem:[%s3 + $0x50] sm:$0xff]
        %v463 = vld [vmem:[%s3 + $0x58] sm:$0xff]
        %v464 = vld [vmem:[%s3 + $0x60] sm:$0xff]
        %v465 = vld [vmem:[%s3 + $0x68] sm:$0xff]
        %v466 = vld [vmem:[%s3 + $0x70] sm:$0xff]
        %v467 = vld [vmem:[%s3 + $0x78] sm:$0xff]
        %vm468 = vcmask 64512
        %v470 = vsel %vm468, %v436, 0
        %v473 = vsel %vm468, %v437, 0
        %v476 = vsel %vm468, %v438, 0
        %v479 = vsel %vm468, %v439, 0
        %v482 = vsel %vm468, %v440, 0
        %v485 = vsel %vm468, %v441, 0
        %v488 = vsel %vm468, %v442, 0
        %v491 = vsel %vm468, %v443, 0
        %v494 = vsel %vm468, %v444, 0
        %v497 = vsel %vm468, %v445, 0
        %v500 = vsel %vm468, %v446, 0
        %v503 = vsel %vm468, %v447, 0
        %v506 = vsel %vm468, %v448, 0
        %v509 = vsel %vm468, %v449, 0
        %v512 = vsel %vm468, %v450, 0
        %v515 = vsel %vm468, %v451, 0
        %517 = vmatpush.msra.mxu0 0.0
        %518 = vmatpush.msra.mxu0 0.0
        %519 = vmatpush.msra.mxu0 0.0
        %520 = vmatpush.msra.mxu0 0.0
        %521 = vmatpush.msra.mxu0 0.0
        %522 = vmatpush.msra.mxu0 0.0
        %523 = vmatpush.msra.mxu0 0.0
        %524 = vmatpush.msra.mxu0 0.0
        %525 = vmatpush.msra.mxu0 0.0
        %526 = vmatpush.msra.mxu0 0.0
        %527 = vmatpush.msra.mxu0 0.0
        %528 = vmatpush.msra.mxu0 0.0
        %529 = vmatpush.msra.mxu0 0.0
        %530 = vmatpush.msra.mxu0 0.0
        %531 = vmatpush.msra.mxu0 0.0
        %532 = vmatpush.msra.mxu0 %v413
        %533 = vmatmul.f32.gmra.mxu0 %v470
        %v534 = vpop.f32.mrf.mxu0
        %v535 = vadd.f32 0.0, %v534
        %536 = vmatmul.f32.gmra.mxu0 %v473
        %v537 = vpop.f32.mrf.mxu0
        %v538 = vadd.f32 0.0, %v537
        %539 = vmatmul.f32.gmra.mxu0 %v476
        %v540 = vpop.f32.mrf.mxu0
        %v541 = vadd.f32 0.0, %v540
        %542 = vmatmul.f32.gmra.mxu0 %v479
        %v543 = vpop.f32.mrf.mxu0
        %v544 = vadd.f32 0.0, %v543
        %545 = vmatmul.f32.gmra.mxu0 %v482
        %v546 = vpop.f32.mrf.mxu0
        %v547 = vadd.f32 0.0, %v546
        %548 = vmatmul.f32.gmra.mxu0 %v485
        %v549 = vpop.f32.mrf.mxu0
        %v550 = vadd.f32 0.0, %v549
        %551 = vmatmul.f32.gmra.mxu0 %v488
        %v552 = vpop.f32.mrf.mxu0
        %v553 = vadd.f32 0.0, %v552
        %554 = vmatmul.f32.gmra.mxu0 %v491
        %v555 = vpop.f32.mrf.mxu0
        %v556 = vadd.f32 0.0, %v555
        %557 = vmatmul.f32.gmra.mxu0 %v494
        %v558 = vpop.f32.mrf.mxu0
        %v559 = vadd.f32 0.0, %v558
        %560 = vmatmul.f32.gmra.mxu0 %v497
        %v561 = vpop.f32.mrf.mxu0
        %v562 = vadd.f32 0.0, %v561
        %563 = vmatmul.f32.gmra.mxu0 %v500
        %v564 = vpop.f32.mrf.mxu0
        %v565 = vadd.f32 0.0, %v564
        %566 = vmatmul.f32.gmra.mxu0 %v503
        %v567 = vpop.f32.mrf.mxu0
        %v568 = vadd.f32 0.0, %v567
        %569 = vmatmul.f32.gmra.mxu0 %v506
        %v570 = vpop.f32.mrf.mxu0
        %v571 = vadd.f32 0.0, %v570
        %572 = vmatmul.f32.gmra.mxu0 %v509
        %v573 = vpop.f32.mrf.mxu0
        %v574 = vadd.f32 0.0, %v573
        %575 = vmatmul.f32.gmra.mxu0 %v512
        %v576 = vpop.f32.mrf.mxu0
        %v577 = vadd.f32 0.0, %v576
        %578 = vmatmul.f32.gmra.mxu0 %v515
        %v579 = vpop.f32.mrf.mxu0
        %v580 = vadd.f32 0.0, %v579
        %581 = vdwg.mxu0
        %v583 = vsel %vm468, %v535, 0
        %v586 = vsel %vm468, %v538, 0
        %v589 = vsel %vm468, %v541, 0
        %v592 = vsel %vm468, %v544, 0
        %v595 = vsel %vm468, %v547, 0
        %v598 = vsel %vm468, %v550, 0
        %v601 = vsel %vm468, %v553, 0
        %v604 = vsel %vm468, %v556, 0
        %v607 = vsel %vm468, %v559, 0
        %v610 = vsel %vm468, %v562, 0
        %v613 = vsel %vm468, %v565, 0
        %v616 = vsel %vm468, %v568, 0
        %v619 = vsel %vm468, %v571, 0
        %v622 = vsel %vm468, %v574, 0
        %v625 = vsel %vm468, %v577, 0
        %v628 = vsel %vm468, %v580, 0
        %v631 = vsel %vm468, %v452, 0
        %v634 = vsel %vm468, %v453, 0
        %v637 = vsel %vm468, %v454, 0
        %v640 = vsel %vm468, %v455, 0
        %v643 = vsel %vm468, %v456, 0
        %v646 = vsel %vm468, %v457, 0
        %v649 = vsel %vm468, %v458, 0
        %v652 = vsel %vm468, %v459, 0
        %v655 = vsel %vm468, %v460, 0
        %v658 = vsel %vm468, %v461, 0
        %v661 = vsel %vm468, %v462, 0
        %v664 = vsel %vm468, %v463, 0
        %v667 = vsel %vm468, %v464, 0
        %v670 = vsel %vm468, %v465, 0
        %v673 = vsel %vm468, %v466, 0
        %v676 = vsel %vm468, %v467, 0
        %678 = vmatpush.xpose.msra.mxu0 %v676
        %679 = vmatpush.xpose.msra.mxu0 %v673
        %680 = vmatpush.xpose.msra.mxu0 %v670
        %681 = vmatpush.xpose.msra.mxu0 %v667
        %682 = vmatpush.xpose.msra.mxu0 %v664
        %683 = vmatpush.xpose.msra.mxu0 %v661
        %684 = vmatpush.xpose.msra.mxu0 %v658
        %685 = vmatpush.xpose.msra.mxu0 %v655
        %686 = vmatpush.xpose.msra.mxu0 %v652
        %687 = vmatpush.xpose.msra.mxu0 %v649
        %688 = vmatpush.xpose.msra.mxu0 %v646
        %689 = vmatpush.xpose.msra.mxu0 %v643
        %690 = vmatpush.xpose.msra.mxu0 %v640
        %691 = vmatpush.xpose.msra.mxu0 %v637
        %692 = vmatpush.xpose.msra.mxu0 %v634
        %693 = vmatpush.xpose.msra.mxu0 %v631
        %694 = vmatmul.f32.gmra.mxu0 %v583
        %v695 = vpop.f32.mrf.mxu0
        %v696 = vadd.f32 0.0, %v695
        %697 = vmatmul.f32.gmra.mxu0 %v586
        %v698 = vpop.f32.mrf.mxu0
        %v699 = vadd.f32 0.0, %v698
        %700 = vmatmul.f32.gmra.mxu0 %v589
        %v701 = vpop.f32.mrf.mxu0
        %v702 = vadd.f32 0.0, %v701
        %703 = vmatmul.f32.gmra.mxu0 %v592
        %v704 = vpop.f32.mrf.mxu0
        %v705 = vadd.f32 0.0, %v704
        %706 = vmatmul.f32.gmra.mxu0 %v595
        %v707 = vpop.f32.mrf.mxu0
        %v708 = vadd.f32 0.0, %v707
        %709 = vmatmul.f32.gmra.mxu0 %v598
        %v710 = vpop.f32.mrf.mxu0
        %v711 = vadd.f32 0.0, %v710
        %712 = vmatmul.f32.gmra.mxu0 %v601
        %v713 = vpop.f32.mrf.mxu0
        %v714 = vadd.f32 0.0, %v713
        %715 = vmatmul.f32.gmra.mxu0 %v604
        %v716 = vpop.f32.mrf.mxu0
        %v717 = vadd.f32 0.0, %v716
        %718 = vmatmul.f32.gmra.mxu0 %v607
        %v719 = vpop.f32.mrf.mxu0
        %v720 = vadd.f32 0.0, %v719
        %721 = vmatmul.f32.gmra.mxu0 %v610
        %v722 = vpop.f32.mrf.mxu0
        %v723 = vadd.f32 0.0, %v722
        %724 = vmatmul.f32.gmra.mxu0 %v613
        %v725 = vpop.f32.mrf.mxu0
        %v726 = vadd.f32 0.0, %v725
        %727 = vmatmul.f32.gmra.mxu0 %v616
        %v728 = vpop.f32.mrf.mxu0
        %v729 = vadd.f32 0.0, %v728
        %730 = vmatmul.f32.gmra.mxu0 %v619
        %v731 = vpop.f32.mrf.mxu0
        %v732 = vadd.f32 0.0, %v731
        %733 = vmatmul.f32.gmra.mxu0 %v622
        %v734 = vpop.f32.mrf.mxu0
        %v735 = vadd.f32 0.0, %v734
        %736 = vmatmul.f32.gmra.mxu0 %v625
        %v737 = vpop.f32.mrf.mxu0
        %v738 = vadd.f32 0.0, %v737
        %739 = vmatmul.f32.gmra.mxu0 %v628
        %v740 = vpop.f32.mrf.mxu0
        %v741 = vadd.f32 0.0, %v740
        %742 = vdwg.mxu0
        %743 = vmatpush.msra.mxu0 0.0
        %744 = vmatpush.msra.mxu0 0.0
        %745 = vmatpush.msra.mxu0 0.0
        %746 = vmatpush.msra.mxu0 0.0
        %747 = vmatpush.msra.mxu0 0.0
        %748 = vmatpush.msra.mxu0 0.0
        %749 = vmatpush.msra.mxu0 0.0
        %750 = vmatpush.msra.mxu0 0.0
        %751 = vmatpush.msra.mxu0 0.0
        %752 = vmatpush.msra.mxu0 0.0
        %753 = vmatpush.msra.mxu0 0.0
        %754 = vmatpush.msra.mxu0 0.0
        %755 = vmatpush.msra.mxu0 0.0
        %756 = vmatpush.msra.mxu0 0.0
        %757 = vmatpush.msra.mxu0 0.0
        %758 = vmatpush.msra.mxu0 %v417
        %759 = vmatmul.f32.gmra.mxu0 %v470
        %v760 = vpop.f32.mrf.mxu0
        %v761 = vadd.f32 0.0, %v760
        %762 = vmatmul.f32.gmra.mxu0 %v473
        %v763 = vpop.f32.mrf.mxu0
        %v764 = vadd.f32 0.0, %v763
        %765 = vmatmul.f32.gmra.mxu0 %v476
        %v766 = vpop.f32.mrf.mxu0
        %v767 = vadd.f32 0.0, %v766
        %768 = vmatmul.f32.gmra.mxu0 %v479
        %v769 = vpop.f32.mrf.mxu0
        %v770 = vadd.f32 0.0, %v769
        %771 = vmatmul.f32.gmra.mxu0 %v482
        %v772 = vpop.f32.mrf.mxu0
        %v773 = vadd.f32 0.0, %v772
        %774 = vmatmul.f32.gmra.mxu0 %v485
        %v775 = vpop.f32.mrf.mxu0
        %v776 = vadd.f32 0.0, %v775
        %777 = vmatmul.f32.gmra.mxu0 %v488
        %v778 = vpop.f32.mrf.mxu0
        %v779 = vadd.f32 0.0, %v778
        %780 = vmatmul.f32.gmra.mxu0 %v491
        %v781 = vpop.f32.mrf.mxu0
        %v782 = vadd.f32 0.0, %v781
        %783 = vmatmul.f32.gmra.mxu0 %v494
        %v784 = vpop.f32.mrf.mxu0
        %v785 = vadd.f32 0.0, %v784
        %786 = vmatmul.f32.gmra.mxu0 %v497
        %v787 = vpop.f32.mrf.mxu0
        %v788 = vadd.f32 0.0, %v787
        %789 = vmatmul.f32.gmra.mxu0 %v500
        %v790 = vpop.f32.mrf.mxu0
        %v791 = vadd.f32 0.0, %v790
        %792 = vmatmul.f32.gmra.mxu0 %v503
        %v793 = vpop.f32.mrf.mxu0
        %v794 = vadd.f32 0.0, %v793
        %795 = vmatmul.f32.gmra.mxu0 %v506
        %v796 = vpop.f32.mrf.mxu0
        %v797 = vadd.f32 0.0, %v796
        %798 = vmatmul.f32.gmra.mxu0 %v509
        %v799 = vpop.f32.mrf.mxu0
        %v800 = vadd.f32 0.0, %v799
        %801 = vmatmul.f32.gmra.mxu0 %v512
        %v802 = vpop.f32.mrf.mxu0
        %v803 = vadd.f32 0.0, %v802
        %804 = vmatmul.f32.gmra.mxu0 %v515
        %v805 = vpop.f32.mrf.mxu0
        %v806 = vadd.f32 0.0, %v805
        %807 = vdwg.mxu0
        %v809 = vsel %vm468, %v761, 0
        %v812 = vsel %vm468, %v764, 0
        %v815 = vsel %vm468, %v767, 0
        %v818 = vsel %vm468, %v770, 0
        %v821 = vsel %vm468, %v773, 0
        %v824 = vsel %vm468, %v776, 0
        %v827 = vsel %vm468, %v779, 0
        %v830 = vsel %vm468, %v782, 0
        %v833 = vsel %vm468, %v785, 0
        %v836 = vsel %vm468, %v788, 0
        %v839 = vsel %vm468, %v791, 0
        %v842 = vsel %vm468, %v794, 0
        %v845 = vsel %vm468, %v797, 0
        %v848 = vsel %vm468, %v800, 0
        %v851 = vsel %vm468, %v803, 0
        %v854 = vsel %vm468, %v806, 0
        %856 = vmatpush.xpose.msra.mxu0 %v676
        %857 = vmatpush.xpose.msra.mxu0 %v673
        %858 = vmatpush.xpose.msra.mxu0 %v670
        %859 = vmatpush.xpose.msra.mxu0 %v667
        %860 = vmatpush.xpose.msra.mxu0 %v664
        %861 = vmatpush.xpose.msra.mxu0 %v661
        %862 = vmatpush.xpose.msra.mxu0 %v658
        %863 = vmatpush.xpose.msra.mxu0 %v655
        %864 = vmatpush.xpose.msra.mxu0 %v652
        %865 = vmatpush.xpose.msra.mxu0 %v649
        %866 = vmatpush.xpose.msra.mxu0 %v646
        %867 = vmatpush.xpose.msra.mxu0 %v643
        %868 = vmatpush.xpose.msra.mxu0 %v640
        %869 = vmatpush.xpose.msra.mxu0 %v637
        %870 = vmatpush.xpose.msra.mxu0 %v634
        %871 = vmatpush.xpose.msra.mxu0 %v631
        %872 = vmatmul.f32.gmra.mxu0 %v809
        %v873 = vpop.f32.mrf.mxu0
        %v874 = vadd.f32 0.0, %v873
        %875 = vmatmul.f32.gmra.mxu0 %v812
        %v876 = vpop.f32.mrf.mxu0
        %v877 = vadd.f32 0.0, %v876
        %878 = vmatmul.f32.gmra.mxu0 %v815
        %v879 = vpop.f32.mrf.mxu0
        %v880 = vadd.f32 0.0, %v879
        %881 = vmatmul.f32.gmra.mxu0 %v818
        %v882 = vpop.f32.mrf.mxu0
        %v883 = vadd.f32 0.0, %v882
        %884 = vmatmul.f32.gmra.mxu0 %v821
        %v885 = vpop.f32.mrf.mxu0
        %v886 = vadd.f32 0.0, %v885
        %887 = vmatmul.f32.gmra.mxu0 %v824
        %v888 = vpop.f32.mrf.mxu0
        %v889 = vadd.f32 0.0, %v888
        %890 = vmatmul.f32.gmra.mxu0 %v827
        %v891 = vpop.f32.mrf.mxu0
        %v892 = vadd.f32 0.0, %v891
        %893 = vmatmul.f32.gmra.mxu0 %v830
        %v894 = vpop.f32.mrf.mxu0
        %v895 = vadd.f32 0.0, %v894
        %896 = vmatmul.f32.gmra.mxu0 %v833
        %v897 = vpop.f32.mrf.mxu0
        %v898 = vadd.f32 0.0, %v897
        %899 = vmatmul.f32.gmra.mxu0 %v836
        %v900 = vpop.f32.mrf.mxu0
        %v901 = vadd.f32 0.0, %v900
        %902 = vmatmul.f32.gmra.mxu0 %v839
        %v903 = vpop.f32.mrf.mxu0
        %v904 = vadd.f32 0.0, %v903
        %905 = vmatmul.f32.gmra.mxu0 %v842
        %v906 = vpop.f32.mrf.mxu0
        %v907 = vadd.f32 0.0, %v906
        %908 = vmatmul.f32.gmra.mxu0 %v845
        %v909 = vpop.f32.mrf.mxu0
        %v910 = vadd.f32 0.0, %v909
        %911 = vmatmul.f32.gmra.mxu0 %v848
        %v912 = vpop.f32.mrf.mxu0
        %v913 = vadd.f32 0.0, %v912
        %914 = vmatmul.f32.gmra.mxu0 %v851
        %v915 = vpop.f32.mrf.mxu0
        %v916 = vadd.f32 0.0, %v915
        %917 = vmatmul.f32.gmra.mxu0 %v854
        %v918 = vpop.f32.mrf.mxu0
        %v919 = vadd.f32 0.0, %v918
        %920 = vdwg.mxu0
        %921 = vmatpush.msra.mxu0 0.0
        %922 = vmatpush.msra.mxu0 0.0
        %923 = vmatpush.msra.mxu0 0.0
        %924 = vmatpush.msra.mxu0 0.0
        %925 = vmatpush.msra.mxu0 0.0
        %926 = vmatpush.msra.mxu0 0.0
        %927 = vmatpush.msra.mxu0 0.0
        %928 = vmatpush.msra.mxu0 0.0
        %929 = vmatpush.msra.mxu0 0.0
        %930 = vmatpush.msra.mxu0 0.0
        %931 = vmatpush.msra.mxu0 0.0
        %932 = vmatpush.msra.mxu0 0.0
        %933 = vmatpush.msra.mxu0 0.0
        %934 = vmatpush.msra.mxu0 0.0
        %935 = vmatpush.msra.mxu0 0.0
        %936 = vmatpush.msra.mxu0 %v421
        %937 = vmatmul.f32.gmra.mxu0 %v470
        %v938 = vpop.f32.mrf.mxu0
        %v939 = vadd.f32 0.0, %v938
        %940 = vmatmul.f32.gmra.mxu0 %v473
        %v941 = vpop.f32.mrf.mxu0
        %v942 = vadd.f32 0.0, %v941
        %943 = vmatmul.f32.gmra.mxu0 %v476
        %v944 = vpop.f32.mrf.mxu0
        %v945 = vadd.f32 0.0, %v944
        %946 = vmatmul.f32.gmra.mxu0 %v479
        %v947 = vpop.f32.mrf.mxu0
        %v948 = vadd.f32 0.0, %v947
        %949 = vmatmul.f32.gmra.mxu0 %v482
        %v950 = vpop.f32.mrf.mxu0
        %v951 = vadd.f32 0.0, %v950
        %952 = vmatmul.f32.gmra.mxu0 %v485
        %v953 = vpop.f32.mrf.mxu0
        %v954 = vadd.f32 0.0, %v953
        %955 = vmatmul.f32.gmra.mxu0 %v488
        %v956 = vpop.f32.mrf.mxu0
        %v957 = vadd.f32 0.0, %v956
        %958 = vmatmul.f32.gmra.mxu0 %v491
        %v959 = vpop.f32.mrf.mxu0
        %v960 = vadd.f32 0.0, %v959
        %961 = vmatmul.f32.gmra.mxu0 %v494
        %v962 = vpop.f32.mrf.mxu0
        %v963 = vadd.f32 0.0, %v962
        %964 = vmatmul.f32.gmra.mxu0 %v497
        %v965 = vpop.f32.mrf.mxu0
        %v966 = vadd.f32 0.0, %v965
        %967 = vmatmul.f32.gmra.mxu0 %v500
        %v968 = vpop.f32.mrf.mxu0
        %v969 = vadd.f32 0.0, %v968
        %970 = vmatmul.f32.gmra.mxu0 %v503
        %v971 = vpop.f32.mrf.mxu0
        %v972 = vadd.f32 0.0, %v971
        %973 = vmatmul.f32.gmra.mxu0 %v506
        %v974 = vpop.f32.mrf.mxu0
        %v975 = vadd.f32 0.0, %v974
        %976 = vmatmul.f32.gmra.mxu0 %v509
        %v977 = vpop.f32.mrf.mxu0
        %v978 = vadd.f32 0.0, %v977
        %979 = vmatmul.f32.gmra.mxu0 %v512
        %v980 = vpop.f32.mrf.mxu0
        %v981 = vadd.f32 0.0, %v980
        %982 = vmatmul.f32.gmra.mxu0 %v515
        %v983 = vpop.f32.mrf.mxu0
        %v984 = vadd.f32 0.0, %v983
        %985 = vdwg.mxu0
        %v987 = vsel %vm468, %v939, 0
        %v990 = vsel %vm468, %v942, 0
        %v993 = vsel %vm468, %v945, 0
        %v996 = vsel %vm468, %v948, 0
        %v999 = vsel %vm468, %v951, 0
        %v1002 = vsel %vm468, %v954, 0
        %v1005 = vsel %vm468, %v957, 0
        %v1008 = vsel %vm468, %v960, 0
        %v1011 = vsel %vm468, %v963, 0
        %v1014 = vsel %vm468, %v966, 0
        %v1017 = vsel %vm468, %v969, 0
        %v1020 = vsel %vm468, %v972, 0
        %v1023 = vsel %vm468, %v975, 0
        %v1026 = vsel %vm468, %v978, 0
        %v1029 = vsel %vm468, %v981, 0
        %v1032 = vsel %vm468, %v984, 0
        %1034 = vmatpush.xpose.msra.mxu0 %v676
        %1035 = vmatpush.xpose.msra.mxu0 %v673
        %1036 = vmatpush.xpose.msra.mxu0 %v670
        %1037 = vmatpush.xpose.msra.mxu0 %v667
        %1038 = vmatpush.xpose.msra.mxu0 %v664
        %1039 = vmatpush.xpose.msra.mxu0 %v661
        %1040 = vmatpush.xpose.msra.mxu0 %v658
        %1041 = vmatpush.xpose.msra.mxu0 %v655
        %1042 = vmatpush.xpose.msra.mxu0 %v652
        %1043 = vmatpush.xpose.msra.mxu0 %v649
        %1044 = vmatpush.xpose.msra.mxu0 %v646
        %1045 = vmatpush.xpose.msra.mxu0 %v643
        %1046 = vmatpush.xpose.msra.mxu0 %v640
        %1047 = vmatpush.xpose.msra.mxu0 %v637
        %1048 = vmatpush.xpose.msra.mxu0 %v634
        %1049 = vmatpush.xpose.msra.mxu0 %v631
        %1050 = vmatmul.f32.gmra.mxu0 %v987
        %v1051 = vpop.f32.mrf.mxu0
        %v1052 = vadd.f32 0.0, %v1051
        %1053 = vmatmul.f32.gmra.mxu0 %v990
        %v1054 = vpop.f32.mrf.mxu0
        %v1055 = vadd.f32 0.0, %v1054
        %1056 = vmatmul.f32.gmra.mxu0 %v993
        %v1057 = vpop.f32.mrf.mxu0
        %v1058 = vadd.f32 0.0, %v1057
        %1059 = vmatmul.f32.gmra.mxu0 %v996
        %v1060 = vpop.f32.mrf.mxu0
        %v1061 = vadd.f32 0.0, %v1060
        %1062 = vmatmul.f32.gmra.mxu0 %v999
        %v1063 = vpop.f32.mrf.mxu0
        %v1064 = vadd.f32 0.0, %v1063
        %1065 = vmatmul.f32.gmra.mxu0 %v1002
        %v1066 = vpop.f32.mrf.mxu0
        %v1067 = vadd.f32 0.0, %v1066
        %1068 = vmatmul.f32.gmra.mxu0 %v1005
        %v1069 = vpop.f32.mrf.mxu0
        %v1070 = vadd.f32 0.0, %v1069
        %1071 = vmatmul.f32.gmra.mxu0 %v1008
        %v1072 = vpop.f32.mrf.mxu0
        %v1073 = vadd.f32 0.0, %v1072
        %1074 = vmatmul.f32.gmra.mxu0 %v1011
        %v1075 = vpop.f32.mrf.mxu0
        %v1076 = vadd.f32 0.0, %v1075
        %1077 = vmatmul.f32.gmra.mxu0 %v1014
        %v1078 = vpop.f32.mrf.mxu0
        %v1079 = vadd.f32 0.0, %v1078
        %1080 = vmatmul.f32.gmra.mxu0 %v1017
        %v1081 = vpop.f32.mrf.mxu0
        %v1082 = vadd.f32 0.0, %v1081
        %1083 = vmatmul.f32.gmra.mxu0 %v1020
        %v1084 = vpop.f32.mrf.mxu0
        %v1085 = vadd.f32 0.0, %v1084
        %1086 = vmatmul.f32.gmra.mxu0 %v1023
        %v1087 = vpop.f32.mrf.mxu0
        %v1088 = vadd.f32 0.0, %v1087
        %1089 = vmatmul.f32.gmra.mxu0 %v1026
        %v1090 = vpop.f32.mrf.mxu0
        %v1091 = vadd.f32 0.0, %v1090
        %1092 = vmatmul.f32.gmra.mxu0 %v1029
        %v1093 = vpop.f32.mrf.mxu0
        %v1094 = vadd.f32 0.0, %v1093
        %1095 = vmatmul.f32.gmra.mxu0 %v1032
        %v1096 = vpop.f32.mrf.mxu0
        %v1097 = vadd.f32 0.0, %v1096
        %1098 = vdwg.mxu0
        %1099 = vmatpush.msra.mxu0 0.0
        %1100 = vmatpush.msra.mxu0 0.0
        %1101 = vmatpush.msra.mxu0 0.0
        %1102 = vmatpush.msra.mxu0 0.0
        %1103 = vmatpush.msra.mxu0 0.0
        %1104 = vmatpush.msra.mxu0 0.0
        %1105 = vmatpush.msra.mxu0 0.0
        %1106 = vmatpush.msra.mxu0 0.0
        %1107 = vmatpush.msra.mxu0 0.0
        %1108 = vmatpush.msra.mxu0 0.0
        %1109 = vmatpush.msra.mxu0 0.0
        %1110 = vmatpush.msra.mxu0 0.0
        %1111 = vmatpush.msra.mxu0 0.0
        %1112 = vmatpush.msra.mxu0 0.0
        %1113 = vmatpush.msra.mxu0 0.0
        %1114 = vmatpush.msra.mxu0 %v427
        %1115 = vmatmul.f32.gmra.mxu0 %v470
        %v1116 = vpop.f32.mrf.mxu0
        %v1117 = vadd.f32 0.0, %v1116
        %1118 = vmatmul.f32.gmra.mxu0 %v473
        %v1119 = vpop.f32.mrf.mxu0
        %v1120 = vadd.f32 0.0, %v1119
        %1121 = vmatmul.f32.gmra.mxu0 %v476
        %v1122 = vpop.f32.mrf.mxu0
        %v1123 = vadd.f32 0.0, %v1122
        %1124 = vmatmul.f32.gmra.mxu0 %v479
        %v1125 = vpop.f32.mrf.mxu0
        %v1126 = vadd.f32 0.0, %v1125
        %1127 = vmatmul.f32.gmra.mxu0 %v482
        %v1128 = vpop.f32.mrf.mxu0
        %v1129 = vadd.f32 0.0, %v1128
        %1130 = vmatmul.f32.gmra.mxu0 %v485
        %v1131 = vpop.f32.mrf.mxu0
        %v1132 = vadd.f32 0.0, %v1131
        %1133 = vmatmul.f32.gmra.mxu0 %v488
        %v1134 = vpop.f32.mrf.mxu0
        %v1135 = vadd.f32 0.0, %v1134
        %1136 = vmatmul.f32.gmra.mxu0 %v491
        %v1137 = vpop.f32.mrf.mxu0
        %v1138 = vadd.f32 0.0, %v1137
        %1139 = vmatmul.f32.gmra.mxu0 %v494
        %v1140 = vpop.f32.mrf.mxu0
        %v1141 = vadd.f32 0.0, %v1140
        %1142 = vmatmul.f32.gmra.mxu0 %v497
        %v1143 = vpop.f32.mrf.mxu0
        %v1144 = vadd.f32 0.0, %v1143
        %1145 = vmatmul.f32.gmra.mxu0 %v500
        %v1146 = vpop.f32.mrf.mxu0
        %v1147 = vadd.f32 0.0, %v1146
        %1148 = vmatmul.f32.gmra.mxu0 %v503
        %v1149 = vpop.f32.mrf.mxu0
        %v1150 = vadd.f32 0.0, %v1149
        %1151 = vmatmul.f32.gmra.mxu0 %v506
        %v1152 = vpop.f32.mrf.mxu0
        %v1153 = vadd.f32 0.0, %v1152
        %1154 = vmatmul.f32.gmra.mxu0 %v509
        %v1155 = vpop.f32.mrf.mxu0
        %v1156 = vadd.f32 0.0, %v1155
        %1157 = vmatmul.f32.gmra.mxu0 %v512
        %v1158 = vpop.f32.mrf.mxu0
        %v1159 = vadd.f32 0.0, %v1158
        %1160 = vmatmul.f32.gmra.mxu0 %v515
        %v1161 = vpop.f32.mrf.mxu0
        %v1162 = vadd.f32 0.0, %v1161
        %1163 = vdwg.mxu0
        %v1165 = vsel %vm468, %v1117, 0
        %v1168 = vsel %vm468, %v1120, 0
        %v1171 = vsel %vm468, %v1123, 0
        %v1174 = vsel %vm468, %v1126, 0
        %v1177 = vsel %vm468, %v1129, 0
        %v1180 = vsel %vm468, %v1132, 0
        %v1183 = vsel %vm468, %v1135, 0
        %v1186 = vsel %vm468, %v1138, 0
        %v1189 = vsel %vm468, %v1141, 0
        %v1192 = vsel %vm468, %v1144, 0
        %v1195 = vsel %vm468, %v1147, 0
        %v1198 = vsel %vm468, %v1150, 0
        %v1201 = vsel %vm468, %v1153, 0
        %v1204 = vsel %vm468, %v1156, 0
        %v1207 = vsel %vm468, %v1159, 0
        %v1210 = vsel %vm468, %v1162, 0
        %1212 = vmatpush.xpose.msra.mxu0 %v676
        %1213 = vmatpush.xpose.msra.mxu0 %v673
        %1214 = vmatpush.xpose.msra.mxu0 %v670
        %1215 = vmatpush.xpose.msra.mxu0 %v667
        %1216 = vmatpush.xpose.msra.mxu0 %v664
        %1217 = vmatpush.xpose.msra.mxu0 %v661
        %1218 = vmatpush.xpose.msra.mxu0 %v658
        %1219 = vmatpush.xpose.msra.mxu0 %v655
        %1220 = vmatpush.xpose.msra.mxu0 %v652
        %1221 = vmatpush.xpose.msra.mxu0 %v649
        %1222 = vmatpush.xpose.msra.mxu0 %v646
        %1223 = vmatpush.xpose.msra.mxu0 %v643
        %1224 = vmatpush.xpose.msra.mxu0 %v640
        %1225 = vmatpush.xpose.msra.mxu0 %v637
        %1226 = vmatpush.xpose.msra.mxu0 %v634
        %1227 = vmatpush.xpose.msra.mxu0 %v631
        %1228 = vmatmul.f32.gmra.mxu0 %v1165
        %v1229 = vpop.f32.mrf.mxu0
        %v1230 = vadd.f32 0.0, %v1229
        %1231 = vmatmul.f32.gmra.mxu0 %v1168
        %v1232 = vpop.f32.mrf.mxu0
        %v1233 = vadd.f32 0.0, %v1232
        %1234 = vmatmul.f32.gmra.mxu0 %v1171
        %v1235 = vpop.f32.mrf.mxu0
        %v1236 = vadd.f32 0.0, %v1235
        %1237 = vmatmul.f32.gmra.mxu0 %v1174
        %v1238 = vpop.f32.mrf.mxu0
        %v1239 = vadd.f32 0.0, %v1238
        %1240 = vmatmul.f32.gmra.mxu0 %v1177
        %v1241 = vpop.f32.mrf.mxu0
        %v1242 = vadd.f32 0.0, %v1241
        %1243 = vmatmul.f32.gmra.mxu0 %v1180
        %v1244 = vpop.f32.mrf.mxu0
        %v1245 = vadd.f32 0.0, %v1244
        %1246 = vmatmul.f32.gmra.mxu0 %v1183
        %v1247 = vpop.f32.mrf.mxu0
        %v1248 = vadd.f32 0.0, %v1247
        %1249 = vmatmul.f32.gmra.mxu0 %v1186
        %v1250 = vpop.f32.mrf.mxu0
        %v1251 = vadd.f32 0.0, %v1250
        %1252 = vmatmul.f32.gmra.mxu0 %v1189
        %v1253 = vpop.f32.mrf.mxu0
        %v1254 = vadd.f32 0.0, %v1253
        %1255 = vmatmul.f32.gmra.mxu0 %v1192
        %v1256 = vpop.f32.mrf.mxu0
        %v1257 = vadd.f32 0.0, %v1256
        %1258 = vmatmul.f32.gmra.mxu0 %v1195
        %v1259 = vpop.f32.mrf.mxu0
        %v1260 = vadd.f32 0.0, %v1259
        %1261 = vmatmul.f32.gmra.mxu0 %v1198
        %v1262 = vpop.f32.mrf.mxu0
        %v1263 = vadd.f32 0.0, %v1262
        %1264 = vmatmul.f32.gmra.mxu0 %v1201
        %v1265 = vpop.f32.mrf.mxu0
        %v1266 = vadd.f32 0.0, %v1265
        %1267 = vmatmul.f32.gmra.mxu0 %v1204
        %v1268 = vpop.f32.mrf.mxu0
        %v1269 = vadd.f32 0.0, %v1268
        %1270 = vmatmul.f32.gmra.mxu0 %v1207
        %v1271 = vpop.f32.mrf.mxu0
        %v1272 = vadd.f32 0.0, %v1271
        %1273 = vmatmul.f32.gmra.mxu0 %v1210
        %v1274 = vpop.f32.mrf.mxu0
        %v1275 = vadd.f32 0.0, %v1274
        %1276 = vdwg.mxu0
        %1277 = vmatpush.msra.mxu0 0.0
        %1278 = vmatpush.msra.mxu0 0.0
        %1279 = vmatpush.msra.mxu0 0.0
        %1280 = vmatpush.msra.mxu0 0.0
        %1281 = vmatpush.msra.mxu0 0.0
        %1282 = vmatpush.msra.mxu0 0.0
        %1283 = vmatpush.msra.mxu0 0.0
        %1284 = vmatpush.msra.mxu0 0.0
        %1285 = vmatpush.msra.mxu0 0.0
        %1286 = vmatpush.msra.mxu0 0.0
        %1287 = vmatpush.msra.mxu0 0.0
        %1288 = vmatpush.msra.mxu0 0.0
        %1289 = vmatpush.msra.mxu0 0.0
        %1290 = vmatpush.msra.mxu0 0.0
        %1291 = vmatpush.msra.mxu0 0.0
        %1292 = vmatpush.msra.mxu0 %v431
        %1293 = vmatmul.f32.gmra.mxu0 %v470
        %v1294 = vpop.f32.mrf.mxu0
        %v1295 = vadd.f32 0.0, %v1294
        %1296 = vmatmul.f32.gmra.mxu0 %v473
        %v1297 = vpop.f32.mrf.mxu0
        %v1298 = vadd.f32 0.0, %v1297
        %1299 = vmatmul.f32.gmra.mxu0 %v476
        %v1300 = vpop.f32.mrf.mxu0
        %v1301 = vadd.f32 0.0, %v1300
        %1302 = vmatmul.f32.gmra.mxu0 %v479
        %v1303 = vpop.f32.mrf.mxu0
        %v1304 = vadd.f32 0.0, %v1303
        %1305 = vmatmul.f32.gmra.mxu0 %v482
        %v1306 = vpop.f32.mrf.mxu0
        %v1307 = vadd.f32 0.0, %v1306
        %1308 = vmatmul.f32.gmra.mxu0 %v485
        %v1309 = vpop.f32.mrf.mxu0
        %v1310 = vadd.f32 0.0, %v1309
        %1311 = vmatmul.f32.gmra.mxu0 %v488
        %v1312 = vpop.f32.mrf.mxu0
        %v1313 = vadd.f32 0.0, %v1312
        %1314 = vmatmul.f32.gmra.mxu0 %v491
        %v1315 = vpop.f32.mrf.mxu0
        %v1316 = vadd.f32 0.0, %v1315
        %1317 = vmatmul.f32.gmra.mxu0 %v494
        %v1318 = vpop.f32.mrf.mxu0
        %v1319 = vadd.f32 0.0, %v1318
        %1320 = vmatmul.f32.gmra.mxu0 %v497
        %v1321 = vpop.f32.mrf.mxu0
        %v1322 = vadd.f32 0.0, %v1321
        %1323 = vmatmul.f32.gmra.mxu0 %v500
        %v1324 = vpop.f32.mrf.mxu0
        %v1325 = vadd.f32 0.0, %v1324
        %1326 = vmatmul.f32.gmra.mxu0 %v503
        %v1327 = vpop.f32.mrf.mxu0
        %v1328 = vadd.f32 0.0, %v1327
        %1329 = vmatmul.f32.gmra.mxu0 %v506
        %v1330 = vpop.f32.mrf.mxu0
        %v1331 = vadd.f32 0.0, %v1330
        %1332 = vmatmul.f32.gmra.mxu0 %v509
        %v1333 = vpop.f32.mrf.mxu0
        %v1334 = vadd.f32 0.0, %v1333
        %1335 = vmatmul.f32.gmra.mxu0 %v512
        %v1336 = vpop.f32.mrf.mxu0
        %v1337 = vadd.f32 0.0, %v1336
        %1338 = vmatmul.f32.gmra.mxu0 %v515
        %v1339 = vpop.f32.mrf.mxu0
        %v1340 = vadd.f32 0.0, %v1339
        %1341 = vdwg.mxu0
        %v1343 = vsel %vm468, %v1295, 0
        %v1346 = vsel %vm468, %v1298, 0
        %v1349 = vsel %vm468, %v1301, 0
        %v1352 = vsel %vm468, %v1304, 0
        %v1355 = vsel %vm468, %v1307, 0
        %v1358 = vsel %vm468, %v1310, 0
        %v1361 = vsel %vm468, %v1313, 0
        %v1364 = vsel %vm468, %v1316, 0
        %v1367 = vsel %vm468, %v1319, 0
        %v1370 = vsel %vm468, %v1322, 0
        %v1373 = vsel %vm468, %v1325, 0
        %v1376 = vsel %vm468, %v1328, 0
        %v1379 = vsel %vm468, %v1331, 0
        %v1382 = vsel %vm468, %v1334, 0
        %v1385 = vsel %vm468, %v1337, 0
        %v1388 = vsel %vm468, %v1340, 0
        %1390 = vmatpush.xpose.msra.mxu0 %v676
        %1391 = vmatpush.xpose.msra.mxu0 %v673
        %1392 = vmatpush.xpose.msra.mxu0 %v670
        %1393 = vmatpush.xpose.msra.mxu0 %v667
        %1394 = vmatpush.xpose.msra.mxu0 %v664
        %1395 = vmatpush.xpose.msra.mxu0 %v661
        %1396 = vmatpush.xpose.msra.mxu0 %v658
        %1397 = vmatpush.xpose.msra.mxu0 %v655
        %1398 = vmatpush.xpose.msra.mxu0 %v652
        %1399 = vmatpush.xpose.msra.mxu0 %v649
        %1400 = vmatpush.xpose.msra.mxu0 %v646
        %1401 = vmatpush.xpose.msra.mxu0 %v643
        %1402 = vmatpush.xpose.msra.mxu0 %v640
        %1403 = vmatpush.xpose.msra.mxu0 %v637
        %1404 = vmatpush.xpose.msra.mxu0 %v634
        %1405 = vmatpush.xpose.msra.mxu0 %v631
        %1406 = vmatmul.f32.gmra.mxu0 %v1343
        %v1407 = vpop.f32.mrf.mxu0
        %v1408 = vadd.f32 0.0, %v1407
        %1409 = vmatmul.f32.gmra.mxu0 %v1346
        %v1410 = vpop.f32.mrf.mxu0
        %v1411 = vadd.f32 0.0, %v1410
        %1412 = vmatmul.f32.gmra.mxu0 %v1349
        %v1413 = vpop.f32.mrf.mxu0
        %v1414 = vadd.f32 0.0, %v1413
        %1415 = vmatmul.f32.gmra.mxu0 %v1352
        %v1416 = vpop.f32.mrf.mxu0
        %v1417 = vadd.f32 0.0, %v1416
        %1418 = vmatmul.f32.gmra.mxu0 %v1355
        %v1419 = vpop.f32.mrf.mxu0
        %v1420 = vadd.f32 0.0, %v1419
        %1421 = vmatmul.f32.gmra.mxu0 %v1358
        %v1422 = vpop.f32.mrf.mxu0
        %v1423 = vadd.f32 0.0, %v1422
        %1424 = vmatmul.f32.gmra.mxu0 %v1361
        %v1425 = vpop.f32.mrf.mxu0
        %v1426 = vadd.f32 0.0, %v1425
        %1427 = vmatmul.f32.gmra.mxu0 %v1364
        %v1428 = vpop.f32.mrf.mxu0
        %v1429 = vadd.f32 0.0, %v1428
        %1430 = vmatmul.f32.gmra.mxu0 %v1367
        %v1431 = vpop.f32.mrf.mxu0
        %v1432 = vadd.f32 0.0, %v1431
        %1433 = vmatmul.f32.gmra.mxu0 %v1370
        %v1434 = vpop.f32.mrf.mxu0
        %v1435 = vadd.f32 0.0, %v1434
        %1436 = vmatmul.f32.gmra.mxu0 %v1373
        %v1437 = vpop.f32.mrf.mxu0
        %v1438 = vadd.f32 0.0, %v1437
        %1439 = vmatmul.f32.gmra.mxu0 %v1376
        %v1440 = vpop.f32.mrf.mxu0
        %v1441 = vadd.f32 0.0, %v1440
        %1442 = vmatmul.f32.gmra.mxu0 %v1379
        %v1443 = vpop.f32.mrf.mxu0
        %v1444 = vadd.f32 0.0, %v1443
        %1445 = vmatmul.f32.gmra.mxu0 %v1382
        %v1446 = vpop.f32.mrf.mxu0
        %v1447 = vadd.f32 0.0, %v1446
        %1448 = vmatmul.f32.gmra.mxu0 %v1385
        %v1449 = vpop.f32.mrf.mxu0
        %v1450 = vadd.f32 0.0, %v1449
        %1451 = vmatmul.f32.gmra.mxu0 %v1388
        %v1452 = vpop.f32.mrf.mxu0
        %v1453 = vadd.f32 0.0, %v1452
        %1454 = vdwg.mxu0
        %1455 = vmatpush.msra.mxu0 0.0
        %1456 = vmatpush.msra.mxu0 0.0
        %1457 = vmatpush.msra.mxu0 0.0
        %1458 = vmatpush.msra.mxu0 0.0
        %1459 = vmatpush.msra.mxu0 0.0
        %1460 = vmatpush.msra.mxu0 0.0
        %1461 = vmatpush.msra.mxu0 0.0
        %1462 = vmatpush.msra.mxu0 0.0
        %1463 = vmatpush.msra.mxu0 0.0
        %1464 = vmatpush.msra.mxu0 0.0
        %1465 = vmatpush.msra.mxu0 0.0
        %1466 = vmatpush.msra.mxu0 0.0
        %1467 = vmatpush.msra.mxu0 0.0
        %1468 = vmatpush.msra.mxu0 0.0
        %1469 = vmatpush.msra.mxu0 0.0
        %1470 = vmatpush.msra.mxu0 %v435
        %1471 = vmatmul.f32.gmra.mxu0 %v470
        %v1472 = vpop.f32.mrf.mxu0
        %v1473 = vadd.f32 0.0, %v1472
        %1474 = vmatmul.f32.gmra.mxu0 %v473
        %v1475 = vpop.f32.mrf.mxu0
        %v1476 = vadd.f32 0.0, %v1475
        %1477 = vmatmul.f32.gmra.mxu0 %v476
        %v1478 = vpop.f32.mrf.mxu0
        %v1479 = vadd.f32 0.0, %v1478
        %1480 = vmatmul.f32.gmra.mxu0 %v479
        %v1481 = vpop.f32.mrf.mxu0
        %v1482 = vadd.f32 0.0, %v1481
        %1483 = vmatmul.f32.gmra.mxu0 %v482
        %v1484 = vpop.f32.mrf.mxu0
        %v1485 = vadd.f32 0.0, %v1484
        %1486 = vmatmul.f32.gmra.mxu0 %v485
        %v1487 = vpop.f32.mrf.mxu0
        %v1488 = vadd.f32 0.0, %v1487
        %1489 = vmatmul.f32.gmra.mxu0 %v488
        %v1490 = vpop.f32.mrf.mxu0
        %v1491 = vadd.f32 0.0, %v1490
        %1492 = vmatmul.f32.gmra.mxu0 %v491
        %v1493 = vpop.f32.mrf.mxu0
        %v1494 = vadd.f32 0.0, %v1493
        %1495 = vmatmul.f32.gmra.mxu0 %v494
        %v1496 = vpop.f32.mrf.mxu0
        %v1497 = vadd.f32 0.0, %v1496
        %1498 = vmatmul.f32.gmra.mxu0 %v497
        %v1499 = vpop.f32.mrf.mxu0
        %v1500 = vadd.f32 0.0, %v1499
        %1501 = vmatmul.f32.gmra.mxu0 %v500
        %v1502 = vpop.f32.mrf.mxu0
        %v1503 = vadd.f32 0.0, %v1502
        %1504 = vmatmul.f32.gmra.mxu0 %v503
        %v1505 = vpop.f32.mrf.mxu0
        %v1506 = vadd.f32 0.0, %v1505
        %1507 = vmatmul.f32.gmra.mxu0 %v506
        %v1508 = vpop.f32.mrf.mxu0
        %v1509 = vadd.f32 0.0, %v1508
        %1510 = vmatmul.f32.gmra.mxu0 %v509
        %v1511 = vpop.f32.mrf.mxu0
        %v1512 = vadd.f32 0.0, %v1511
        %1513 = vmatmul.f32.gmra.mxu0 %v512
        %v1514 = vpop.f32.mrf.mxu0
        %v1515 = vadd.f32 0.0, %v1514
        %1516 = vmatmul.f32.gmra.mxu0 %v515
        %v1517 = vpop.f32.mrf.mxu0
        %v1518 = vadd.f32 0.0, %v1517
        %1519 = vdwg.mxu0
        %v1521 = vsel %vm468, %v1473, 0
        %v1524 = vsel %vm468, %v1476, 0
        %v1527 = vsel %vm468, %v1479, 0
        %v1530 = vsel %vm468, %v1482, 0
        %v1533 = vsel %vm468, %v1485, 0
        %v1536 = vsel %vm468, %v1488, 0
        %v1539 = vsel %vm468, %v1491, 0
        %v1542 = vsel %vm468, %v1494, 0
        %v1545 = vsel %vm468, %v1497, 0
        %v1548 = vsel %vm468, %v1500, 0
        %v1551 = vsel %vm468, %v1503, 0
        %v1554 = vsel %vm468, %v1506, 0
        %v1557 = vsel %vm468, %v1509, 0
        %v1560 = vsel %vm468, %v1512, 0
        %v1563 = vsel %vm468, %v1515, 0
        %v1566 = vsel %vm468, %v1518, 0
        %1568 = vmatpush.xpose.msra.mxu0 %v676
        %1569 = vmatpush.xpose.msra.mxu0 %v673
        %1570 = vmatpush.xpose.msra.mxu0 %v670
        %1571 = vmatpush.xpose.msra.mxu0 %v667
        %1572 = vmatpush.xpose.msra.mxu0 %v664
        %1573 = vmatpush.xpose.msra.mxu0 %v661
        %1574 = vmatpush.xpose.msra.mxu0 %v658
        %1575 = vmatpush.xpose.msra.mxu0 %v655
        %1576 = vmatpush.xpose.msra.mxu0 %v652
        %1577 = vmatpush.xpose.msra.mxu0 %v649
        %1578 = vmatpush.xpose.msra.mxu0 %v646
        %1579 = vmatpush.xpose.msra.mxu0 %v643
        %1580 = vmatpush.xpose.msra.mxu0 %v640
        %1581 = vmatpush.xpose.msra.mxu0 %v637
        %1582 = vmatpush.xpose.msra.mxu0 %v634
        %1583 = vmatpush.xpose.msra.mxu0 %v631
        %1584 = vmatmul.f32.gmra.mxu0 %v1521
        %v1585 = vpop.f32.mrf.mxu0
        %v1586 = vadd.f32 0.0, %v1585
        %1587 = vmatmul.f32.gmra.mxu0 %v1524
        %v1588 = vpop.f32.mrf.mxu0
        %v1589 = vadd.f32 0.0, %v1588
        %1590 = vmatmul.f32.gmra.mxu0 %v1527
        %v1591 = vpop.f32.mrf.mxu0
        %v1592 = vadd.f32 0.0, %v1591
        %1593 = vmatmul.f32.gmra.mxu0 %v1530
        %v1594 = vpop.f32.mrf.mxu0
        %v1595 = vadd.f32 0.0, %v1594
        %1596 = vmatmul.f32.gmra.mxu0 %v1533
        %v1597 = vpop.f32.mrf.mxu0
        %v1598 = vadd.f32 0.0, %v1597
        %1599 = vmatmul.f32.gmra.mxu0 %v1536
        %v1600 = vpop.f32.mrf.mxu0
        %v1601 = vadd.f32 0.0, %v1600
        %1602 = vmatmul.f32.gmra.mxu0 %v1539
        %v1603 = vpop.f32.mrf.mxu0
        %v1604 = vadd.f32 0.0, %v1603
        %1605 = vmatmul.f32.gmra.mxu0 %v1542
        %v1606 = vpop.f32.mrf.mxu0
        %v1607 = vadd.f32 0.0, %v1606
        %1608 = vmatmul.f32.gmra.mxu0 %v1545
        %v1609 = vpop.f32.mrf.mxu0
        %v1610 = vadd.f32 0.0, %v1609
        %1611 = vmatmul.f32.gmra.mxu0 %v1548
        %v1612 = vpop.f32.mrf.mxu0
        %v1613 = vadd.f32 0.0, %v1612
        %1614 = vmatmul.f32.gmra.mxu0 %v1551
        %v1615 = vpop.f32.mrf.mxu0
        %v1616 = vadd.f32 0.0, %v1615
        %1617 = vmatmul.f32.gmra.mxu0 %v1554
        %v1618 = vpop.f32.mrf.mxu0
        %v1619 = vadd.f32 0.0, %v1618
        %1620 = vmatmul.f32.gmra.mxu0 %v1557
        %v1621 = vpop.f32.mrf.mxu0
        %v1622 = vadd.f32 0.0, %v1621
        %1623 = vmatmul.f32.gmra.mxu0 %v1560
        %v1624 = vpop.f32.mrf.mxu0
        %v1625 = vadd.f32 0.0, %v1624
        %1626 = vmatmul.f32.gmra.mxu0 %v1563
        %v1627 = vpop.f32.mrf.mxu0
        %v1628 = vadd.f32 0.0, %v1627
        %1629 = vmatmul.f32.gmra.mxu0 %v1566
        %v1630 = vpop.f32.mrf.mxu0
        %v1631 = vadd.f32 0.0, %v1630
        %1632 = vdwg.mxu0
        %v1633 = vlaneseq
        %v1634 = vshrl.u32 %v1633, 7
        %v1635 = vadd.s32 %v1634, 8
        %v1636 = vadd.s32 %v1634, 16
        %v1637 = vadd.s32 %v1634, 24
        %v1638 = vadd.s32 %v1634, 32
        %v1639 = vadd.s32 %v1634, 40
        %v1640 = vadd.s32 %v1634, 48
        %v1641 = vadd.s32 %v1634, 56
        %v1642 = vadd.s32 %v1634, 64
        %v1643 = vadd.s32 %v1634, 72
        %v1644 = vadd.s32 %v1634, 80
        %v1645 = vadd.s32 %v1634, 88
        %v1646 = vadd.s32 %v1634, 96
        %v1647 = vadd.s32 %v1634, 104
        %v1648 = vadd.s32 %v1634, 112
        %v1649 = vadd.s32 %v1634, 120
        %v1650 = vlaneseq
        %v1651 = vand.u32 %v1650, 127
        %vm1652 = vcmp.ge.s32.totalorder %v1634, 1
        %vm1653 = vcmp.ge.s32.totalorder %v1635, 1
        %vm1654 = vcmp.ge.s32.totalorder %v1636, 1
        %vm1655 = vcmp.ge.s32.totalorder %v1637, 1
        %vm1656 = vcmp.ge.s32.totalorder %v1638, 1
        %vm1657 = vcmp.ge.s32.totalorder %v1639, 1
        %vm1658 = vcmp.ge.s32.totalorder %v1640, 1
        %vm1659 = vcmp.ge.s32.totalorder %v1641, 1
        %vm1660 = vcmp.ge.s32.totalorder %v1642, 1
        %vm1661 = vcmp.ge.s32.totalorder %v1643, 1
        %vm1662 = vcmp.ge.s32.totalorder %v1644, 1
        %vm1663 = vcmp.ge.s32.totalorder %v1645, 1
        %vm1664 = vcmp.ge.s32.totalorder %v1646, 1
        %vm1665 = vcmp.ge.s32.totalorder %v1647, 1
        %vm1666 = vcmp.ge.s32.totalorder %v1648, 1
        %vm1667 = vcmp.ge.s32.totalorder %v1649, 1
        %v1668 = vsel %vm1652, %v1230, 0.0
        %v1669 = vsel %vm1653, %v1233, 0.0
        %v1670 = vsel %vm1654, %v1236, 0.0
        %v1671 = vsel %vm1655, %v1239, 0.0
        %v1672 = vsel %vm1656, %v1242, 0.0
        %v1673 = vsel %vm1657, %v1245, 0.0
        %v1674 = vsel %vm1658, %v1248, 0.0
        %v1675 = vsel %vm1659, %v1251, 0.0
        %v1676 = vsel %vm1660, %v1254, 0.0
        %v1677 = vsel %vm1661, %v1257, 0.0
        %v1678 = vsel %vm1662, %v1260, 0.0
        %v1679 = vsel %vm1663, %v1263, 0.0
        %v1680 = vsel %vm1664, %v1266, 0.0
        %v1681 = vsel %vm1665, %v1269, 0.0
        %v1682 = vsel %vm1666, %v1272, 0.0
        %v1683 = vsel %vm1667, %v1275, 0.0
        %vm1684 = vcmp.le.s32.totalorder %v1634, 126
        %vm1685 = vcmp.le.s32.totalorder %v1635, 126
        %vm1686 = vcmp.le.s32.totalorder %v1636, 126
        %vm1687 = vcmp.le.s32.totalorder %v1637, 126
        %vm1688 = vcmp.le.s32.totalorder %v1638, 126
        %vm1689 = vcmp.le.s32.totalorder %v1639, 126
        %vm1690 = vcmp.le.s32.totalorder %v1640, 126
        %vm1691 = vcmp.le.s32.totalorder %v1641, 126
        %vm1692 = vcmp.le.s32.totalorder %v1642, 126
        %vm1693 = vcmp.le.s32.totalorder %v1643, 126
        %vm1694 = vcmp.le.s32.totalorder %v1644, 126
        %vm1695 = vcmp.le.s32.totalorder %v1645, 126
        %vm1696 = vcmp.le.s32.totalorder %v1646, 126
        %vm1697 = vcmp.le.s32.totalorder %v1647, 126
        %vm1698 = vcmp.le.s32.totalorder %v1648, 126
        %vm1699 = vcmp.le.s32.totalorder %v1649, 126
        %v1700 = vsel %vm1684, %v1586, 0.0
        %v1701 = vsel %vm1685, %v1589, 0.0
        %v1702 = vsel %vm1686, %v1592, 0.0
        %v1703 = vsel %vm1687, %v1595, 0.0
        %v1704 = vsel %vm1688, %v1598, 0.0
        %v1705 = vsel %vm1689, %v1601, 0.0
        %v1706 = vsel %vm1690, %v1604, 0.0
        %v1707 = vsel %vm1691, %v1607, 0.0
        %v1708 = vsel %vm1692, %v1610, 0.0
        %v1709 = vsel %vm1693, %v1613, 0.0
        %v1710 = vsel %vm1694, %v1616, 0.0
        %v1711 = vsel %vm1695, %v1619, 0.0
        %v1712 = vsel %vm1696, %v1622, 0.0
        %v1713 = vsel %vm1697, %v1625, 0.0
        %v1714 = vsel %vm1698, %v1628, 0.0
        %v1715 = vsel %vm1699, %v1631, 0.0
        %vm1716 = vcmp.ge.s32.totalorder %v1651, 1
        %v1717 = vsel %vm1716, %v696, 0.0
        %v1718 = vsel %vm1716, %v699, 0.0
        %v1719 = vsel %vm1716, %v702, 0.0
        %v1720 = vsel %vm1716, %v705, 0.0
        %v1721 = vsel %vm1716, %v708, 0.0
        %v1722 = vsel %vm1716, %v711, 0.0
        %v1723 = vsel %vm1716, %v714, 0.0
        %v1724 = vsel %vm1716, %v717, 0.0
        %v1725 = vsel %vm1716, %v720, 0.0
        %v1726 = vsel %vm1716, %v723, 0.0
        %v1727 = vsel %vm1716, %v726, 0.0
        %v1728 = vsel %vm1716, %v729, 0.0
        %v1729 = vsel %vm1716, %v732, 0.0
        %v1730 = vsel %vm1716, %v735, 0.0
        %v1731 = vsel %vm1716, %v738, 0.0
        %v1732 = vsel %vm1716, %v741, 0.0
        %vm1733 = vcmp.le.s32.totalorder %v1651, 126
        %v1734 = vsel %vm1733, %v1052, 0.0
        %v1735 = vsel %vm1733, %v1055, 0.0
        %v1736 = vsel %vm1733, %v1058, 0.0
        %v1737 = vsel %vm1733, %v1061, 0.0
        %v1738 = vsel %vm1733, %v1064, 0.0
        %v1739 = vsel %vm1733, %v1067, 0.0
        %v1740 = vsel %vm1733, %v1070, 0.0
        %v1741 = vsel %vm1733, %v1073, 0.0
        %v1742 = vsel %vm1733, %v1076, 0.0
        %v1743 = vsel %vm1733, %v1079, 0.0
        %v1744 = vsel %vm1733, %v1082, 0.0
        %v1745 = vsel %vm1733, %v1085, 0.0
        %v1746 = vsel %vm1733, %v1088, 0.0
        %v1747 = vsel %vm1733, %v1091, 0.0
        %v1748 = vsel %vm1733, %v1094, 0.0
        %v1749 = vsel %vm1733, %v1097, 0.0
        %v1750 = vld [vmem:[%s4] sm:$0xff]
        %v1751 = vld [vmem:[%s4 + $0x8] sm:$0xff]
        %v1752 = vld [vmem:[%s4 + $0x10] sm:$0xff]
        %v1753 = vld [vmem:[%s4 + $0x18] sm:$0xff]
        %v1754 = vld [vmem:[%s4 + $0x20] sm:$0xff]
        %v1755 = vld [vmem:[%s4 + $0x28] sm:$0xff]
        %v1756 = vld [vmem:[%s4 + $0x30] sm:$0xff]
        %v1757 = vld [vmem:[%s4 + $0x38] sm:$0xff]
        %v1758 = vld [vmem:[%s4 + $0x40] sm:$0xff]
        %v1759 = vld [vmem:[%s4 + $0x48] sm:$0xff]
        %v1760 = vld [vmem:[%s4 + $0x50] sm:$0xff]
        %v1761 = vld [vmem:[%s4 + $0x58] sm:$0xff]
        %v1762 = vld [vmem:[%s4 + $0x60] sm:$0xff]
        %v1763 = vld [vmem:[%s4 + $0x68] sm:$0xff]
        %v1764 = vld [vmem:[%s4 + $0x70] sm:$0xff]
        %v1765 = vld [vmem:[%s4 + $0x78] sm:$0xff]
        %v1766 = vld [vmem:[%s5] sm:$0xff]
        %v1767 = vld [vmem:[%s5 + $0x8] sm:$0xff]
        %v1768 = vld [vmem:[%s5 + $0x10] sm:$0xff]
        %v1769 = vld [vmem:[%s5 + $0x18] sm:$0xff]
        %v1770 = vld [vmem:[%s5 + $0x20] sm:$0xff]
        %v1771 = vld [vmem:[%s5 + $0x28] sm:$0xff]
        %v1772 = vld [vmem:[%s5 + $0x30] sm:$0xff]
        %v1773 = vld [vmem:[%s5 + $0x38] sm:$0xff]
        %v1774 = vld [vmem:[%s5 + $0x40] sm:$0xff]
        %v1775 = vld [vmem:[%s5 + $0x48] sm:$0xff]
        %v1776 = vld [vmem:[%s5 + $0x50] sm:$0xff]
        %v1777 = vld [vmem:[%s5 + $0x58] sm:$0xff]
        %v1778 = vld [vmem:[%s5 + $0x60] sm:$0xff]
        %v1779 = vld [vmem:[%s5 + $0x68] sm:$0xff]
        %v1780 = vld [vmem:[%s5 + $0x70] sm:$0xff]
        %v1781 = vld [vmem:[%s5 + $0x78] sm:$0xff]
        %v1782 = vld [vmem:[#allocation7] sm:$0xff]
        %v1783 = vld [vmem:[#allocation7 + $0x8] sm:$0xff]
        %v1784 = vld [vmem:[#allocation7 + $0x10] sm:$0xff]
        %v1785 = vld [vmem:[#allocation7 + $0x18] sm:$0xff]
        %v1786 = vld [vmem:[#allocation7 + $0x20] sm:$0xff]
        %v1787 = vld [vmem:[#allocation7 + $0x28] sm:$0xff]
        %v1788 = vld [vmem:[#allocation7 + $0x30] sm:$0xff]
        %v1789 = vld [vmem:[#allocation7 + $0x38] sm:$0xff]
        %v1790 = vld [vmem:[#allocation7 + $0x40] sm:$0xff]
        %v1791 = vld [vmem:[#allocation7 + $0x48] sm:$0xff]
        %v1792 = vld [vmem:[#allocation7 + $0x50] sm:$0xff]
        %v1793 = vld [vmem:[#allocation7 + $0x58] sm:$0xff]
        %v1794 = vld [vmem:[#allocation7 + $0x60] sm:$0xff]
        %v1795 = vld [vmem:[#allocation7 + $0x68] sm:$0xff]
        %v1796 = vld [vmem:[#allocation7 + $0x70] sm:$0xff]
        %v1797 = vld [vmem:[#allocation7 + $0x78] sm:$0xff]
        %v1798 = vld [vmem:[#allocation8] sm:$0xff]
        %v1799 = vld [vmem:[#allocation8 + $0x8] sm:$0xff]
        %v1800 = vld [vmem:[#allocation8 + $0x10] sm:$0xff]
        %v1801 = vld [vmem:[#allocation8 + $0x18] sm:$0xff]
        %v1802 = vld [vmem:[#allocation8 + $0x20] sm:$0xff]
        %v1803 = vld [vmem:[#allocation8 + $0x28] sm:$0xff]
        %v1804 = vld [vmem:[#allocation8 + $0x30] sm:$0xff]
        %v1805 = vld [vmem:[#allocation8 + $0x38] sm:$0xff]
        %v1806 = vld [vmem:[#allocation8 + $0x40] sm:$0xff]
        %v1807 = vld [vmem:[#allocation8 + $0x48] sm:$0xff]
        %v1808 = vld [vmem:[#allocation8 + $0x50] sm:$0xff]
        %v1809 = vld [vmem:[#allocation8 + $0x58] sm:$0xff]
        %v1810 = vld [vmem:[#allocation8 + $0x60] sm:$0xff]
        %v1811 = vld [vmem:[#allocation8 + $0x68] sm:$0xff]
        %v1812 = vld [vmem:[#allocation8 + $0x70] sm:$0xff]
        %v1813 = vld [vmem:[#allocation8 + $0x78] sm:$0xff]
        %v1814 = vld [vmem:[%s342] sm:$0xff]
        %v1815 = vld [vmem:[%s342 + $0x8] sm:$0xff]
        %v1816 = vld [vmem:[%s342 + $0x10] sm:$0xff]
        %v1817 = vld [vmem:[%s342 + $0x18] sm:$0xff]
        %v1818 = vld [vmem:[%s342 + $0x20] sm:$0xff]
        %v1819 = vld [vmem:[%s342 + $0x28] sm:$0xff]
        %v1820 = vld [vmem:[%s342 + $0x30] sm:$0xff]
        %v1821 = vld [vmem:[%s342 + $0x38] sm:$0xff]
        %v1822 = vld [vmem:[%s342 + $0x40] sm:$0xff]
        %v1823 = vld [vmem:[%s342 + $0x48] sm:$0xff]
        %v1824 = vld [vmem:[%s342 + $0x50] sm:$0xff]
        %v1825 = vld [vmem:[%s342 + $0x58] sm:$0xff]
        %v1826 = vld [vmem:[%s342 + $0x60] sm:$0xff]
        %v1827 = vld [vmem:[%s342 + $0x68] sm:$0xff]
        %v1828 = vld [vmem:[%s342 + $0x70] sm:$0xff]
        %v1829 = vld [vmem:[%s342 + $0x78] sm:$0xff]
        %v1830 = vrot.slane %v1814, 7
        %v1831 = vrot.slane %v1815, 7
        %v1832 = vrot.slane %v1816, 7
        %v1833 = vrot.slane %v1817, 7
        %v1834 = vrot.slane %v1818, 7
        %v1835 = vrot.slane %v1819, 7
        %v1836 = vrot.slane %v1820, 7
        %v1837 = vrot.slane %v1821, 7
        %v1838 = vrot.slane %v1822, 7
        %v1839 = vrot.slane %v1823, 7
        %v1840 = vrot.slane %v1824, 7
        %v1841 = vrot.slane %v1825, 7
        %v1842 = vrot.slane %v1826, 7
        %v1843 = vrot.slane %v1827, 7
        %v1844 = vrot.slane %v1828, 7
        %v1845 = vrot.slane %v1829, 7
        %vm1846 = vcmp.lt.s32.totalorder %v1634, 1
        %v1847 = vsel %vm1846, %v1844, %v1845
        %v1848 = vsel %vm1846, %v1843, %v1844
        %v1849 = vsel %vm1846, %v1842, %v1843
        %v1850 = vsel %vm1846, %v1841, %v1842
        %v1851 = vsel %vm1846, %v1840, %v1841
        %v1852 = vsel %vm1846, %v1839, %v1840
        %v1853 = vsel %vm1846, %v1838, %v1839
        %v1854 = vsel %vm1846, %v1837, %v1838
        %v1855 = vsel %vm1846, %v1836, %v1837
        %v1856 = vsel %vm1846, %v1835, %v1836
        %v1857 = vsel %vm1846, %v1834, %v1835
        %v1858 = vsel %vm1846, %v1833, %v1834
        %v1859 = vsel %vm1846, %v1832, %v1833
        %v1860 = vsel %vm1846, %v1831, %v1832
        %v1861 = vsel %vm1846, %v1830, %v1831
        %v1862 = vsel %vm1846, %v1845, %v1830
        %v1863 = vmul.f32 %v874, %v1862
        %v1864 = vmul.f32 %v877, %v1861
        %v1865 = vmul.f32 %v880, %v1860
        %v1866 = vmul.f32 %v883, %v1859
        %v1867 = vmul.f32 %v886, %v1858
        %v1868 = vmul.f32 %v889, %v1857
        %v1869 = vmul.f32 %v892, %v1856
        %v1870 = vmul.f32 %v895, %v1855
        %v1871 = vmul.f32 %v898, %v1854
        %v1872 = vmul.f32 %v901, %v1853
        %v1873 = vmul.f32 %v904, %v1852
        %v1874 = vmul.f32 %v907, %v1851
        %v1875 = vmul.f32 %v910, %v1850
        %v1876 = vmul.f32 %v913, %v1849
        %v1877 = vmul.f32 %v916, %v1848
        %v1878 = vmul.f32 %v919, %v1847
        %1879 = vrot.lane.b32.xlu0 %v1862, 1
        %v1880 = vpop.permute.xlu0 %1879
        %1881 = vrot.lane.b32.xlu0 %v1861, 1
        %v1882 = vpop.permute.xlu0 %1881
        %1883 = vrot.lane.b32.xlu0 %v1860, 1
        %v1884 = vpop.permute.xlu0 %1883
        %1885 = vrot.lane.b32.xlu0 %v1859, 1
        %v1886 = vpop.permute.xlu0 %1885
        %1887 = vrot.lane.b32.xlu0 %v1858, 1
        %v1888 = vpop.permute.xlu0 %1887
        %1889 = vrot.lane.b32.xlu0 %v1857, 1
        %v1890 = vpop.permute.xlu0 %1889
        %1891 = vrot.lane.b32.xlu0 %v1856, 1
        %v1892 = vpop.permute.xlu0 %1891
        %1893 = vrot.lane.b32.xlu0 %v1855, 1
        %v1894 = vpop.permute.xlu0 %1893
        %1895 = vrot.lane.b32.xlu0 %v1854, 1
        %v1896 = vpop.permute.xlu0 %1895
        %1897 = vrot.lane.b32.xlu0 %v1853, 1
        %v1898 = vpop.permute.xlu0 %1897
        %1899 = vrot.lane.b32.xlu0 %v1852, 1
        %v1900 = vpop.permute.xlu0 %1899
        %1901 = vrot.lane.b32.xlu0 %v1851, 1
        %v1902 = vpop.permute.xlu0 %1901
        %1903 = vrot.lane.b32.xlu0 %v1850, 1
        %v1904 = vpop.permute.xlu0 %1903
        %1905 = vrot.lane.b32.xlu0 %v1849, 1
        %v1906 = vpop.permute.xlu0 %1905
        %1907 = vrot.lane.b32.xlu0 %v1848, 1
        %v1908 = vpop.permute.xlu0 %1907
        %1909 = vrot.lane.b32.xlu0 %v1847, 1
        %v1910 = vpop.permute.xlu0 %1909
        %v1911 = vmul.f32 %v1717, %v1880
        %v1912 = vmul.f32 %v1718, %v1882
        %v1913 = vmul.f32 %v1719, %v1884
        %v1914 = vmul.f32 %v1720, %v1886
        %v1915 = vmul.f32 %v1721, %v1888
        %v1916 = vmul.f32 %v1722, %v1890
        %v1917 = vmul.f32 %v1723, %v1892
        %v1918 = vmul.f32 %v1724, %v1894
        %v1919 = vmul.f32 %v1725, %v1896
        %v1920 = vmul.f32 %v1726, %v1898
        %v1921 = vmul.f32 %v1727, %v1900
        %v1922 = vmul.f32 %v1728, %v1902
        %v1923 = vmul.f32 %v1729, %v1904
        %v1924 = vmul.f32 %v1730, %v1906
        %v1925 = vmul.f32 %v1731, %v1908
        %v1926 = vmul.f32 %v1732, %v1910
        %v1927 = vadd.f32 %v1863, %v1911
        %v1928 = vadd.f32 %v1864, %v1912
        %v1929 = vadd.f32 %v1865, %v1913
        %v1930 = vadd.f32 %v1866, %v1914
        %v1931 = vadd.f32 %v1867, %v1915
        %v1932 = vadd.f32 %v1868, %v1916
        %v1933 = vadd.f32 %v1869, %v1917
        %v1934 = vadd.f32 %v1870, %v1918
        %v1935 = vadd.f32 %v1871, %v1919
        %v1936 = vadd.f32 %v1872, %v1920
        %v1937 = vadd.f32 %v1873, %v1921
        %v1938 = vadd.f32 %v1874, %v1922
        %v1939 = vadd.f32 %v1875, %v1923
        %v1940 = vadd.f32 %v1876, %v1924
        %v1941 = vadd.f32 %v1877, %v1925
        %v1942 = vadd.f32 %v1878, %v1926
        %1943 = vrot.lane.b32.xlu0 %v1862, 127
        %v1944 = vpop.permute.xlu0 %1943
        %1945 = vrot.lane.b32.xlu0 %v1861, 127
        %v1946 = vpop.permute.xlu0 %1945
        %1947 = vrot.lane.b32.xlu0 %v1860, 127
        %v1948 = vpop.permute.xlu0 %1947
        %1949 = vrot.lane.b32.xlu0 %v1859, 127
        %v1950 = vpop.permute.xlu0 %1949
        %1951 = vrot.lane.b32.xlu0 %v1858, 127
        %v1952 = vpop.permute.xlu0 %1951
        %1953 = vrot.lane.b32.xlu0 %v1857, 127
        %v1954 = vpop.permute.xlu0 %1953
        %1955 = vrot.lane.b32.xlu0 %v1856, 127
        %v1956 = vpop.permute.xlu0 %1955
        %1957 = vrot.lane.b32.xlu0 %v1855, 127
        %v1958 = vpop.permute.xlu0 %1957
        %1959 = vrot.lane.b32.xlu0 %v1854, 127
        %v1960 = vpop.permute.xlu0 %1959
        %1961 = vrot.lane.b32.xlu0 %v1853, 127
        %v1962 = vpop.permute.xlu0 %1961
        %1963 = vrot.lane.b32.xlu0 %v1852, 127
        %v1964 = vpop.permute.xlu0 %1963
        %1965 = vrot.lane.b32.xlu0 %v1851, 127
        %v1966 = vpop.permute.xlu0 %1965
        %1967 = vrot.lane.b32.xlu0 %v1850, 127
        %v1968 = vpop.permute.xlu0 %1967
        %1969 = vrot.lane.b32.xlu0 %v1849, 127
        %v1970 = vpop.permute.xlu0 %1969
        %1971 = vrot.lane.b32.xlu0 %v1848, 127
        %v1972 = vpop.permute.xlu0 %1971
        %1973 = vrot.lane.b32.xlu0 %v1847, 127
        %v1974 = vpop.permute.xlu0 %1973
        %v1975 = vmul.f32 %v1734, %v1944
        %v1976 = vmul.f32 %v1735, %v1946
        %v1977 = vmul.f32 %v1736, %v1948
        %v1978 = vmul.f32 %v1737, %v1950
        %v1979 = vmul.f32 %v1738, %v1952
        %v1980 = vmul.f32 %v1739, %v1954
        %v1981 = vmul.f32 %v1740, %v1956
        %v1982 = vmul.f32 %v1741, %v1958
        %v1983 = vmul.f32 %v1742, %v1960
        %v1984 = vmul.f32 %v1743, %v1962
        %v1985 = vmul.f32 %v1744, %v1964
        %v1986 = vmul.f32 %v1745, %v1966
        %v1987 = vmul.f32 %v1746, %v1968
        %v1988 = vmul.f32 %v1747, %v1970
        %v1989 = vmul.f32 %v1748, %v1972
        %v1990 = vmul.f32 %v1749, %v1974
        %v1991 = vadd.f32 %v1927, %v1975
        %v1992 = vadd.f32 %v1928, %v1976
        %v1993 = vadd.f32 %v1929, %v1977
        %v1994 = vadd.f32 %v1930, %v1978
        %v1995 = vadd.f32 %v1931, %v1979
        %v1996 = vadd.f32 %v1932, %v1980
        %v1997 = vadd.f32 %v1933, %v1981
        %v1998 = vadd.f32 %v1934, %v1982
        %v1999 = vadd.f32 %v1935, %v1983
        %v2000 = vadd.f32 %v1936, %v1984
        %v2001 = vadd.f32 %v1937, %v1985
        %v2002 = vadd.f32 %v1938, %v1986
        %v2003 = vadd.f32 %v1939, %v1987
        %v2004 = vadd.f32 %v1940, %v1988
        %v2005 = vadd.f32 %v1941, %v1989
        %v2006 = vadd.f32 %v1942, %v1990
        %v2007 = vmul.f32 %v1668, %v1991
        %v2008 = vmul.f32 %v1669, %v1992
        %v2009 = vmul.f32 %v1670, %v1993
        %v2010 = vmul.f32 %v1671, %v1994
        %v2011 = vmul.f32 %v1672, %v1995
        %v2012 = vmul.f32 %v1673, %v1996
        %v2013 = vmul.f32 %v1674, %v1997
        %v2014 = vmul.f32 %v1675, %v1998
        %v2015 = vmul.f32 %v1676, %v1999
        %v2016 = vmul.f32 %v1677, %v2000
        %v2017 = vmul.f32 %v1678, %v2001
        %v2018 = vmul.f32 %v1679, %v2002
        %v2019 = vmul.f32 %v1680, %v2003
        %v2020 = vmul.f32 %v1681, %v2004
        %v2021 = vmul.f32 %v1682, %v2005
        %v2022 = vmul.f32 %v1683, %v2006
        %v2023 = vadd.f32 %v2007, 0.0
        %v2024 = vadd.f32 %v2008, 0.0
        %v2025 = vadd.f32 %v2009, 0.0
        %v2026 = vadd.f32 %v2010, 0.0
        %v2027 = vadd.f32 %v2011, 0.0
        %v2028 = vadd.f32 %v2012, 0.0
        %v2029 = vadd.f32 %v2013, 0.0
        %v2030 = vadd.f32 %v2014, 0.0
        %v2031 = vadd.f32 %v2015, 0.0
        %v2032 = vadd.f32 %v2016, 0.0
        %v2033 = vadd.f32 %v2017, 0.0
        %v2034 = vadd.f32 %v2018, 0.0
        %v2035 = vadd.f32 %v2019, 0.0
        %v2036 = vadd.f32 %v2020, 0.0
        %v2037 = vadd.f32 %v2021, 0.0
        %v2038 = vadd.f32 %v2022, 0.0
        %v2039 = vmul.f32 %v874, %v1814
        %v2040 = vmul.f32 %v877, %v1815
        %v2041 = vmul.f32 %v880, %v1816
        %v2042 = vmul.f32 %v883, %v1817
        %v2043 = vmul.f32 %v886, %v1818
        %v2044 = vmul.f32 %v889, %v1819
        %v2045 = vmul.f32 %v892, %v1820
        %v2046 = vmul.f32 %v895, %v1821
        %v2047 = vmul.f32 %v898, %v1822
        %v2048 = vmul.f32 %v901, %v1823
        %v2049 = vmul.f32 %v904, %v1824
        %v2050 = vmul.f32 %v907, %v1825
        %v2051 = vmul.f32 %v910, %v1826
        %v2052 = vmul.f32 %v913, %v1827
        %v2053 = vmul.f32 %v916, %v1828
        %v2054 = vmul.f32 %v919, %v1829
        %2055 = vrot.lane.b32.xlu0 %v1814, 1
        %v2056 = vpop.permute.xlu0 %2055
        %2057 = vrot.lane.b32.xlu0 %v1815, 1
        %v2058 = vpop.permute.xlu0 %2057
        %2059 = vrot.lane.b32.xlu0 %v1816, 1
        %v2060 = vpop.permute.xlu0 %2059
        %2061 = vrot.lane.b32.xlu0 %v1817, 1
        %v2062 = vpop.permute.xlu0 %2061
        %2063 = vrot.lane.b32.xlu0 %v1818, 1
        %v2064 = vpop.permute.xlu0 %2063
        %2065 = vrot.lane.b32.xlu0 %v1819, 1
        %v2066 = vpop.permute.xlu0 %2065
        %2067 = vrot.lane.b32.xlu0 %v1820, 1
        %v2068 = vpop.permute.xlu0 %2067
        %2069 = vrot.lane.b32.xlu0 %v1821, 1
        %v2070 = vpop.permute.xlu0 %2069
        %2071 = vrot.lane.b32.xlu0 %v1822, 1
        %v2072 = vpop.permute.xlu0 %2071
        %2073 = vrot.lane.b32.xlu0 %v1823, 1
        %v2074 = vpop.permute.xlu0 %2073
        %2075 = vrot.lane.b32.xlu0 %v1824, 1
        %v2076 = vpop.permute.xlu0 %2075
        %2077 = vrot.lane.b32.xlu0 %v1825, 1
        %v2078 = vpop.permute.xlu0 %2077
        %2079 = vrot.lane.b32.xlu0 %v1826, 1
        %v2080 = vpop.permute.xlu0 %2079
        %2081 = vrot.lane.b32.xlu0 %v1827, 1
        %v2082 = vpop.permute.xlu0 %2081
        %2083 = vrot.lane.b32.xlu0 %v1828, 1
        %v2084 = vpop.permute.xlu0 %2083
        %2085 = vrot.lane.b32.xlu0 %v1829, 1
        %v2086 = vpop.permute.xlu0 %2085
        %v2087 = vmul.f32 %v1717, %v2056
        %v2088 = vmul.f32 %v1718, %v2058
        %v2089 = vmul.f32 %v1719, %v2060
        %v2090 = vmul.f32 %v1720, %v2062
        %v2091 = vmul.f32 %v1721, %v2064
        %v2092 = vmul.f32 %v1722, %v2066
        %v2093 = vmul.f32 %v1723, %v2068
        %v2094 = vmul.f32 %v1724, %v2070
        %v2095 = vmul.f32 %v1725, %v2072
        %v2096 = vmul.f32 %v1726, %v2074
        %v2097 = vmul.f32 %v1727, %v2076
        %v2098 = vmul.f32 %v1728, %v2078
        %v2099 = vmul.f32 %v1729, %v2080
        %v2100 = vmul.f32 %v1730, %v2082
        %v2101 = vmul.f32 %v1731, %v2084
        %v2102 = vmul.f32 %v1732, %v2086
        %v2103 = vadd.f32 %v2039, %v2087
        %v2104 = vadd.f32 %v2040, %v2088
        %v2105 = vadd.f32 %v2041, %v2089
        %v2106 = vadd.f32 %v2042, %v2090
        %v2107 = vadd.f32 %v2043, %v2091
        %v2108 = vadd.f32 %v2044, %v2092
        %v2109 = vadd.f32 %v2045, %v2093
        %v2110 = vadd.f32 %v2046, %v2094
        %v2111 = vadd.f32 %v2047, %v2095
        %v2112 = vadd.f32 %v2048, %v2096
        %v2113 = vadd.f32 %v2049, %v2097
        %v2114 = vadd.f32 %v2050, %v2098
        %v2115 = vadd.f32 %v2051, %v2099
        %v2116 = vadd.f32 %v2052, %v2100
        %v2117 = vadd.f32 %v2053, %v2101
        %v2118 = vadd.f32 %v2054, %v2102
        %2119 = vrot.lane.b32.xlu0 %v1814, 127
        %v2120 = vpop.permute.xlu0 %2119
        %2121 = vrot.lane.b32.xlu0 %v1815, 127
        %v2122 = vpop.permute.xlu0 %2121
        %2123 = vrot.lane.b32.xlu0 %v1816, 127
        %v2124 = vpop.permute.xlu0 %2123
        %2125 = vrot.lane.b32.xlu0 %v1817, 127
        %v2126 = vpop.permute.xlu0 %2125
        %2127 = vrot.lane.b32.xlu0 %v1818, 127
        %v2128 = vpop.permute.xlu0 %2127
        %2129 = vrot.lane.b32.xlu0 %v1819, 127
        %v2130 = vpop.permute.xlu0 %2129
        %2131 = vrot.lane.b32.xlu0 %v1820, 127
        %v2132 = vpop.permute.xlu0 %2131
        %2133 = vrot.lane.b32.xlu0 %v1821, 127
        %v2134 = vpop.permute.xlu0 %2133
        %2135 = vrot.lane.b32.xlu0 %v1822, 127
        %v2136 = vpop.permute.xlu0 %2135
        %2137 = vrot.lane.b32.xlu0 %v1823, 127
        %v2138 = vpop.permute.xlu0 %2137
        %2139 = vrot.lane.b32.xlu0 %v1824, 127
        %v2140 = vpop.permute.xlu0 %2139
        %2141 = vrot.lane.b32.xlu0 %v1825, 127
        %v2142 = vpop.permute.xlu0 %2141
        %2143 = vrot.lane.b32.xlu0 %v1826, 127
        %v2144 = vpop.permute.xlu0 %2143
        %2145 = vrot.lane.b32.xlu0 %v1827, 127
        %v2146 = vpop.permute.xlu0 %2145
        %2147 = vrot.lane.b32.xlu0 %v1828, 127
        %v2148 = vpop.permute.xlu0 %2147
        %2149 = vrot.lane.b32.xlu0 %v1829, 127
        %v2150 = vpop.permute.xlu0 %2149
        %v2151 = vmul.f32 %v1734, %v2120
        %v2152 = vmul.f32 %v1735, %v2122
        %v2153 = vmul.f32 %v1736, %v2124
        %v2154 = vmul.f32 %v1737, %v2126
        %v2155 = vmul.f32 %v1738, %v2128
        %v2156 = vmul.f32 %v1739, %v2130
        %v2157 = vmul.f32 %v1740, %v2132
        %v2158 = vmul.f32 %v1741, %v2134
        %v2159 = vmul.f32 %v1742, %v2136
        %v2160 = vmul.f32 %v1743, %v2138
        %v2161 = vmul.f32 %v1744, %v2140
        %v2162 = vmul.f32 %v1745, %v2142
        %v2163 = vmul.f32 %v1746, %v2144
        %v2164 = vmul.f32 %v1747, %v2146
        %v2165 = vmul.f32 %v1748, %v2148
        %v2166 = vmul.f32 %v1749, %v2150
        %v2167 = vadd.f32 %v2103, %v2151
        %v2168 = vadd.f32 %v2104, %v2152
        %v2169 = vadd.f32 %v2105, %v2153
        %v2170 = vadd.f32 %v2106, %v2154
        %v2171 = vadd.f32 %v2107, %v2155
        %v2172 = vadd.f32 %v2108, %v2156
        %v2173 = vadd.f32 %v2109, %v2157
        %v2174 = vadd.f32 %v2110, %v2158
        %v2175 = vadd.f32 %v2111, %v2159
        %v2176 = vadd.f32 %v2112, %v2160
        %v2177 = vadd.f32 %v2113, %v2161
        %v2178 = vadd.f32 %v2114, %v2162
        %v2179 = vadd.f32 %v2115, %v2163
        %v2180 = vadd.f32 %v2116, %v2164
        %v2181 = vadd.f32 %v2117, %v2165
        %v2182 = vadd.f32 %v2118, %v2166
        %v2183 = vmul.f32 %v1408, %v2167
        %v2184 = vmul.f32 %v1411, %v2168
        %v2185 = vmul.f32 %v1414, %v2169
        %v2186 = vmul.f32 %v1417, %v2170
        %v2187 = vmul.f32 %v1420, %v2171
        %v2188 = vmul.f32 %v1423, %v2172
        %v2189 = vmul.f32 %v1426, %v2173
        %v2190 = vmul.f32 %v1429, %v2174
        %v2191 = vmul.f32 %v1432, %v2175
        %v2192 = vmul.f32 %v1435, %v2176
        %v2193 = vmul.f32 %v1438, %v2177
        %v2194 = vmul.f32 %v1441, %v2178
        %v2195 = vmul.f32 %v1444, %v2179
        %v2196 = vmul.f32 %v1447, %v2180
        %v2197 = vmul.f32 %v1450, %v2181
        %v2198 = vmul.f32 %v1453, %v2182
        %v2199 = vadd.f32 %v2023, %v2183
        %v2200 = vadd.f32 %v2024, %v2184
        %v2201 = vadd.f32 %v2025, %v2185
        %v2202 = vadd.f32 %v2026, %v2186
        %v2203 = vadd.f32 %v2027, %v2187
        %v2204 = vadd.f32 %v2028, %v2188
        %v2205 = vadd.f32 %v2029, %v2189
        %v2206 = vadd.f32 %v2030, %v2190
        %v2207 = vadd.f32 %v2031, %v2191
        %v2208 = vadd.f32 %v2032, %v2192
        %v2209 = vadd.f32 %v2033, %v2193
        %v2210 = vadd.f32 %v2034, %v2194
        %v2211 = vadd.f32 %v2035, %v2195
        %v2212 = vadd.f32 %v2036, %v2196
        %v2213 = vadd.f32 %v2037, %v2197
        %v2214 = vadd.f32 %v2038, %v2198
        %v2215 = vrot.slane %v1814, 1
        %v2216 = vrot.slane %v1815, 1
        %v2217 = vrot.slane %v1816, 1
        %v2218 = vrot.slane %v1817, 1
        %v2219 = vrot.slane %v1818, 1
        %v2220 = vrot.slane %v1819, 1
        %v2221 = vrot.slane %v1820, 1
        %v2222 = vrot.slane %v1821, 1
        %v2223 = vrot.slane %v1822, 1
        %v2224 = vrot.slane %v1823, 1
        %v2225 = vrot.slane %v1824, 1
        %v2226 = vrot.slane %v1825, 1
        %v2227 = vrot.slane %v1826, 1
        %v2228 = vrot.slane %v1827, 1
        %v2229 = vrot.slane %v1828, 1
        %v2230 = vrot.slane %v1829, 1
        %vm2231 = vcmp.lt.s32.totalorder %v1634, 7
        %v2232 = vsel %vm2231, %v2229, %v2230
        %v2233 = vsel %vm2231, %v2228, %v2229
        %v2234 = vsel %vm2231, %v2227, %v2228
        %v2235 = vsel %vm2231, %v2226, %v2227
        %v2236 = vsel %vm2231, %v2225, %v2226
        %v2237 = vsel %vm2231, %v2224, %v2225
        %v2238 = vsel %vm2231, %v2223, %v2224
        %v2239 = vsel %vm2231, %v2222, %v2223
        %v2240 = vsel %vm2231, %v2221, %v2222
        %v2241 = vsel %vm2231, %v2220, %v2221
        %v2242 = vsel %vm2231, %v2219, %v2220
        %v2243 = vsel %vm2231, %v2218, %v2219
        %v2244 = vsel %vm2231, %v2217, %v2218
        %v2245 = vsel %vm2231, %v2216, %v2217
        %v2246 = vsel %vm2231, %v2215, %v2216
        %v2247 = vsel %vm2231, %v2230, %v2215
        %v2248 = vmul.f32 %v874, %v2246
        %v2249 = vmul.f32 %v877, %v2245
        %v2250 = vmul.f32 %v880, %v2244
        %v2251 = vmul.f32 %v883, %v2243
        %v2252 = vmul.f32 %v886, %v2242
        %v2253 = vmul.f32 %v889, %v2241
        %v2254 = vmul.f32 %v892, %v2240
        %v2255 = vmul.f32 %v895, %v2239
        %v2256 = vmul.f32 %v898, %v2238
        %v2257 = vmul.f32 %v901, %v2237
        %v2258 = vmul.f32 %v904, %v2236
        %v2259 = vmul.f32 %v907, %v2235
        %v2260 = vmul.f32 %v910, %v2234
        %v2261 = vmul.f32 %v913, %v2233
        %v2262 = vmul.f32 %v916, %v2232
        %v2263 = vmul.f32 %v919, %v2247
        %2264 = vrot.lane.b32.xlu0 %v2246, 1
        %v2265 = vpop.permute.xlu0 %2264
        %2266 = vrot.lane.b32.xlu0 %v2245, 1
        %v2267 = vpop.permute.xlu0 %2266
        %2268 = vrot.lane.b32.xlu0 %v2244, 1
        %v2269 = vpop.permute.xlu0 %2268
        %2270 = vrot.lane.b32.xlu0 %v2243, 1
        %v2271 = vpop.permute.xlu0 %2270
        %2272 = vrot.lane.b32.xlu0 %v2242, 1
        %v2273 = vpop.permute.xlu0 %2272
        %2274 = vrot.lane.b32.xlu0 %v2241, 1
        %v2275 = vpop.permute.xlu0 %2274
        %2276 = vrot.lane.b32.xlu0 %v2240, 1
        %v2277 = vpop.permute.xlu0 %2276
        %2278 = vrot.lane.b32.xlu0 %v2239, 1
        %v2279 = vpop.permute.xlu0 %2278
        %2280 = vrot.lane.b32.xlu0 %v2238, 1
        %v2281 = vpop.permute.xlu0 %2280
        %2282 = vrot.lane.b32.xlu0 %v2237, 1
        %v2283 = vpop.permute.xlu0 %2282
        %2284 = vrot.lane.b32.xlu0 %v2236, 1
        %v2285 = vpop.permute.xlu0 %2284
        %2286 = vrot.lane.b32.xlu0 %v2235, 1
        %v2287 = vpop.permute.xlu0 %2286
        %2288 = vrot.lane.b32.xlu0 %v2234, 1
        %v2289 = vpop.permute.xlu0 %2288
        %2290 = vrot.lane.b32.xlu0 %v2233, 1
        %v2291 = vpop.permute.xlu0 %2290
        %2292 = vrot.lane.b32.xlu0 %v2232, 1
        %v2293 = vpop.permute.xlu0 %2292
        %2294 = vrot.lane.b32.xlu0 %v2247, 1
        %v2295 = vpop.permute.xlu0 %2294
        %v2296 = vmul.f32 %v1717, %v2265
        %v2297 = vmul.f32 %v1718, %v2267
        %v2298 = vmul.f32 %v1719, %v2269
        %v2299 = vmul.f32 %v1720, %v2271
        %v2300 = vmul.f32 %v1721, %v2273
        %v2301 = vmul.f32 %v1722, %v2275
        %v2302 = vmul.f32 %v1723, %v2277
        %v2303 = vmul.f32 %v1724, %v2279
        %v2304 = vmul.f32 %v1725, %v2281
        %v2305 = vmul.f32 %v1726, %v2283
        %v2306 = vmul.f32 %v1727, %v2285
        %v2307 = vmul.f32 %v1728, %v2287
        %v2308 = vmul.f32 %v1729, %v2289
        %v2309 = vmul.f32 %v1730, %v2291
        %v2310 = vmul.f32 %v1731, %v2293
        %v2311 = vmul.f32 %v1732, %v2295
        %v2312 = vadd.f32 %v2248, %v2296
        %v2313 = vadd.f32 %v2249, %v2297
        %v2314 = vadd.f32 %v2250, %v2298
        %v2315 = vadd.f32 %v2251, %v2299
        %v2316 = vadd.f32 %v2252, %v2300
        %v2317 = vadd.f32 %v2253, %v2301
        %v2318 = vadd.f32 %v2254, %v2302
        %v2319 = vadd.f32 %v2255, %v2303
        %v2320 = vadd.f32 %v2256, %v2304
        %v2321 = vadd.f32 %v2257, %v2305
        %v2322 = vadd.f32 %v2258, %v2306
        %v2323 = vadd.f32 %v2259, %v2307
        %v2324 = vadd.f32 %v2260, %v2308
        %v2325 = vadd.f32 %v2261, %v2309
        %v2326 = vadd.f32 %v2262, %v2310
        %v2327 = vadd.f32 %v2263, %v2311
        %2328 = vrot.lane.b32.xlu0 %v2246, 127
        %v2329 = vpop.permute.xlu0 %2328
        %2330 = vrot.lane.b32.xlu0 %v2245, 127
        %v2331 = vpop.permute.xlu0 %2330
        %2332 = vrot.lane.b32.xlu0 %v2244, 127
        %v2333 = vpop.permute.xlu0 %2332
        %2334 = vrot.lane.b32.xlu0 %v2243, 127
        %v2335 = vpop.permute.xlu0 %2334
        %2336 = vrot.lane.b32.xlu0 %v2242, 127
        %v2337 = vpop.permute.xlu0 %2336
        %2338 = vrot.lane.b32.xlu0 %v2241, 127
        %v2339 = vpop.permute.xlu0 %2338
        %2340 = vrot.lane.b32.xlu0 %v2240, 127
        %v2341 = vpop.permute.xlu0 %2340
        %2342 = vrot.lane.b32.xlu0 %v2239, 127
        %v2343 = vpop.permute.xlu0 %2342
        %2344 = vrot.lane.b32.xlu0 %v2238, 127
        %v2345 = vpop.permute.xlu0 %2344
        %2346 = vrot.lane.b32.xlu0 %v2237, 127
        %v2347 = vpop.permute.xlu0 %2346
        %2348 = vrot.lane.b32.xlu0 %v2236, 127
        %v2349 = vpop.permute.xlu0 %2348
        %2350 = vrot.lane.b32.xlu0 %v2235, 127
        %v2351 = vpop.permute.xlu0 %2350
        %2352 = vrot.lane.b32.xlu0 %v2234, 127
        %v2353 = vpop.permute.xlu0 %2352
        %2354 = vrot.lane.b32.xlu0 %v2233, 127
        %v2355 = vpop.permute.xlu0 %2354
        %2356 = vrot.lane.b32.xlu0 %v2232, 127
        %v2357 = vpop.permute.xlu0 %2356
        %2358 = vrot.lane.b32.xlu0 %v2247, 127
        %v2359 = vpop.permute.xlu0 %2358
        %v2360 = vmul.f32 %v1734, %v2329
        %v2361 = vmul.f32 %v1735, %v2331
        %v2362 = vmul.f32 %v1736, %v2333
        %v2363 = vmul.f32 %v1737, %v2335
        %v2364 = vmul.f32 %v1738, %v2337
        %v2365 = vmul.f32 %v1739, %v2339
        %v2366 = vmul.f32 %v1740, %v2341
        %v2367 = vmul.f32 %v1741, %v2343
        %v2368 = vmul.f32 %v1742, %v2345
        %v2369 = vmul.f32 %v1743, %v2347
        %v2370 = vmul.f32 %v1744, %v2349
        %v2371 = vmul.f32 %v1745, %v2351
        %v2372 = vmul.f32 %v1746, %v2353
        %v2373 = vmul.f32 %v1747, %v2355
        %v2374 = vmul.f32 %v1748, %v2357
        %v2375 = vmul.f32 %v1749, %v2359
        %v2376 = vadd.f32 %v2312, %v2360
        %v2377 = vadd.f32 %v2313, %v2361
        %v2378 = vadd.f32 %v2314, %v2362
        %v2379 = vadd.f32 %v2315, %v2363
        %v2380 = vadd.f32 %v2316, %v2364
        %v2381 = vadd.f32 %v2317, %v2365
        %v2382 = vadd.f32 %v2318, %v2366
        %v2383 = vadd.f32 %v2319, %v2367
        %v2384 = vadd.f32 %v2320, %v2368
        %v2385 = vadd.f32 %v2321, %v2369
        %v2386 = vadd.f32 %v2322, %v2370
        %v2387 = vadd.f32 %v2323, %v2371
        %v2388 = vadd.f32 %v2324, %v2372
        %v2389 = vadd.f32 %v2325, %v2373
        %v2390 = vadd.f32 %v2326, %v2374
        %v2391 = vadd.f32 %v2327, %v2375
        %v2392 = vmul.f32 %v1700, %v2376
        %v2393 = vmul.f32 %v1701, %v2377
        %v2394 = vmul.f32 %v1702, %v2378
        %v2395 = vmul.f32 %v1703, %v2379
        %v2396 = vmul.f32 %v1704, %v2380
        %v2397 = vmul.f32 %v1705, %v2381
        %v2398 = vmul.f32 %v1706, %v2382
        %v2399 = vmul.f32 %v1707, %v2383
        %v2400 = vmul.f32 %v1708, %v2384
        %v2401 = vmul.f32 %v1709, %v2385
        %v2402 = vmul.f32 %v1710, %v2386
        %v2403 = vmul.f32 %v1711, %v2387
        %v2404 = vmul.f32 %v1712, %v2388
        %v2405 = vmul.f32 %v1713, %v2389
        %v2406 = vmul.f32 %v1714, %v2390
        %v2407 = vmul.f32 %v1715, %v2391
        %v2408 = vadd.f32 %v2199, %v2392
        %v2409 = vadd.f32 %v2200, %v2393
        %v2410 = vadd.f32 %v2201, %v2394
        %v2411 = vadd.f32 %v2202, %v2395
        %v2412 = vadd.f32 %v2203, %v2396
        %v2413 = vadd.f32 %v2204, %v2397
        %v2414 = vadd.f32 %v2205, %v2398
        %v2415 = vadd.f32 %v2206, %v2399
        %v2416 = vadd.f32 %v2207, %v2400
        %v2417 = vadd.f32 %v2208, %v2401
        %v2418 = vadd.f32 %v2209, %v2402
        %v2419 = vadd.f32 %v2210, %v2403
        %v2420 = vadd.f32 %v2211, %v2404
        %v2421 = vadd.f32 %v2212, %v2405
        %v2422 = vadd.f32 %v2213, %v2406
        %v2423 = vadd.f32 %v2214, %v2407
        %v2424 = vsub.f32 %v1814, %v2408
        %v2425 = vsub.f32 %v1815, %v2409
        %v2426 = vsub.f32 %v1816, %v2410
        %v2427 = vsub.f32 %v1817, %v2411
        %v2428 = vsub.f32 %v1818, %v2412
        %v2429 = vsub.f32 %v1819, %v2413
        %v2430 = vsub.f32 %v1820, %v2414
        %v2431 = vsub.f32 %v1821, %v2415
        %v2432 = vsub.f32 %v1822, %v2416
        %v2433 = vsub.f32 %v1823, %v2417
        %v2434 = vsub.f32 %v1824, %v2418
        %v2435 = vsub.f32 %v1825, %v2419
        %v2436 = vsub.f32 %v1826, %v2420
        %v2437 = vsub.f32 %v1827, %v2421
        %v2438 = vsub.f32 %v1828, %v2422
        %v2439 = vsub.f32 %v1829, %v2423
        %v2440 = vmul.f32 %v2424, 255.0
        %v2441 = vmul.f32 %v2425, 255.0
        %v2442 = vmul.f32 %v2426, 255.0
        %v2443 = vmul.f32 %v2427, 255.0
        %v2444 = vmul.f32 %v2428, 255.0
        %v2445 = vmul.f32 %v2429, 255.0
        %v2446 = vmul.f32 %v2430, 255.0
        %v2447 = vmul.f32 %v2431, 255.0
        %v2448 = vmul.f32 %v2432, 255.0
        %v2449 = vmul.f32 %v2433, 255.0
        %v2450 = vmul.f32 %v2434, 255.0
        %v2451 = vmul.f32 %v2435, 255.0
        %v2452 = vmul.f32 %v2436, 255.0
        %v2453 = vmul.f32 %v2437, 255.0
        %v2454 = vmul.f32 %v2438, 255.0
        %v2455 = vmul.f32 %v2439, 255.0
        %2456 = vmatpush.xpose.msra.mxu0 %v1781
        %2457 = vmatpush.xpose.msra.mxu0 %v1780
        %2458 = vmatpush.xpose.msra.mxu0 %v1779
        %2459 = vmatpush.xpose.msra.mxu0 %v1778
        %2460 = vmatpush.xpose.msra.mxu0 %v1777
        %2461 = vmatpush.xpose.msra.mxu0 %v1776
        %2462 = vmatpush.xpose.msra.mxu0 %v1775
        %2463 = vmatpush.xpose.msra.mxu0 %v1774
        %2464 = vmatpush.xpose.msra.mxu0 %v1773
        %2465 = vmatpush.xpose.msra.mxu0 %v1772
        %2466 = vmatpush.xpose.msra.mxu0 %v1771
        %2467 = vmatpush.xpose.msra.mxu0 %v1770
        %2468 = vmatpush.xpose.msra.mxu0 %v1769
        %2469 = vmatpush.xpose.msra.mxu0 %v1768
        %2470 = vmatpush.xpose.msra.mxu0 %v1767
        %2471 = vmatpush.xpose.msra.mxu0 %v1766
        %2472 = vmatmul.f32.gmra.mxu0 %v2440
        %v2473 = vpop.f32.mrf.mxu0
        %v2474 = vadd.f32 0.0, %v2473
        %2475 = vmatmul.f32.gmra.mxu0 %v2441
        %v2476 = vpop.f32.mrf.mxu0
        %v2477 = vadd.f32 0.0, %v2476
        %2478 = vmatmul.f32.gmra.mxu0 %v2442
        %v2479 = vpop.f32.mrf.mxu0
        %v2480 = vadd.f32 0.0, %v2479
        %2481 = vmatmul.f32.gmra.mxu0 %v2443
        %v2482 = vpop.f32.mrf.mxu0
        %v2483 = vadd.f32 0.0, %v2482
        %2484 = vmatmul.f32.gmra.mxu0 %v2444
        %v2485 = vpop.f32.mrf.mxu0
        %v2486 = vadd.f32 0.0, %v2485
        %2487 = vmatmul.f32.gmra.mxu0 %v2445
        %v2488 = vpop.f32.mrf.mxu0
        %v2489 = vadd.f32 0.0, %v2488
        %2490 = vmatmul.f32.gmra.mxu0 %v2446
        %v2491 = vpop.f32.mrf.mxu0
        %v2492 = vadd.f32 0.0, %v2491
        %2493 = vmatmul.f32.gmra.mxu0 %v2447
        %v2494 = vpop.f32.mrf.mxu0
        %v2495 = vadd.f32 0.0, %v2494
        %2496 = vmatmul.f32.gmra.mxu0 %v2448
        %v2497 = vpop.f32.mrf.mxu0
        %v2498 = vadd.f32 0.0, %v2497
        %2499 = vmatmul.f32.gmra.mxu0 %v2449
        %v2500 = vpop.f32.mrf.mxu0
        %v2501 = vadd.f32 0.0, %v2500
        %2502 = vmatmul.f32.gmra.mxu0 %v2450
        %v2503 = vpop.f32.mrf.mxu0
        %v2504 = vadd.f32 0.0, %v2503
        %2505 = vmatmul.f32.gmra.mxu0 %v2451
        %v2506 = vpop.f32.mrf.mxu0
        %v2507 = vadd.f32 0.0, %v2506
        %2508 = vmatmul.f32.gmra.mxu0 %v2452
        %v2509 = vpop.f32.mrf.mxu0
        %v2510 = vadd.f32 0.0, %v2509
        %2511 = vmatmul.f32.gmra.mxu0 %v2453
        %v2512 = vpop.f32.mrf.mxu0
        %v2513 = vadd.f32 0.0, %v2512
        %2514 = vmatmul.f32.gmra.mxu0 %v2454
        %v2515 = vpop.f32.mrf.mxu0
        %v2516 = vadd.f32 0.0, %v2515
        %2517 = vmatmul.f32.gmra.mxu0 %v2455
        %v2518 = vpop.f32.mrf.mxu0
        %v2519 = vadd.f32 0.0, %v2518
        %2520 = vdwg.mxu0
        %2521 = vmatpush.msra.mxu0 %v2519
        %2522 = vmatpush.msra.mxu0 %v2516
        %2523 = vmatpush.msra.mxu0 %v2513
        %2524 = vmatpush.msra.mxu0 %v2510
        %2525 = vmatpush.msra.mxu0 %v2507
        %2526 = vmatpush.msra.mxu0 %v2504
        %2527 = vmatpush.msra.mxu0 %v2501
        %2528 = vmatpush.msra.mxu0 %v2498
        %2529 = vmatpush.msra.mxu0 %v2495
        %2530 = vmatpush.msra.mxu0 %v2492
        %2531 = vmatpush.msra.mxu0 %v2489
        %2532 = vmatpush.msra.mxu0 %v2486
        %2533 = vmatpush.msra.mxu0 %v2483
        %2534 = vmatpush.msra.mxu0 %v2480
        %2535 = vmatpush.msra.mxu0 %v2477
        %2536 = vmatpush.msra.mxu0 %v2474
        %2537 = vmatmul.f32.gmra.mxu0 %v1750
        %v2538 = vpop.f32.mrf.mxu0
        %v2539 = vadd.f32 0.0, %v2538
        %2540 = vmatmul.f32.gmra.mxu0 %v1751
        %v2541 = vpop.f32.mrf.mxu0
        %v2542 = vadd.f32 0.0, %v2541
        %2543 = vmatmul.f32.gmra.mxu0 %v1752
        %v2544 = vpop.f32.mrf.mxu0
        %v2545 = vadd.f32 0.0, %v2544
        %2546 = vmatmul.f32.gmra.mxu0 %v1753
        %v2547 = vpop.f32.mrf.mxu0
        %v2548 = vadd.f32 0.0, %v2547
        %2549 = vmatmul.f32.gmra.mxu0 %v1754
        %v2550 = vpop.f32.mrf.mxu0
        %v2551 = vadd.f32 0.0, %v2550
        %2552 = vmatmul.f32.gmra.mxu0 %v1755
        %v2553 = vpop.f32.mrf.mxu0
        %v2554 = vadd.f32 0.0, %v2553
        %2555 = vmatmul.f32.gmra.mxu0 %v1756
        %v2556 = vpop.f32.mrf.mxu0
        %v2557 = vadd.f32 0.0, %v2556
        %2558 = vmatmul.f32.gmra.mxu0 %v1757
        %v2559 = vpop.f32.mrf.mxu0
        %v2560 = vadd.f32 0.0, %v2559
        %2561 = vmatmul.f32.gmra.mxu0 %v1758
        %v2562 = vpop.f32.mrf.mxu0
        %v2563 = vadd.f32 0.0, %v2562
        %2564 = vmatmul.f32.gmra.mxu0 %v1759
        %v2565 = vpop.f32.mrf.mxu0
        %v2566 = vadd.f32 0.0, %v2565
        %2567 = vmatmul.f32.gmra.mxu0 %v1760
        %v2568 = vpop.f32.mrf.mxu0
        %v2569 = vadd.f32 0.0, %v2568
        %2570 = vmatmul.f32.gmra.mxu0 %v1761
        %v2571 = vpop.f32.mrf.mxu0
        %v2572 = vadd.f32 0.0, %v2571
        %2573 = vmatmul.f32.gmra.mxu0 %v1762
        %v2574 = vpop.f32.mrf.mxu0
        %v2575 = vadd.f32 0.0, %v2574
        %2576 = vmatmul.f32.gmra.mxu0 %v1763
        %v2577 = vpop.f32.mrf.mxu0
        %v2578 = vadd.f32 0.0, %v2577
        %2579 = vmatmul.f32.gmra.mxu0 %v1764
        %v2580 = vpop.f32.mrf.mxu0
        %v2581 = vadd.f32 0.0, %v2580
        %2582 = vmatmul.f32.gmra.mxu0 %v1765
        %v2583 = vpop.f32.mrf.mxu0
        %v2584 = vadd.f32 0.0, %v2583
        %2585 = vdwg.mxu0
        %v2586 = vmul.f32 %v2539, %v1798
        %v2587 = vmul.f32 %v2542, %v1799
        %v2588 = vmul.f32 %v2545, %v1800
        %v2589 = vmul.f32 %v2548, %v1801
        %v2590 = vmul.f32 %v2551, %v1802
        %v2591 = vmul.f32 %v2554, %v1803
        %v2592 = vmul.f32 %v2557, %v1804
        %v2593 = vmul.f32 %v2560, %v1805
        %v2594 = vmul.f32 %v2563, %v1806
        %v2595 = vmul.f32 %v2566, %v1807
        %v2596 = vmul.f32 %v2569, %v1808
        %v2597 = vmul.f32 %v2572, %v1809
        %v2598 = vmul.f32 %v2575, %v1810
        %v2599 = vmul.f32 %v2578, %v1811
        %v2600 = vmul.f32 %v2581, %v1812
        %v2601 = vmul.f32 %v2584, %v1813
        %v2602 = vround.ne.pseudo %v2586
        %v2603 = vround.ne.pseudo %v2587
        %v2604 = vround.ne.pseudo %v2588
        %v2605 = vround.ne.pseudo %v2589
        %v2606 = vround.ne.pseudo %v2590
        %v2607 = vround.ne.pseudo %v2591
        %v2608 = vround.ne.pseudo %v2592
        %v2609 = vround.ne.pseudo %v2593
        %v2610 = vround.ne.pseudo %v2594
        %v2611 = vround.ne.pseudo %v2595
        %v2612 = vround.ne.pseudo %v2596
        %v2613 = vround.ne.pseudo %v2597
        %v2614 = vround.ne.pseudo %v2598
        %v2615 = vround.ne.pseudo %v2599
        %v2616 = vround.ne.pseudo %v2600
        %v2617 = vround.ne.pseudo %v2601
        %v2618 = vmul.f32 %v2602, %v1782
        %v2619 = vmul.f32 %v2603, %v1783
        %v2620 = vmul.f32 %v2604, %v1784
        %v2621 = vmul.f32 %v2605, %v1785
        %v2622 = vmul.f32 %v2606, %v1786
        %v2623 = vmul.f32 %v2607, %v1787
        %v2624 = vmul.f32 %v2608, %v1788
        %v2625 = vmul.f32 %v2609, %v1789
        %v2626 = vmul.f32 %v2610, %v1790
        %v2627 = vmul.f32 %v2611, %v1791
        %v2628 = vmul.f32 %v2612, %v1792
        %v2629 = vmul.f32 %v2613, %v1793
        %v2630 = vmul.f32 %v2614, %v1794
        %v2631 = vmul.f32 %v2615, %v1795
        %v2632 = vmul.f32 %v2616, %v1796
        %v2633 = vmul.f32 %v2617, %v1797
        %2634 = vxpose.xlu0.b32.start [1/16] %v1750, 128
        %2635 = vxpose.xlu0.b32.cont [2/16] %v1751, 128
        %2636 = vxpose.xlu0.b32.cont [3/16] %v1752, 128
        %2637 = vxpose.xlu0.b32.cont [4/16] %v1753, 128
        %2638 = vxpose.xlu0.b32.cont [5/16] %v1754, 128
        %2639 = vxpose.xlu0.b32.cont [6/16] %v1755, 128
        %2640 = vxpose.xlu0.b32.cont [7/16] %v1756, 128
        %2641 = vxpose.xlu0.b32.cont [8/16] %v1757, 128
        %2642 = vxpose.xlu0.b32.cont [9/16] %v1758, 128
        %2643 = vxpose.xlu0.b32.cont [10/16] %v1759, 128
        %2644 = vxpose.xlu0.b32.cont [11/16] %v1760, 128
        %2645 = vxpose.xlu0.b32.cont [12/16] %v1761, 128
        %2646 = vxpose.xlu0.b32.cont [13/16] %v1762, 128
        %2647 = vxpose.xlu0.b32.cont [14/16] %v1763, 128
        %2648 = vxpose.xlu0.b32.cont [15/16] %v1764, 128
        %2649 = vxpose.xlu0.b32.end [16/16] %v1765, 128
        %v2650 = vpop.trf.xlu0
        %v2651 = vpop.trf.xlu0
        %v2652 = vpop.trf.xlu0
        %v2653 = vpop.trf.xlu0
        %v2654 = vpop.trf.xlu0
        %v2655 = vpop.trf.xlu0
        %v2656 = vpop.trf.xlu0
        %v2657 = vpop.trf.xlu0
        %v2658 = vpop.trf.xlu0
        %v2659 = vpop.trf.xlu0
        %v2660 = vpop.trf.xlu0
        %v2661 = vpop.trf.xlu0
        %v2662 = vpop.trf.xlu0
        %v2663 = vpop.trf.xlu0
        %v2664 = vpop.trf.xlu0
        %v2665 = vpop.trf.xlu0
        %2666 = vmatpush.msra.mxu0 %v2633
        %2667 = vmatpush.msra.mxu0 %v2632
        %2668 = vmatpush.msra.mxu0 %v2631
        %2669 = vmatpush.msra.mxu0 %v2630
        %2670 = vmatpush.msra.mxu0 %v2629
        %2671 = vmatpush.msra.mxu0 %v2628
        %2672 = vmatpush.msra.mxu0 %v2627
        %2673 = vmatpush.msra.mxu0 %v2626
        %2674 = vmatpush.msra.mxu0 %v2625
        %2675 = vmatpush.msra.mxu0 %v2624
        %2676 = vmatpush.msra.mxu0 %v2623
        %2677 = vmatpush.msra.mxu0 %v2622
        %2678 = vmatpush.msra.mxu0 %v2621
        %2679 = vmatpush.msra.mxu0 %v2620
        %2680 = vmatpush.msra.mxu0 %v2619
        %2681 = vmatpush.msra.mxu0 %v2618
        %2682 = vmatmul.f32.gmra.mxu0 %v2650
        %v2683 = vpop.f32.mrf.mxu0
        %v2684 = vadd.f32 0.0, %v2683
        %2685 = vmatmul.f32.gmra.mxu0 %v2651
        %v2686 = vpop.f32.mrf.mxu0
        %v2687 = vadd.f32 0.0, %v2686
        %2688 = vmatmul.f32.gmra.mxu0 %v2652
        %v2689 = vpop.f32.mrf.mxu0
        %v2690 = vadd.f32 0.0, %v2689
        %2691 = vmatmul.f32.gmra.mxu0 %v2653
        %v2692 = vpop.f32.mrf.mxu0
        %v2693 = vadd.f32 0.0, %v2692
        %2694 = vmatmul.f32.gmra.mxu0 %v2654
        %v2695 = vpop.f32.mrf.mxu0
        %v2696 = vadd.f32 0.0, %v2695
        %2697 = vmatmul.f32.gmra.mxu0 %v2655
        %v2698 = vpop.f32.mrf.mxu0
        %v2699 = vadd.f32 0.0, %v2698
        %2700 = vmatmul.f32.gmra.mxu0 %v2656
        %v2701 = vpop.f32.mrf.mxu0
        %v2702 = vadd.f32 0.0, %v2701
        %2703 = vmatmul.f32.gmra.mxu0 %v2657
        %v2704 = vpop.f32.mrf.mxu0
        %v2705 = vadd.f32 0.0, %v2704
        %2706 = vmatmul.f32.gmra.mxu0 %v2658
        %v2707 = vpop.f32.mrf.mxu0
        %v2708 = vadd.f32 0.0, %v2707
        %2709 = vmatmul.f32.gmra.mxu0 %v2659
        %v2710 = vpop.f32.mrf.mxu0
        %v2711 = vadd.f32 0.0, %v2710
        %2712 = vmatmul.f32.gmra.mxu0 %v2660
        %v2713 = vpop.f32.mrf.mxu0
        %v2714 = vadd.f32 0.0, %v2713
        %2715 = vmatmul.f32.gmra.mxu0 %v2661
        %v2716 = vpop.f32.mrf.mxu0
        %v2717 = vadd.f32 0.0, %v2716
        %2718 = vmatmul.f32.gmra.mxu0 %v2662
        %v2719 = vpop.f32.mrf.mxu0
        %v2720 = vadd.f32 0.0, %v2719
        %2721 = vmatmul.f32.gmra.mxu0 %v2663
        %v2722 = vpop.f32.mrf.mxu0
        %v2723 = vadd.f32 0.0, %v2722
        %2724 = vmatmul.f32.gmra.mxu0 %v2664
        %v2725 = vpop.f32.mrf.mxu0
        %v2726 = vadd.f32 0.0, %v2725
        %2727 = vmatmul.f32.gmra.mxu0 %v2665
        %v2728 = vpop.f32.mrf.mxu0
        %v2729 = vadd.f32 0.0, %v2728
        %2730 = vdwg.mxu0
        %2731 = vmatpush.msra.mxu0 %v1781
        %2732 = vmatpush.msra.mxu0 %v1780
        %2733 = vmatpush.msra.mxu0 %v1779
        %2734 = vmatpush.msra.mxu0 %v1778
        %2735 = vmatpush.msra.mxu0 %v1777
        %2736 = vmatpush.msra.mxu0 %v1776
        %2737 = vmatpush.msra.mxu0 %v1775
        %2738 = vmatpush.msra.mxu0 %v1774
        %2739 = vmatpush.msra.mxu0 %v1773
        %2740 = vmatpush.msra.mxu0 %v1772
        %2741 = vmatpush.msra.mxu0 %v1771
        %2742 = vmatpush.msra.mxu0 %v1770
        %2743 = vmatpush.msra.mxu0 %v1769
        %2744 = vmatpush.msra.mxu0 %v1768
        %2745 = vmatpush.msra.mxu0 %v1767
        %2746 = vmatpush.msra.mxu0 %v1766
        %2747 = vmatmul.f32.gmra.mxu0 %v2684
        %v2748 = vpop.f32.mrf.mxu0
        %v2749 = vadd.f32 0.0, %v2748
        %2750 = vmatmul.f32.gmra.mxu0 %v2687
        %v2751 = vpop.f32.mrf.mxu0
        %v2752 = vadd.f32 0.0, %v2751
        %2753 = vmatmul.f32.gmra.mxu0 %v2690
        %v2754 = vpop.f32.mrf.mxu0
        %v2755 = vadd.f32 0.0, %v2754
        %2756 = vmatmul.f32.gmra.mxu0 %v2693
        %v2757 = vpop.f32.mrf.mxu0
        %v2758 = vadd.f32 0.0, %v2757
        %2759 = vmatmul.f32.gmra.mxu0 %v2696
        %v2760 = vpop.f32.mrf.mxu0
        %v2761 = vadd.f32 0.0, %v2760
        %2762 = vmatmul.f32.gmra.mxu0 %v2699
        %v2763 = vpop.f32.mrf.mxu0
        %v2764 = vadd.f32 0.0, %v2763
        %2765 = vmatmul.f32.gmra.mxu0 %v2702
        %v2766 = vpop.f32.mrf.mxu0
        %v2767 = vadd.f32 0.0, %v2766
        %2768 = vmatmul.f32.gmra.mxu0 %v2705
        %v2769 = vpop.f32.mrf.mxu0
        %v2770 = vadd.f32 0.0, %v2769
        %2771 = vmatmul.f32.gmra.mxu0 %v2708
        %v2772 = vpop.f32.mrf.mxu0
        %v2773 = vadd.f32 0.0, %v2772
        %2774 = vmatmul.f32.gmra.mxu0 %v2711
        %v2775 = vpop.f32.mrf.mxu0
        %v2776 = vadd.f32 0.0, %v2775
        %2777 = vmatmul.f32.gmra.mxu0 %v2714
        %v2778 = vpop.f32.mrf.mxu0
        %v2779 = vadd.f32 0.0, %v2778
        %2780 = vmatmul.f32.gmra.mxu0 %v2717
        %v2781 = vpop.f32.mrf.mxu0
        %v2782 = vadd.f32 0.0, %v2781
        %2783 = vmatmul.f32.gmra.mxu0 %v2720
        %v2784 = vpop.f32.mrf.mxu0
        %v2785 = vadd.f32 0.0, %v2784
        %2786 = vmatmul.f32.gmra.mxu0 %v2723
        %v2787 = vpop.f32.mrf.mxu0
        %v2788 = vadd.f32 0.0, %v2787
        %2789 = vmatmul.f32.gmra.mxu0 %v2726
        %v2790 = vpop.f32.mrf.mxu0
        %v2791 = vadd.f32 0.0, %v2790
        %2792 = vmatmul.f32.gmra.mxu0 %v2729
        %v2793 = vpop.f32.mrf.mxu0
        %v2794 = vadd.f32 0.0, %v2793
        %2795 = vdwg.mxu0
        %v2796 = vmul.f32 %v2749, 0.003921569
        %v2797 = vmul.f32 %v2752, 0.003921569
        %v2798 = vmul.f32 %v2755, 0.003921569
        %v2799 = vmul.f32 %v2758, 0.003921569
        %v2800 = vmul.f32 %v2761, 0.003921569
        %v2801 = vmul.f32 %v2764, 0.003921569
        %v2802 = vmul.f32 %v2767, 0.003921569
        %v2803 = vmul.f32 %v2770, 0.003921569
        %v2804 = vmul.f32 %v2773, 0.003921569
        %v2805 = vmul.f32 %v2776, 0.003921569
        %v2806 = vmul.f32 %v2779, 0.003921569
        %v2807 = vmul.f32 %v2782, 0.003921569
        %v2808 = vmul.f32 %v2785, 0.003921569
        %v2809 = vmul.f32 %v2788, 0.003921569
        %v2810 = vmul.f32 %v2791, 0.003921569
        %v2811 = vmul.f32 %v2794, 0.003921569
        %v2812 = vadd.f32 %v2408, %v2796
        %v2813 = vadd.f32 %v2409, %v2797
        %v2814 = vadd.f32 %v2410, %v2798
        %v2815 = vadd.f32 %v2411, %v2799
        %v2816 = vadd.f32 %v2412, %v2800
        %v2817 = vadd.f32 %v2413, %v2801
        %v2818 = vadd.f32 %v2414, %v2802
        %v2819 = vadd.f32 %v2415, %v2803
        %v2820 = vadd.f32 %v2416, %v2804
        %v2821 = vadd.f32 %v2417, %v2805
        %v2822 = vadd.f32 %v2418, %v2806
        %v2823 = vadd.f32 %v2419, %v2807
        %v2824 = vadd.f32 %v2420, %v2808
        %v2825 = vadd.f32 %v2421, %v2809
        %v2826 = vadd.f32 %v2422, %v2810
        %v2827 = vadd.f32 %v2423, %v2811
        %2828 = vst [vmem:[%s400] sm:$0xff] %v2812
        %2829 = vst [vmem:[%s400 + $0x8] sm:$0xff] %v2813
        %2830 = vst [vmem:[%s400 + $0x10] sm:$0xff] %v2814
        %2831 = vst [vmem:[%s400 + $0x18] sm:$0xff] %v2815
        %2832 = vst [vmem:[%s400 + $0x20] sm:$0xff] %v2816
        %2833 = vst [vmem:[%s400 + $0x28] sm:$0xff] %v2817
        %2834 = vst [vmem:[%s400 + $0x30] sm:$0xff] %v2818
        %2835 = vst [vmem:[%s400 + $0x38] sm:$0xff] %v2819
        %2836 = vst [vmem:[%s400 + $0x40] sm:$0xff] %v2820
        %2837 = vst [vmem:[%s400 + $0x48] sm:$0xff] %v2821
        %2838 = vst [vmem:[%s400 + $0x50] sm:$0xff] %v2822
        %2839 = vst [vmem:[%s400 + $0x58] sm:$0xff] %v2823
        %2840 = vst [vmem:[%s400 + $0x60] sm:$0xff] %v2824
        %2841 = vst [vmem:[%s400 + $0x68] sm:$0xff] %v2825
        %2842 = vst [vmem:[%s400 + $0x70] sm:$0xff] %v2826
        %2843 = vst [vmem:[%s400 + $0x78] sm:$0xff] %v2827
        %s2844 = scalar_lea.vmem %s342, 128 [#allocation2]
        %v2845 = vld [vmem:[%s2844] sm:$0xff]
        %v2846 = vld [vmem:[%s2844 + $0x8] sm:$0xff]
        %v2847 = vld [vmem:[%s2844 + $0x10] sm:$0xff]
        %v2848 = vld [vmem:[%s2844 + $0x18] sm:$0xff]
        %v2849 = vld [vmem:[%s2844 + $0x20] sm:$0xff]
        %v2850 = vld [vmem:[%s2844 + $0x28] sm:$0xff]
        %v2851 = vld [vmem:[%s2844 + $0x30] sm:$0xff]
        %v2852 = vld [vmem:[%s2844 + $0x38] sm:$0xff]
        %v2853 = vld [vmem:[%s2844 + $0x40] sm:$0xff]
        %v2854 = vld [vmem:[%s2844 + $0x48] sm:$0xff]
        %v2855 = vld [vmem:[%s2844 + $0x50] sm:$0xff]
        %v2856 = vld [vmem:[%s2844 + $0x58] sm:$0xff]
        %v2857 = vld [vmem:[%s2844 + $0x60] sm:$0xff]
        %v2858 = vld [vmem:[%s2844 + $0x68] sm:$0xff]
        %v2859 = vld [vmem:[%s2844 + $0x70] sm:$0xff]
        %v2860 = vld [vmem:[%s2844 + $0x78] sm:$0xff]
        %v2861 = vrot.slane %v2845, 7
        %v2862 = vrot.slane %v2846, 7
        %v2863 = vrot.slane %v2847, 7
        %v2864 = vrot.slane %v2848, 7
        %v2865 = vrot.slane %v2849, 7
        %v2866 = vrot.slane %v2850, 7
        %v2867 = vrot.slane %v2851, 7
        %v2868 = vrot.slane %v2852, 7
        %v2869 = vrot.slane %v2853, 7
        %v2870 = vrot.slane %v2854, 7
        %v2871 = vrot.slane %v2855, 7
        %v2872 = vrot.slane %v2856, 7
        %v2873 = vrot.slane %v2857, 7
        %v2874 = vrot.slane %v2858, 7
        %v2875 = vrot.slane %v2859, 7
        %v2876 = vrot.slane %v2860, 7
        %v2877 = vsel %vm1846, %v2875, %v2876
        %v2878 = vsel %vm1846, %v2874, %v2875
        %v2879 = vsel %vm1846, %v2873, %v2874
        %v2880 = vsel %vm1846, %v2872, %v2873
        %v2881 = vsel %vm1846, %v2871, %v2872
        %v2882 = vsel %vm1846, %v2870, %v2871
        %v2883 = vsel %vm1846, %v2869, %v2870
        %v2884 = vsel %vm1846, %v2868, %v2869
        %v2885 = vsel %vm1846, %v2867, %v2868
        %v2886 = vsel %vm1846, %v2866, %v2867
        %v2887 = vsel %vm1846, %v2865, %v2866
        %v2888 = vsel %vm1846, %v2864, %v2865
        %v2889 = vsel %vm1846, %v2863, %v2864
        %v2890 = vsel %vm1846, %v2862, %v2863
        %v2891 = vsel %vm1846, %v2861, %v2862
        %v2892 = vsel %vm1846, %v2876, %v2861
        %v2893 = vmul.f32 %v874, %v2892
        %v2894 = vmul.f32 %v877, %v2891
        %v2895 = vmul.f32 %v880, %v2890
        %v2896 = vmul.f32 %v883, %v2889
        %v2897 = vmul.f32 %v886, %v2888
        %v2898 = vmul.f32 %v889, %v2887
        %v2899 = vmul.f32 %v892, %v2886
        %v2900 = vmul.f32 %v895, %v2885
        %v2901 = vmul.f32 %v898, %v2884
        %v2902 = vmul.f32 %v901, %v2883
        %v2903 = vmul.f32 %v904, %v2882
        %v2904 = vmul.f32 %v907, %v2881
        %v2905 = vmul.f32 %v910, %v2880
        %v2906 = vmul.f32 %v913, %v2879
        %v2907 = vmul.f32 %v916, %v2878
        %v2908 = vmul.f32 %v919, %v2877
        %2909 = vrot.lane.b32.xlu0 %v2892, 1
        %v2910 = vpop.permute.xlu0 %2909
        %2911 = vrot.lane.b32.xlu0 %v2891, 1
        %v2912 = vpop.permute.xlu0 %2911
        %2913 = vrot.lane.b32.xlu0 %v2890, 1
        %v2914 = vpop.permute.xlu0 %2913
        %2915 = vrot.lane.b32.xlu0 %v2889, 1
        %v2916 = vpop.permute.xlu0 %2915
        %2917 = vrot.lane.b32.xlu0 %v2888, 1
        %v2918 = vpop.permute.xlu0 %2917
        %2919 = vrot.lane.b32.xlu0 %v2887, 1
        %v2920 = vpop.permute.xlu0 %2919
        %2921 = vrot.lane.b32.xlu0 %v2886, 1
        %v2922 = vpop.permute.xlu0 %2921
        %2923 = vrot.lane.b32.xlu0 %v2885, 1
        %v2924 = vpop.permute.xlu0 %2923
        %2925 = vrot.lane.b32.xlu0 %v2884, 1
        %v2926 = vpop.permute.xlu0 %2925
        %2927 = vrot.lane.b32.xlu0 %v2883, 1
        %v2928 = vpop.permute.xlu0 %2927
        %2929 = vrot.lane.b32.xlu0 %v2882, 1
        %v2930 = vpop.permute.xlu0 %2929
        %2931 = vrot.lane.b32.xlu0 %v2881, 1
        %v2932 = vpop.permute.xlu0 %2931
        %2933 = vrot.lane.b32.xlu0 %v2880, 1
        %v2934 = vpop.permute.xlu0 %2933
        %2935 = vrot.lane.b32.xlu0 %v2879, 1
        %v2936 = vpop.permute.xlu0 %2935
        %2937 = vrot.lane.b32.xlu0 %v2878, 1
        %v2938 = vpop.permute.xlu0 %2937
        %2939 = vrot.lane.b32.xlu0 %v2877, 1
        %v2940 = vpop.permute.xlu0 %2939
        %v2941 = vmul.f32 %v1717, %v2910
        %v2942 = vmul.f32 %v1718, %v2912
        %v2943 = vmul.f32 %v1719, %v2914
        %v2944 = vmul.f32 %v1720, %v2916
        %v2945 = vmul.f32 %v1721, %v2918
        %v2946 = vmul.f32 %v1722, %v2920
        %v2947 = vmul.f32 %v1723, %v2922
        %v2948 = vmul.f32 %v1724, %v2924
        %v2949 = vmul.f32 %v1725, %v2926
        %v2950 = vmul.f32 %v1726, %v2928
        %v2951 = vmul.f32 %v1727, %v2930
        %v2952 = vmul.f32 %v1728, %v2932
        %v2953 = vmul.f32 %v1729, %v2934
        %v2954 = vmul.f32 %v1730, %v2936
        %v2955 = vmul.f32 %v1731, %v2938
        %v2956 = vmul.f32 %v1732, %v2940
        %v2957 = vadd.f32 %v2893, %v2941
        %v2958 = vadd.f32 %v2894, %v2942
        %v2959 = vadd.f32 %v2895, %v2943
        %v2960 = vadd.f32 %v2896, %v2944
        %v2961 = vadd.f32 %v2897, %v2945
        %v2962 = vadd.f32 %v2898, %v2946
        %v2963 = vadd.f32 %v2899, %v2947
        %v2964 = vadd.f32 %v2900, %v2948
        %v2965 = vadd.f32 %v2901, %v2949
        %v2966 = vadd.f32 %v2902, %v2950
        %v2967 = vadd.f32 %v2903, %v2951
        %v2968 = vadd.f32 %v2904, %v2952
        %v2969 = vadd.f32 %v2905, %v2953
        %v2970 = vadd.f32 %v2906, %v2954
        %v2971 = vadd.f32 %v2907, %v2955
        %v2972 = vadd.f32 %v2908, %v2956
        %2973 = vrot.lane.b32.xlu0 %v2892, 127
        %v2974 = vpop.permute.xlu0 %2973
        %2975 = vrot.lane.b32.xlu0 %v2891, 127
        %v2976 = vpop.permute.xlu0 %2975
        %2977 = vrot.lane.b32.xlu0 %v2890, 127
        %v2978 = vpop.permute.xlu0 %2977
        %2979 = vrot.lane.b32.xlu0 %v2889, 127
        %v2980 = vpop.permute.xlu0 %2979
        %2981 = vrot.lane.b32.xlu0 %v2888, 127
        %v2982 = vpop.permute.xlu0 %2981
        %2983 = vrot.lane.b32.xlu0 %v2887, 127
        %v2984 = vpop.permute.xlu0 %2983
        %2985 = vrot.lane.b32.xlu0 %v2886, 127
        %v2986 = vpop.permute.xlu0 %2985
        %2987 = vrot.lane.b32.xlu0 %v2885, 127
        %v2988 = vpop.permute.xlu0 %2987
        %2989 = vrot.lane.b32.xlu0 %v2884, 127
        %v2990 = vpop.permute.xlu0 %2989
        %2991 = vrot.lane.b32.xlu0 %v2883, 127
        %v2992 = vpop.permute.xlu0 %2991
        %2993 = vrot.lane.b32.xlu0 %v2882, 127
        %v2994 = vpop.permute.xlu0 %2993
        %2995 = vrot.lane.b32.xlu0 %v2881, 127
        %v2996 = vpop.permute.xlu0 %2995
        %2997 = vrot.lane.b32.xlu0 %v2880, 127
        %v2998 = vpop.permute.xlu0 %2997
        %2999 = vrot.lane.b32.xlu0 %v2879, 127
        %v3000 = vpop.permute.xlu0 %2999
        %3001 = vrot.lane.b32.xlu0 %v2878, 127
        %v3002 = vpop.permute.xlu0 %3001
        %3003 = vrot.lane.b32.xlu0 %v2877, 127
        %v3004 = vpop.permute.xlu0 %3003
        %v3005 = vmul.f32 %v1734, %v2974
        %v3006 = vmul.f32 %v1735, %v2976
        %v3007 = vmul.f32 %v1736, %v2978
        %v3008 = vmul.f32 %v1737, %v2980
        %v3009 = vmul.f32 %v1738, %v2982
        %v3010 = vmul.f32 %v1739, %v2984
        %v3011 = vmul.f32 %v1740, %v2986
        %v3012 = vmul.f32 %v1741, %v2988
        %v3013 = vmul.f32 %v1742, %v2990
        %v3014 = vmul.f32 %v1743, %v2992
        %v3015 = vmul.f32 %v1744, %v2994
        %v3016 = vmul.f32 %v1745, %v2996
        %v3017 = vmul.f32 %v1746, %v2998
        %v3018 = vmul.f32 %v1747, %v3000
        %v3019 = vmul.f32 %v1748, %v3002
        %v3020 = vmul.f32 %v1749, %v3004
        %v3021 = vadd.f32 %v2957, %v3005
        %v3022 = vadd.f32 %v2958, %v3006
        %v3023 = vadd.f32 %v2959, %v3007
        %v3024 = vadd.f32 %v2960, %v3008
        %v3025 = vadd.f32 %v2961, %v3009
        %v3026 = vadd.f32 %v2962, %v3010
        %v3027 = vadd.f32 %v2963, %v3011
        %v3028 = vadd.f32 %v2964, %v3012
        %v3029 = vadd.f32 %v2965, %v3013
        %v3030 = vadd.f32 %v2966, %v3014
        %v3031 = vadd.f32 %v2967, %v3015
        %v3032 = vadd.f32 %v2968, %v3016
        %v3033 = vadd.f32 %v2969, %v3017
        %v3034 = vadd.f32 %v2970, %v3018
        %v3035 = vadd.f32 %v2971, %v3019
        %v3036 = vadd.f32 %v2972, %v3020
        %v3037 = vmul.f32 %v1668, %v3021
        %v3038 = vmul.f32 %v1669, %v3022
        %v3039 = vmul.f32 %v1670, %v3023
        %v3040 = vmul.f32 %v1671, %v3024
        %v3041 = vmul.f32 %v1672, %v3025
        %v3042 = vmul.f32 %v1673, %v3026
        %v3043 = vmul.f32 %v1674, %v3027
        %v3044 = vmul.f32 %v1675, %v3028
        %v3045 = vmul.f32 %v1676, %v3029
        %v3046 = vmul.f32 %v1677, %v3030
        %v3047 = vmul.f32 %v1678, %v3031
        %v3048 = vmul.f32 %v1679, %v3032
        %v3049 = vmul.f32 %v1680, %v3033
        %v3050 = vmul.f32 %v1681, %v3034
        %v3051 = vmul.f32 %v1682, %v3035
        %v3052 = vmul.f32 %v1683, %v3036
        %v3053 = vadd.f32 %v3037, 0.0
        %v3054 = vadd.f32 %v3038, 0.0
        %v3055 = vadd.f32 %v3039, 0.0
        %v3056 = vadd.f32 %v3040, 0.0
        %v3057 = vadd.f32 %v3041, 0.0
        %v3058 = vadd.f32 %v3042, 0.0
        %v3059 = vadd.f32 %v3043, 0.0
        %v3060 = vadd.f32 %v3044, 0.0
        %v3061 = vadd.f32 %v3045, 0.0
        %v3062 = vadd.f32 %v3046, 0.0
        %v3063 = vadd.f32 %v3047, 0.0
        %v3064 = vadd.f32 %v3048, 0.0
        %v3065 = vadd.f32 %v3049, 0.0
        %v3066 = vadd.f32 %v3050, 0.0
        %v3067 = vadd.f32 %v3051, 0.0
        %v3068 = vadd.f32 %v3052, 0.0
        %v3069 = vmul.f32 %v874, %v2845
        %v3070 = vmul.f32 %v877, %v2846
        %v3071 = vmul.f32 %v880, %v2847
        %v3072 = vmul.f32 %v883, %v2848
        %v3073 = vmul.f32 %v886, %v2849
        %v3074 = vmul.f32 %v889, %v2850
        %v3075 = vmul.f32 %v892, %v2851
        %v3076 = vmul.f32 %v895, %v2852
        %v3077 = vmul.f32 %v898, %v2853
        %v3078 = vmul.f32 %v901, %v2854
        %v3079 = vmul.f32 %v904, %v2855
        %v3080 = vmul.f32 %v907, %v2856
        %v3081 = vmul.f32 %v910, %v2857
        %v3082 = vmul.f32 %v913, %v2858
        %v3083 = vmul.f32 %v916, %v2859
        %v3084 = vmul.f32 %v919, %v2860
        %3085 = vrot.lane.b32.xlu0 %v2845, 1
        %v3086 = vpop.permute.xlu0 %3085
        %3087 = vrot.lane.b32.xlu0 %v2846, 1
        %v3088 = vpop.permute.xlu0 %3087
        %3089 = vrot.lane.b32.xlu0 %v2847, 1
        %v3090 = vpop.permute.xlu0 %3089
        %3091 = vrot.lane.b32.xlu0 %v2848, 1
        %v3092 = vpop.permute.xlu0 %3091
        %3093 = vrot.lane.b32.xlu0 %v2849, 1
        %v3094 = vpop.permute.xlu0 %3093
        %3095 = vrot.lane.b32.xlu0 %v2850, 1
        %v3096 = vpop.permute.xlu0 %3095
        %3097 = vrot.lane.b32.xlu0 %v2851, 1
        %v3098 = vpop.permute.xlu0 %3097
        %3099 = vrot.lane.b32.xlu0 %v2852, 1
        %v3100 = vpop.permute.xlu0 %3099
        %3101 = vrot.lane.b32.xlu0 %v2853, 1
        %v3102 = vpop.permute.xlu0 %3101
        %3103 = vrot.lane.b32.xlu0 %v2854, 1
        %v3104 = vpop.permute.xlu0 %3103
        %3105 = vrot.lane.b32.xlu0 %v2855, 1
        %v3106 = vpop.permute.xlu0 %3105
        %3107 = vrot.lane.b32.xlu0 %v2856, 1
        %v3108 = vpop.permute.xlu0 %3107
        %3109 = vrot.lane.b32.xlu0 %v2857, 1
        %v3110 = vpop.permute.xlu0 %3109
        %3111 = vrot.lane.b32.xlu0 %v2858, 1
        %v3112 = vpop.permute.xlu0 %3111
        %3113 = vrot.lane.b32.xlu0 %v2859, 1
        %v3114 = vpop.permute.xlu0 %3113
        %3115 = vrot.lane.b32.xlu0 %v2860, 1
        %v3116 = vpop.permute.xlu0 %3115
        %v3117 = vmul.f32 %v1717, %v3086
        %v3118 = vmul.f32 %v1718, %v3088
        %v3119 = vmul.f32 %v1719, %v3090
        %v3120 = vmul.f32 %v1720, %v3092
        %v3121 = vmul.f32 %v1721, %v3094
        %v3122 = vmul.f32 %v1722, %v3096
        %v3123 = vmul.f32 %v1723, %v3098
        %v3124 = vmul.f32 %v1724, %v3100
        %v3125 = vmul.f32 %v1725, %v3102
        %v3126 = vmul.f32 %v1726, %v3104
        %v3127 = vmul.f32 %v1727, %v3106
        %v3128 = vmul.f32 %v1728, %v3108
        %v3129 = vmul.f32 %v1729, %v3110
        %v3130 = vmul.f32 %v1730, %v3112
        %v3131 = vmul.f32 %v1731, %v3114
        %v3132 = vmul.f32 %v1732, %v3116
        %v3133 = vadd.f32 %v3069, %v3117
        %v3134 = vadd.f32 %v3070, %v3118
        %v3135 = vadd.f32 %v3071, %v3119
        %v3136 = vadd.f32 %v3072, %v3120
        %v3137 = vadd.f32 %v3073, %v3121
        %v3138 = vadd.f32 %v3074, %v3122
        %v3139 = vadd.f32 %v3075, %v3123
        %v3140 = vadd.f32 %v3076, %v3124
        %v3141 = vadd.f32 %v3077, %v3125
        %v3142 = vadd.f32 %v3078, %v3126
        %v3143 = vadd.f32 %v3079, %v3127
        %v3144 = vadd.f32 %v3080, %v3128
        %v3145 = vadd.f32 %v3081, %v3129
        %v3146 = vadd.f32 %v3082, %v3130
        %v3147 = vadd.f32 %v3083, %v3131
        %v3148 = vadd.f32 %v3084, %v3132
        %3149 = vrot.lane.b32.xlu0 %v2845, 127
        %v3150 = vpop.permute.xlu0 %3149
        %3151 = vrot.lane.b32.xlu0 %v2846, 127
        %v3152 = vpop.permute.xlu0 %3151
        %3153 = vrot.lane.b32.xlu0 %v2847, 127
        %v3154 = vpop.permute.xlu0 %3153
        %3155 = vrot.lane.b32.xlu0 %v2848, 127
        %v3156 = vpop.permute.xlu0 %3155
        %3157 = vrot.lane.b32.xlu0 %v2849, 127
        %v3158 = vpop.permute.xlu0 %3157
        %3159 = vrot.lane.b32.xlu0 %v2850, 127
        %v3160 = vpop.permute.xlu0 %3159
        %3161 = vrot.lane.b32.xlu0 %v2851, 127
        %v3162 = vpop.permute.xlu0 %3161
        %3163 = vrot.lane.b32.xlu0 %v2852, 127
        %v3164 = vpop.permute.xlu0 %3163
        %3165 = vrot.lane.b32.xlu0 %v2853, 127
        %v3166 = vpop.permute.xlu0 %3165
        %3167 = vrot.lane.b32.xlu0 %v2854, 127
        %v3168 = vpop.permute.xlu0 %3167
        %3169 = vrot.lane.b32.xlu0 %v2855, 127
        %v3170 = vpop.permute.xlu0 %3169
        %3171 = vrot.lane.b32.xlu0 %v2856, 127
        %v3172 = vpop.permute.xlu0 %3171
        %3173 = vrot.lane.b32.xlu0 %v2857, 127
        %v3174 = vpop.permute.xlu0 %3173
        %3175 = vrot.lane.b32.xlu0 %v2858, 127
        %v3176 = vpop.permute.xlu0 %3175
        %3177 = vrot.lane.b32.xlu0 %v2859, 127
        %v3178 = vpop.permute.xlu0 %3177
        %3179 = vrot.lane.b32.xlu0 %v2860, 127
        %v3180 = vpop.permute.xlu0 %3179
        %v3181 = vmul.f32 %v1734, %v3150
        %v3182 = vmul.f32 %v1735, %v3152
        %v3183 = vmul.f32 %v1736, %v3154
        %v3184 = vmul.f32 %v1737, %v3156
        %v3185 = vmul.f32 %v1738, %v3158
        %v3186 = vmul.f32 %v1739, %v3160
        %v3187 = vmul.f32 %v1740, %v3162
        %v3188 = vmul.f32 %v1741, %v3164
        %v3189 = vmul.f32 %v1742, %v3166
        %v3190 = vmul.f32 %v1743, %v3168
        %v3191 = vmul.f32 %v1744, %v3170
        %v3192 = vmul.f32 %v1745, %v3172
        %v3193 = vmul.f32 %v1746, %v3174
        %v3194 = vmul.f32 %v1747, %v3176
        %v3195 = vmul.f32 %v1748, %v3178
        %v3196 = vmul.f32 %v1749, %v3180
        %v3197 = vadd.f32 %v3133, %v3181
        %v3198 = vadd.f32 %v3134, %v3182
        %v3199 = vadd.f32 %v3135, %v3183
        %v3200 = vadd.f32 %v3136, %v3184
        %v3201 = vadd.f32 %v3137, %v3185
        %v3202 = vadd.f32 %v3138, %v3186
        %v3203 = vadd.f32 %v3139, %v3187
        %v3204 = vadd.f32 %v3140, %v3188
        %v3205 = vadd.f32 %v3141, %v3189
        %v3206 = vadd.f32 %v3142, %v3190
        %v3207 = vadd.f32 %v3143, %v3191
        %v3208 = vadd.f32 %v3144, %v3192
        %v3209 = vadd.f32 %v3145, %v3193
        %v3210 = vadd.f32 %v3146, %v3194
        %v3211 = vadd.f32 %v3147, %v3195
        %v3212 = vadd.f32 %v3148, %v3196
        %v3213 = vmul.f32 %v1408, %v3197
        %v3214 = vmul.f32 %v1411, %v3198
        %v3215 = vmul.f32 %v1414, %v3199
        %v3216 = vmul.f32 %v1417, %v3200
        %v3217 = vmul.f32 %v1420, %v3201
        %v3218 = vmul.f32 %v1423, %v3202
        %v3219 = vmul.f32 %v1426, %v3203
        %v3220 = vmul.f32 %v1429, %v3204
        %v3221 = vmul.f32 %v1432, %v3205
        %v3222 = vmul.f32 %v1435, %v3206
        %v3223 = vmul.f32 %v1438, %v3207
        %v3224 = vmul.f32 %v1441, %v3208
        %v3225 = vmul.f32 %v1444, %v3209
        %v3226 = vmul.f32 %v1447, %v3210
        %v3227 = vmul.f32 %v1450, %v3211
        %v3228 = vmul.f32 %v1453, %v3212
        %v3229 = vadd.f32 %v3053, %v3213
        %v3230 = vadd.f32 %v3054, %v3214
        %v3231 = vadd.f32 %v3055, %v3215
        %v3232 = vadd.f32 %v3056, %v3216
        %v3233 = vadd.f32 %v3057, %v3217
        %v3234 = vadd.f32 %v3058, %v3218
        %v3235 = vadd.f32 %v3059, %v3219
        %v3236 = vadd.f32 %v3060, %v3220
        %v3237 = vadd.f32 %v3061, %v3221
        %v3238 = vadd.f32 %v3062, %v3222
        %v3239 = vadd.f32 %v3063, %v3223
        %v3240 = vadd.f32 %v3064, %v3224
        %v3241 = vadd.f32 %v3065, %v3225
        %v3242 = vadd.f32 %v3066, %v3226
        %v3243 = vadd.f32 %v3067, %v3227
        %v3244 = vadd.f32 %v3068, %v3228
        %v3245 = vrot.slane %v2845, 1
        %v3246 = vrot.slane %v2846, 1
        %v3247 = vrot.slane %v2847, 1
        %v3248 = vrot.slane %v2848, 1
        %v3249 = vrot.slane %v2849, 1
        %v3250 = vrot.slane %v2850, 1
        %v3251 = vrot.slane %v2851, 1
        %v3252 = vrot.slane %v2852, 1
        %v3253 = vrot.slane %v2853, 1
        %v3254 = vrot.slane %v2854, 1
        %v3255 = vrot.slane %v2855, 1
        %v3256 = vrot.slane %v2856, 1
        %v3257 = vrot.slane %v2857, 1
        %v3258 = vrot.slane %v2858, 1
        %v3259 = vrot.slane %v2859, 1
        %v3260 = vrot.slane %v2860, 1
        %v3261 = vsel %vm2231, %v3259, %v3260
        %v3262 = vsel %vm2231, %v3258, %v3259
        %v3263 = vsel %vm2231, %v3257, %v3258
        %v3264 = vsel %vm2231, %v3256, %v3257
        %v3265 = vsel %vm2231, %v3255, %v3256
        %v3266 = vsel %vm2231, %v3254, %v3255
        %v3267 = vsel %vm2231, %v3253, %v3254
        %v3268 = vsel %vm2231, %v3252, %v3253
        %v3269 = vsel %vm2231, %v3251, %v3252
        %v3270 = vsel %vm2231, %v3250, %v3251
        %v3271 = vsel %vm2231, %v3249, %v3250
        %v3272 = vsel %vm2231, %v3248, %v3249
        %v3273 = vsel %vm2231, %v3247, %v3248
        %v3274 = vsel %vm2231, %v3246, %v3247
        %v3275 = vsel %vm2231, %v3245, %v3246
        %v3276 = vsel %vm2231, %v3260, %v3245
        %v3277 = vmul.f32 %v874, %v3275
        %v3278 = vmul.f32 %v877, %v3274
        %v3279 = vmul.f32 %v880, %v3273
        %v3280 = vmul.f32 %v883, %v3272
        %v3281 = vmul.f32 %v886, %v3271
        %v3282 = vmul.f32 %v889, %v3270
        %v3283 = vmul.f32 %v892, %v3269
        %v3284 = vmul.f32 %v895, %v3268
        %v3285 = vmul.f32 %v898, %v3267
        %v3286 = vmul.f32 %v901, %v3266
        %v3287 = vmul.f32 %v904, %v3265
        %v3288 = vmul.f32 %v907, %v3264
        %v3289 = vmul.f32 %v910, %v3263
        %v3290 = vmul.f32 %v913, %v3262
        %v3291 = vmul.f32 %v916, %v3261
        %v3292 = vmul.f32 %v919, %v3276
        %3293 = vrot.lane.b32.xlu0 %v3275, 1
        %v3294 = vpop.permute.xlu0 %3293
        %3295 = vrot.lane.b32.xlu0 %v3274, 1
        %v3296 = vpop.permute.xlu0 %3295
        %3297 = vrot.lane.b32.xlu0 %v3273, 1
        %v3298 = vpop.permute.xlu0 %3297
        %3299 = vrot.lane.b32.xlu0 %v3272, 1
        %v3300 = vpop.permute.xlu0 %3299
        %3301 = vrot.lane.b32.xlu0 %v3271, 1
        %v3302 = vpop.permute.xlu0 %3301
        %3303 = vrot.lane.b32.xlu0 %v3270, 1
        %v3304 = vpop.permute.xlu0 %3303
        %3305 = vrot.lane.b32.xlu0 %v3269, 1
        %v3306 = vpop.permute.xlu0 %3305
        %3307 = vrot.lane.b32.xlu0 %v3268, 1
        %v3308 = vpop.permute.xlu0 %3307
        %3309 = vrot.lane.b32.xlu0 %v3267, 1
        %v3310 = vpop.permute.xlu0 %3309
        %3311 = vrot.lane.b32.xlu0 %v3266, 1
        %v3312 = vpop.permute.xlu0 %3311
        %3313 = vrot.lane.b32.xlu0 %v3265, 1
        %v3314 = vpop.permute.xlu0 %3313
        %3315 = vrot.lane.b32.xlu0 %v3264, 1
        %v3316 = vpop.permute.xlu0 %3315
        %3317 = vrot.lane.b32.xlu0 %v3263, 1
        %v3318 = vpop.permute.xlu0 %3317
        %3319 = vrot.lane.b32.xlu0 %v3262, 1
        %v3320 = vpop.permute.xlu0 %3319
        %3321 = vrot.lane.b32.xlu0 %v3261, 1
        %v3322 = vpop.permute.xlu0 %3321
        %3323 = vrot.lane.b32.xlu0 %v3276, 1
        %v3324 = vpop.permute.xlu0 %3323
        %v3325 = vmul.f32 %v1717, %v3294
        %v3326 = vmul.f32 %v1718, %v3296
        %v3327 = vmul.f32 %v1719, %v3298
        %v3328 = vmul.f32 %v1720, %v3300
        %v3329 = vmul.f32 %v1721, %v3302
        %v3330 = vmul.f32 %v1722, %v3304
        %v3331 = vmul.f32 %v1723, %v3306
        %v3332 = vmul.f32 %v1724, %v3308
        %v3333 = vmul.f32 %v1725, %v3310
        %v3334 = vmul.f32 %v1726, %v3312
        %v3335 = vmul.f32 %v1727, %v3314
        %v3336 = vmul.f32 %v1728, %v3316
        %v3337 = vmul.f32 %v1729, %v3318
        %v3338 = vmul.f32 %v1730, %v3320
        %v3339 = vmul.f32 %v1731, %v3322
        %v3340 = vmul.f32 %v1732, %v3324
        %v3341 = vadd.f32 %v3277, %v3325
        %v3342 = vadd.f32 %v3278, %v3326
        %v3343 = vadd.f32 %v3279, %v3327
        %v3344 = vadd.f32 %v3280, %v3328
        %v3345 = vadd.f32 %v3281, %v3329
        %v3346 = vadd.f32 %v3282, %v3330
        %v3347 = vadd.f32 %v3283, %v3331
        %v3348 = vadd.f32 %v3284, %v3332
        %v3349 = vadd.f32 %v3285, %v3333
        %v3350 = vadd.f32 %v3286, %v3334
        %v3351 = vadd.f32 %v3287, %v3335
        %v3352 = vadd.f32 %v3288, %v3336
        %v3353 = vadd.f32 %v3289, %v3337
        %v3354 = vadd.f32 %v3290, %v3338
        %v3355 = vadd.f32 %v3291, %v3339
        %v3356 = vadd.f32 %v3292, %v3340
        %3357 = vrot.lane.b32.xlu0 %v3275, 127
        %v3358 = vpop.permute.xlu0 %3357
        %3359 = vrot.lane.b32.xlu0 %v3274, 127
        %v3360 = vpop.permute.xlu0 %3359
        %3361 = vrot.lane.b32.xlu0 %v3273, 127
        %v3362 = vpop.permute.xlu0 %3361
        %3363 = vrot.lane.b32.xlu0 %v3272, 127
        %v3364 = vpop.permute.xlu0 %3363
        %3365 = vrot.lane.b32.xlu0 %v3271, 127
        %v3366 = vpop.permute.xlu0 %3365
        %3367 = vrot.lane.b32.xlu0 %v3270, 127
        %v3368 = vpop.permute.xlu0 %3367
        %3369 = vrot.lane.b32.xlu0 %v3269, 127
        %v3370 = vpop.permute.xlu0 %3369
        %3371 = vrot.lane.b32.xlu0 %v3268, 127
        %v3372 = vpop.permute.xlu0 %3371
        %3373 = vrot.lane.b32.xlu0 %v3267, 127
        %v3374 = vpop.permute.xlu0 %3373
        %3375 = vrot.lane.b32.xlu0 %v3266, 127
        %v3376 = vpop.permute.xlu0 %3375
        %3377 = vrot.lane.b32.xlu0 %v3265, 127
        %v3378 = vpop.permute.xlu0 %3377
        %3379 = vrot.lane.b32.xlu0 %v3264, 127
        %v3380 = vpop.permute.xlu0 %3379
        %3381 = vrot.lane.b32.xlu0 %v3263, 127
        %v3382 = vpop.permute.xlu0 %3381
        %3383 = vrot.lane.b32.xlu0 %v3262, 127
        %v3384 = vpop.permute.xlu0 %3383
        %3385 = vrot.lane.b32.xlu0 %v3261, 127
        %v3386 = vpop.permute.xlu0 %3385
        %3387 = vrot.lane.b32.xlu0 %v3276, 127
        %v3388 = vpop.permute.xlu0 %3387
        %v3389 = vmul.f32 %v1734, %v3358
        %v3390 = vmul.f32 %v1735, %v3360
        %v3391 = vmul.f32 %v1736, %v3362
        %v3392 = vmul.f32 %v1737, %v3364
        %v3393 = vmul.f32 %v1738, %v3366
        %v3394 = vmul.f32 %v1739, %v3368
        %v3395 = vmul.f32 %v1740, %v3370
        %v3396 = vmul.f32 %v1741, %v3372
        %v3397 = vmul.f32 %v1742, %v3374
        %v3398 = vmul.f32 %v1743, %v3376
        %v3399 = vmul.f32 %v1744, %v3378
        %v3400 = vmul.f32 %v1745, %v3380
        %v3401 = vmul.f32 %v1746, %v3382
        %v3402 = vmul.f32 %v1747, %v3384
        %v3403 = vmul.f32 %v1748, %v3386
        %v3404 = vmul.f32 %v1749, %v3388
        %v3405 = vadd.f32 %v3341, %v3389
        %v3406 = vadd.f32 %v3342, %v3390
        %v3407 = vadd.f32 %v3343, %v3391
        %v3408 = vadd.f32 %v3344, %v3392
        %v3409 = vadd.f32 %v3345, %v3393
        %v3410 = vadd.f32 %v3346, %v3394
        %v3411 = vadd.f32 %v3347, %v3395
        %v3412 = vadd.f32 %v3348, %v3396
        %v3413 = vadd.f32 %v3349, %v3397
        %v3414 = vadd.f32 %v3350, %v3398
        %v3415 = vadd.f32 %v3351, %v3399
        %v3416 = vadd.f32 %v3352, %v3400
        %v3417 = vadd.f32 %v3353, %v3401
        %v3418 = vadd.f32 %v3354, %v3402
        %v3419 = vadd.f32 %v3355, %v3403
        %v3420 = vadd.f32 %v3356, %v3404
        %v3421 = vmul.f32 %v1700, %v3405
        %v3422 = vmul.f32 %v1701, %v3406
        %v3423 = vmul.f32 %v1702, %v3407
        %v3424 = vmul.f32 %v1703, %v3408
        %v3425 = vmul.f32 %v1704, %v3409
        %v3426 = vmul.f32 %v1705, %v3410
        %v3427 = vmul.f32 %v1706, %v3411
        %v3428 = vmul.f32 %v1707, %v3412
        %v3429 = vmul.f32 %v1708, %v3413
        %v3430 = vmul.f32 %v1709, %v3414
        %v3431 = vmul.f32 %v1710, %v3415
        %v3432 = vmul.f32 %v1711, %v3416
        %v3433 = vmul.f32 %v1712, %v3417
        %v3434 = vmul.f32 %v1713, %v3418
        %v3435 = vmul.f32 %v1714, %v3419
        %v3436 = vmul.f32 %v1715, %v3420
        %v3437 = vadd.f32 %v3229, %v3421
        %v3438 = vadd.f32 %v3230, %v3422
        %v3439 = vadd.f32 %v3231, %v3423
        %v3440 = vadd.f32 %v3232, %v3424
        %v3441 = vadd.f32 %v3233, %v3425
        %v3442 = vadd.f32 %v3234, %v3426
        %v3443 = vadd.f32 %v3235, %v3427
        %v3444 = vadd.f32 %v3236, %v3428
        %v3445 = vadd.f32 %v3237, %v3429
        %v3446 = vadd.f32 %v3238, %v3430
        %v3447 = vadd.f32 %v3239, %v3431
        %v3448 = vadd.f32 %v3240, %v3432
        %v3449 = vadd.f32 %v3241, %v3433
        %v3450 = vadd.f32 %v3242, %v3434
        %v3451 = vadd.f32 %v3243, %v3435
        %v3452 = vadd.f32 %v3244, %v3436
        %v3453 = vsub.f32 %v2845, %v3437
        %v3454 = vsub.f32 %v2846, %v3438
        %v3455 = vsub.f32 %v2847, %v3439
        %v3456 = vsub.f32 %v2848, %v3440
        %v3457 = vsub.f32 %v2849, %v3441
        %v3458 = vsub.f32 %v2850, %v3442
        %v3459 = vsub.f32 %v2851, %v3443
        %v3460 = vsub.f32 %v2852, %v3444
        %v3461 = vsub.f32 %v2853, %v3445
        %v3462 = vsub.f32 %v2854, %v3446
        %v3463 = vsub.f32 %v2855, %v3447
        %v3464 = vsub.f32 %v2856, %v3448
        %v3465 = vsub.f32 %v2857, %v3449
        %v3466 = vsub.f32 %v2858, %v3450
        %v3467 = vsub.f32 %v2859, %v3451
        %v3468 = vsub.f32 %v2860, %v3452
        %v3469 = vmul.f32 %v3453, 255.0
        %v3470 = vmul.f32 %v3454, 255.0
        %v3471 = vmul.f32 %v3455, 255.0
        %v3472 = vmul.f32 %v3456, 255.0
        %v3473 = vmul.f32 %v3457, 255.0
        %v3474 = vmul.f32 %v3458, 255.0
        %v3475 = vmul.f32 %v3459, 255.0
        %v3476 = vmul.f32 %v3460, 255.0
        %v3477 = vmul.f32 %v3461, 255.0
        %v3478 = vmul.f32 %v3462, 255.0
        %v3479 = vmul.f32 %v3463, 255.0
        %v3480 = vmul.f32 %v3464, 255.0
        %v3481 = vmul.f32 %v3465, 255.0
        %v3482 = vmul.f32 %v3466, 255.0
        %v3483 = vmul.f32 %v3467, 255.0
        %v3484 = vmul.f32 %v3468, 255.0
        %3485 = vmatpush.xpose.msra.mxu0 %v1781
        %3486 = vmatpush.xpose.msra.mxu0 %v1780
        %3487 = vmatpush.xpose.msra.mxu0 %v1779
        %3488 = vmatpush.xpose.msra.mxu0 %v1778
        %3489 = vmatpush.xpose.msra.mxu0 %v1777
        %3490 = vmatpush.xpose.msra.mxu0 %v1776
        %3491 = vmatpush.xpose.msra.mxu0 %v1775
        %3492 = vmatpush.xpose.msra.mxu0 %v1774
        %3493 = vmatpush.xpose.msra.mxu0 %v1773
        %3494 = vmatpush.xpose.msra.mxu0 %v1772
        %3495 = vmatpush.xpose.msra.mxu0 %v1771
        %3496 = vmatpush.xpose.msra.mxu0 %v1770
        %3497 = vmatpush.xpose.msra.mxu0 %v1769
        %3498 = vmatpush.xpose.msra.mxu0 %v1768
        %3499 = vmatpush.xpose.msra.mxu0 %v1767
        %3500 = vmatpush.xpose.msra.mxu0 %v1766
        %3501 = vmatmul.f32.gmra.mxu0 %v3469
        %v3502 = vpop.f32.mrf.mxu0
        %v3503 = vadd.f32 0.0, %v3502
        %3504 = vmatmul.f32.gmra.mxu0 %v3470
        %v3505 = vpop.f32.mrf.mxu0
        %v3506 = vadd.f32 0.0, %v3505
        %3507 = vmatmul.f32.gmra.mxu0 %v3471
        %v3508 = vpop.f32.mrf.mxu0
        %v3509 = vadd.f32 0.0, %v3508
        %3510 = vmatmul.f32.gmra.mxu0 %v3472
        %v3511 = vpop.f32.mrf.mxu0
        %v3512 = vadd.f32 0.0, %v3511
        %3513 = vmatmul.f32.gmra.mxu0 %v3473
        %v3514 = vpop.f32.mrf.mxu0
        %v3515 = vadd.f32 0.0, %v3514
        %3516 = vmatmul.f32.gmra.mxu0 %v3474
        %v3517 = vpop.f32.mrf.mxu0
        %v3518 = vadd.f32 0.0, %v3517
        %3519 = vmatmul.f32.gmra.mxu0 %v3475
        %v3520 = vpop.f32.mrf.mxu0
        %v3521 = vadd.f32 0.0, %v3520
        %3522 = vmatmul.f32.gmra.mxu0 %v3476
        %v3523 = vpop.f32.mrf.mxu0
        %v3524 = vadd.f32 0.0, %v3523
        %3525 = vmatmul.f32.gmra.mxu0 %v3477
        %v3526 = vpop.f32.mrf.mxu0
        %v3527 = vadd.f32 0.0, %v3526
        %3528 = vmatmul.f32.gmra.mxu0 %v3478
        %v3529 = vpop.f32.mrf.mxu0
        %v3530 = vadd.f32 0.0, %v3529
        %3531 = vmatmul.f32.gmra.mxu0 %v3479
        %v3532 = vpop.f32.mrf.mxu0
        %v3533 = vadd.f32 0.0, %v3532
        %3534 = vmatmul.f32.gmra.mxu0 %v3480
        %v3535 = vpop.f32.mrf.mxu0
        %v3536 = vadd.f32 0.0, %v3535
        %3537 = vmatmul.f32.gmra.mxu0 %v3481
        %v3538 = vpop.f32.mrf.mxu0
        %v3539 = vadd.f32 0.0, %v3538
        %3540 = vmatmul.f32.gmra.mxu0 %v3482
        %v3541 = vpop.f32.mrf.mxu0
        %v3542 = vadd.f32 0.0, %v3541
        %3543 = vmatmul.f32.gmra.mxu0 %v3483
        %v3544 = vpop.f32.mrf.mxu0
        %v3545 = vadd.f32 0.0, %v3544
        %3546 = vmatmul.f32.gmra.mxu0 %v3484
        %v3547 = vpop.f32.mrf.mxu0
        %v3548 = vadd.f32 0.0, %v3547
        %3549 = vdwg.mxu0
        %3550 = vmatpush.msra.mxu0 %v3548
        %3551 = vmatpush.msra.mxu0 %v3545
        %3552 = vmatpush.msra.mxu0 %v3542
        %3553 = vmatpush.msra.mxu0 %v3539
        %3554 = vmatpush.msra.mxu0 %v3536
        %3555 = vmatpush.msra.mxu0 %v3533
        %3556 = vmatpush.msra.mxu0 %v3530
        %3557 = vmatpush.msra.mxu0 %v3527
        %3558 = vmatpush.msra.mxu0 %v3524
        %3559 = vmatpush.msra.mxu0 %v3521
        %3560 = vmatpush.msra.mxu0 %v3518
        %3561 = vmatpush.msra.mxu0 %v3515
        %3562 = vmatpush.msra.mxu0 %v3512
        %3563 = vmatpush.msra.mxu0 %v3509
        %3564 = vmatpush.msra.mxu0 %v3506
        %3565 = vmatpush.msra.mxu0 %v3503
        %3566 = vmatmul.f32.gmra.mxu0 %v1750
        %v3567 = vpop.f32.mrf.mxu0
        %v3568 = vadd.f32 0.0, %v3567
        %3569 = vmatmul.f32.gmra.mxu0 %v1751
        %v3570 = vpop.f32.mrf.mxu0
        %v3571 = vadd.f32 0.0, %v3570
        %3572 = vmatmul.f32.gmra.mxu0 %v1752
        %v3573 = vpop.f32.mrf.mxu0
        %v3574 = vadd.f32 0.0, %v3573
        %3575 = vmatmul.f32.gmra.mxu0 %v1753
        %v3576 = vpop.f32.mrf.mxu0
        %v3577 = vadd.f32 0.0, %v3576
        %3578 = vmatmul.f32.gmra.mxu0 %v1754
        %v3579 = vpop.f32.mrf.mxu0
        %v3580 = vadd.f32 0.0, %v3579
        %3581 = vmatmul.f32.gmra.mxu0 %v1755
        %v3582 = vpop.f32.mrf.mxu0
        %v3583 = vadd.f32 0.0, %v3582
        %3584 = vmatmul.f32.gmra.mxu0 %v1756
        %v3585 = vpop.f32.mrf.mxu0
        %v3586 = vadd.f32 0.0, %v3585
        %3587 = vmatmul.f32.gmra.mxu0 %v1757
        %v3588 = vpop.f32.mrf.mxu0
        %v3589 = vadd.f32 0.0, %v3588
        %3590 = vmatmul.f32.gmra.mxu0 %v1758
        %v3591 = vpop.f32.mrf.mxu0
        %v3592 = vadd.f32 0.0, %v3591
        %3593 = vmatmul.f32.gmra.mxu0 %v1759
        %v3594 = vpop.f32.mrf.mxu0
        %v3595 = vadd.f32 0.0, %v3594
        %3596 = vmatmul.f32.gmra.mxu0 %v1760
        %v3597 = vpop.f32.mrf.mxu0
        %v3598 = vadd.f32 0.0, %v3597
        %3599 = vmatmul.f32.gmra.mxu0 %v1761
        %v3600 = vpop.f32.mrf.mxu0
        %v3601 = vadd.f32 0.0, %v3600
        %3602 = vmatmul.f32.gmra.mxu0 %v1762
        %v3603 = vpop.f32.mrf.mxu0
        %v3604 = vadd.f32 0.0, %v3603
        %3605 = vmatmul.f32.gmra.mxu0 %v1763
        %v3606 = vpop.f32.mrf.mxu0
        %v3607 = vadd.f32 0.0, %v3606
        %3608 = vmatmul.f32.gmra.mxu0 %v1764
        %v3609 = vpop.f32.mrf.mxu0
        %v3610 = vadd.f32 0.0, %v3609
        %3611 = vmatmul.f32.gmra.mxu0 %v1765
        %v3612 = vpop.f32.mrf.mxu0
        %v3613 = vadd.f32 0.0, %v3612
        %3614 = vdwg.mxu0
        %v3615 = vmul.f32 %v3568, %v1798
        %v3616 = vmul.f32 %v3571, %v1799
        %v3617 = vmul.f32 %v3574, %v1800
        %v3618 = vmul.f32 %v3577, %v1801
        %v3619 = vmul.f32 %v3580, %v1802
        %v3620 = vmul.f32 %v3583, %v1803
        %v3621 = vmul.f32 %v3586, %v1804
        %v3622 = vmul.f32 %v3589, %v1805
        %v3623 = vmul.f32 %v3592, %v1806
        %v3624 = vmul.f32 %v3595, %v1807
        %v3625 = vmul.f32 %v3598, %v1808
        %v3626 = vmul.f32 %v3601, %v1809
        %v3627 = vmul.f32 %v3604, %v1810
        %v3628 = vmul.f32 %v3607, %v1811
        %v3629 = vmul.f32 %v3610, %v1812
        %v3630 = vmul.f32 %v3613, %v1813
        %v3631 = vround.ne.pseudo %v3615
        %v3632 = vround.ne.pseudo %v3616
        %v3633 = vround.ne.pseudo %v3617
        %v3634 = vround.ne.pseudo %v3618
        %v3635 = vround.ne.pseudo %v3619
        %v3636 = vround.ne.pseudo %v3620
        %v3637 = vround.ne.pseudo %v3621
        %v3638 = vround.ne.pseudo %v3622
        %v3639 = vround.ne.pseudo %v3623
        %v3640 = vround.ne.pseudo %v3624
        %v3641 = vround.ne.pseudo %v3625
        %v3642 = vround.ne.pseudo %v3626
        %v3643 = vround.ne.pseudo %v3627
        %v3644 = vround.ne.pseudo %v3628
        %v3645 = vround.ne.pseudo %v3629
        %v3646 = vround.ne.pseudo %v3630
        %v3647 = vmul.f32 %v3631, %v1782
        %v3648 = vmul.f32 %v3632, %v1783
        %v3649 = vmul.f32 %v3633, %v1784
        %v3650 = vmul.f32 %v3634, %v1785
        %v3651 = vmul.f32 %v3635, %v1786
        %v3652 = vmul.f32 %v3636, %v1787
        %v3653 = vmul.f32 %v3637, %v1788
        %v3654 = vmul.f32 %v3638, %v1789
        %v3655 = vmul.f32 %v3639, %v1790
        %v3656 = vmul.f32 %v3640, %v1791
        %v3657 = vmul.f32 %v3641, %v1792
        %v3658 = vmul.f32 %v3642, %v1793
        %v3659 = vmul.f32 %v3643, %v1794
        %v3660 = vmul.f32 %v3644, %v1795
        %v3661 = vmul.f32 %v3645, %v1796
        %v3662 = vmul.f32 %v3646, %v1797
        %3663 = vmatpush.msra.mxu0 %v3662
        %3664 = vmatpush.msra.mxu0 %v3661
        %3665 = vmatpush.msra.mxu0 %v3660
        %3666 = vmatpush.msra.mxu0 %v3659
        %3667 = vmatpush.msra.mxu0 %v3658
        %3668 = vmatpush.msra.mxu0 %v3657
        %3669 = vmatpush.msra.mxu0 %v3656
        %3670 = vmatpush.msra.mxu0 %v3655
        %3671 = vmatpush.msra.mxu0 %v3654
        %3672 = vmatpush.msra.mxu0 %v3653
        %3673 = vmatpush.msra.mxu0 %v3652
        %3674 = vmatpush.msra.mxu0 %v3651
        %3675 = vmatpush.msra.mxu0 %v3650
        %3676 = vmatpush.msra.mxu0 %v3649
        %3677 = vmatpush.msra.mxu0 %v3648
        %3678 = vmatpush.msra.mxu0 %v3647
        %3679 = vmatmul.f32.gmra.mxu0 %v2650
        %v3680 = vpop.f32.mrf.mxu0
        %v3681 = vadd.f32 0.0, %v3680
        %3682 = vmatmul.f32.gmra.mxu0 %v2651
        %v3683 = vpop.f32.mrf.mxu0
        %v3684 = vadd.f32 0.0, %v3683
        %3685 = vmatmul.f32.gmra.mxu0 %v2652
        %v3686 = vpop.f32.mrf.mxu0
        %v3687 = vadd.f32 0.0, %v3686
        %3688 = vmatmul.f32.gmra.mxu0 %v2653
        %v3689 = vpop.f32.mrf.mxu0
        %v3690 = vadd.f32 0.0, %v3689
        %3691 = vmatmul.f32.gmra.mxu0 %v2654
        %v3692 = vpop.f32.mrf.mxu0
        %v3693 = vadd.f32 0.0, %v3692
        %3694 = vmatmul.f32.gmra.mxu0 %v2655
        %v3695 = vpop.f32.mrf.mxu0
        %v3696 = vadd.f32 0.0, %v3695
        %3697 = vmatmul.f32.gmra.mxu0 %v2656
        %v3698 = vpop.f32.mrf.mxu0
        %v3699 = vadd.f32 0.0, %v3698
        %3700 = vmatmul.f32.gmra.mxu0 %v2657
        %v3701 = vpop.f32.mrf.mxu0
        %v3702 = vadd.f32 0.0, %v3701
        %3703 = vmatmul.f32.gmra.mxu0 %v2658
        %v3704 = vpop.f32.mrf.mxu0
        %v3705 = vadd.f32 0.0, %v3704
        %3706 = vmatmul.f32.gmra.mxu0 %v2659
        %v3707 = vpop.f32.mrf.mxu0
        %v3708 = vadd.f32 0.0, %v3707
        %3709 = vmatmul.f32.gmra.mxu0 %v2660
        %v3710 = vpop.f32.mrf.mxu0
        %v3711 = vadd.f32 0.0, %v3710
        %3712 = vmatmul.f32.gmra.mxu0 %v2661
        %v3713 = vpop.f32.mrf.mxu0
        %v3714 = vadd.f32 0.0, %v3713
        %3715 = vmatmul.f32.gmra.mxu0 %v2662
        %v3716 = vpop.f32.mrf.mxu0
        %v3717 = vadd.f32 0.0, %v3716
        %3718 = vmatmul.f32.gmra.mxu0 %v2663
        %v3719 = vpop.f32.mrf.mxu0
        %v3720 = vadd.f32 0.0, %v3719
        %3721 = vmatmul.f32.gmra.mxu0 %v2664
        %v3722 = vpop.f32.mrf.mxu0
        %v3723 = vadd.f32 0.0, %v3722
        %3724 = vmatmul.f32.gmra.mxu0 %v2665
        %v3725 = vpop.f32.mrf.mxu0
        %v3726 = vadd.f32 0.0, %v3725
        %3727 = vdwg.mxu0
        %3728 = vmatpush.msra.mxu0 %v1781
        %3729 = vmatpush.msra.mxu0 %v1780
        %3730 = vmatpush.msra.mxu0 %v1779
        %3731 = vmatpush.msra.mxu0 %v1778
        %3732 = vmatpush.msra.mxu0 %v1777
        %3733 = vmatpush.msra.mxu0 %v1776
        %3734 = vmatpush.msra.mxu0 %v1775
        %3735 = vmatpush.msra.mxu0 %v1774
        %3736 = vmatpush.msra.mxu0 %v1773
        %3737 = vmatpush.msra.mxu0 %v1772
        %3738 = vmatpush.msra.mxu0 %v1771
        %3739 = vmatpush.msra.mxu0 %v1770
        %3740 = vmatpush.msra.mxu0 %v1769
        %3741 = vmatpush.msra.mxu0 %v1768
        %3742 = vmatpush.msra.mxu0 %v1767
        %3743 = vmatpush.msra.mxu0 %v1766
        %3744 = vmatmul.f32.gmra.mxu0 %v3681
        %v3745 = vpop.f32.mrf.mxu0
        %v3746 = vadd.f32 0.0, %v3745
        %3747 = vmatmul.f32.gmra.mxu0 %v3684
        %v3748 = vpop.f32.mrf.mxu0
        %v3749 = vadd.f32 0.0, %v3748
        %3750 = vmatmul.f32.gmra.mxu0 %v3687
        %v3751 = vpop.f32.mrf.mxu0
        %v3752 = vadd.f32 0.0, %v3751
        %3753 = vmatmul.f32.gmra.mxu0 %v3690
        %v3754 = vpop.f32.mrf.mxu0
        %v3755 = vadd.f32 0.0, %v3754
        %3756 = vmatmul.f32.gmra.mxu0 %v3693
        %v3757 = vpop.f32.mrf.mxu0
        %v3758 = vadd.f32 0.0, %v3757
        %3759 = vmatmul.f32.gmra.mxu0 %v3696
        %v3760 = vpop.f32.mrf.mxu0
        %v3761 = vadd.f32 0.0, %v3760
        %3762 = vmatmul.f32.gmra.mxu0 %v3699
        %v3763 = vpop.f32.mrf.mxu0
        %v3764 = vadd.f32 0.0, %v3763
        %3765 = vmatmul.f32.gmra.mxu0 %v3702
        %v3766 = vpop.f32.mrf.mxu0
        %v3767 = vadd.f32 0.0, %v3766
        %3768 = vmatmul.f32.gmra.mxu0 %v3705
        %v3769 = vpop.f32.mrf.mxu0
        %v3770 = vadd.f32 0.0, %v3769
        %3771 = vmatmul.f32.gmra.mxu0 %v3708
        %v3772 = vpop.f32.mrf.mxu0
        %v3773 = vadd.f32 0.0, %v3772
        %3774 = vmatmul.f32.gmra.mxu0 %v3711
        %v3775 = vpop.f32.mrf.mxu0
        %v3776 = vadd.f32 0.0, %v3775
        %3777 = vmatmul.f32.gmra.mxu0 %v3714
        %v3778 = vpop.f32.mrf.mxu0
        %v3779 = vadd.f32 0.0, %v3778
        %3780 = vmatmul.f32.gmra.mxu0 %v3717
        %v3781 = vpop.f32.mrf.mxu0
        %v3782 = vadd.f32 0.0, %v3781
        %3783 = vmatmul.f32.gmra.mxu0 %v3720
        %v3784 = vpop.f32.mrf.mxu0
        %v3785 = vadd.f32 0.0, %v3784
        %3786 = vmatmul.f32.gmra.mxu0 %v3723
        %v3787 = vpop.f32.mrf.mxu0
        %v3788 = vadd.f32 0.0, %v3787
        %3789 = vmatmul.f32.gmra.mxu0 %v3726
        %v3790 = vpop.f32.mrf.mxu0
        %v3791 = vadd.f32 0.0, %v3790
        %3792 = vdwg.mxu0
        %v3793 = vmul.f32 %v3746, 0.003921569
        %v3794 = vmul.f32 %v3749, 0.003921569
        %v3795 = vmul.f32 %v3752, 0.003921569
        %v3796 = vmul.f32 %v3755, 0.003921569
        %v3797 = vmul.f32 %v3758, 0.003921569
        %v3798 = vmul.f32 %v3761, 0.003921569
        %v3799 = vmul.f32 %v3764, 0.003921569
        %v3800 = vmul.f32 %v3767, 0.003921569
        %v3801 = vmul.f32 %v3770, 0.003921569
        %v3802 = vmul.f32 %v3773, 0.003921569
        %v3803 = vmul.f32 %v3776, 0.003921569
        %v3804 = vmul.f32 %v3779, 0.003921569
        %v3805 = vmul.f32 %v3782, 0.003921569
        %v3806 = vmul.f32 %v3785, 0.003921569
        %v3807 = vmul.f32 %v3788, 0.003921569
        %v3808 = vmul.f32 %v3791, 0.003921569
        %v3809 = vadd.f32 %v3437, %v3793
        %v3810 = vadd.f32 %v3438, %v3794
        %v3811 = vadd.f32 %v3439, %v3795
        %v3812 = vadd.f32 %v3440, %v3796
        %v3813 = vadd.f32 %v3441, %v3797
        %v3814 = vadd.f32 %v3442, %v3798
        %v3815 = vadd.f32 %v3443, %v3799
        %v3816 = vadd.f32 %v3444, %v3800
        %v3817 = vadd.f32 %v3445, %v3801
        %v3818 = vadd.f32 %v3446, %v3802
        %v3819 = vadd.f32 %v3447, %v3803
        %v3820 = vadd.f32 %v3448, %v3804
        %v3821 = vadd.f32 %v3449, %v3805
        %v3822 = vadd.f32 %v3450, %v3806
        %v3823 = vadd.f32 %v3451, %v3807
        %v3824 = vadd.f32 %v3452, %v3808
        %s3825 = scalar_lea.vmem %s400, 128 [#allocation10]
        %3826 = vst [vmem:[%s3825] sm:$0xff] %v3809
        %3827 = vst [vmem:[%s3825 + $0x8] sm:$0xff] %v3810
        %3828 = vst [vmem:[%s3825 + $0x10] sm:$0xff] %v3811
        %3829 = vst [vmem:[%s3825 + $0x18] sm:$0xff] %v3812
        %3830 = vst [vmem:[%s3825 + $0x20] sm:$0xff] %v3813
        %3831 = vst [vmem:[%s3825 + $0x28] sm:$0xff] %v3814
        %3832 = vst [vmem:[%s3825 + $0x30] sm:$0xff] %v3815
        %3833 = vst [vmem:[%s3825 + $0x38] sm:$0xff] %v3816
        %3834 = vst [vmem:[%s3825 + $0x40] sm:$0xff] %v3817
        %3835 = vst [vmem:[%s3825 + $0x48] sm:$0xff] %v3818
        %3836 = vst [vmem:[%s3825 + $0x50] sm:$0xff] %v3819
        %3837 = vst [vmem:[%s3825 + $0x58] sm:$0xff] %v3820
        %3838 = vst [vmem:[%s3825 + $0x60] sm:$0xff] %v3821
        %3839 = vst [vmem:[%s3825 + $0x68] sm:$0xff] %v3822
        %3840 = vst [vmem:[%s3825 + $0x70] sm:$0xff] %v3823
        %3841 = vst [vmem:[%s3825 + $0x78] sm:$0xff] %v3824
        %s3842 = scalar_lea.vmem %s342, 256 [#allocation2]
        %v3843 = vld [vmem:[%s3842] sm:$0xff]
        %v3844 = vld [vmem:[%s3842 + $0x8] sm:$0xff]
        %v3845 = vld [vmem:[%s3842 + $0x10] sm:$0xff]
        %v3846 = vld [vmem:[%s3842 + $0x18] sm:$0xff]
        %v3847 = vld [vmem:[%s3842 + $0x20] sm:$0xff]
        %v3848 = vld [vmem:[%s3842 + $0x28] sm:$0xff]
        %v3849 = vld [vmem:[%s3842 + $0x30] sm:$0xff]
        %v3850 = vld [vmem:[%s3842 + $0x38] sm:$0xff]
        %v3851 = vld [vmem:[%s3842 + $0x40] sm:$0xff]
        %v3852 = vld [vmem:[%s3842 + $0x48] sm:$0xff]
        %v3853 = vld [vmem:[%s3842 + $0x50] sm:$0xff]
        %v3854 = vld [vmem:[%s3842 + $0x58] sm:$0xff]
        %v3855 = vld [vmem:[%s3842 + $0x60] sm:$0xff]
        %v3856 = vld [vmem:[%s3842 + $0x68] sm:$0xff]
        %v3857 = vld [vmem:[%s3842 + $0x70] sm:$0xff]
        %v3858 = vld [vmem:[%s3842 + $0x78] sm:$0xff]
        %v3859 = vrot.slane %v3843, 7
        %v3860 = vrot.slane %v3844, 7
        %v3861 = vrot.slane %v3845, 7
        %v3862 = vrot.slane %v3846, 7
        %v3863 = vrot.slane %v3847, 7
        %v3864 = vrot.slane %v3848, 7
        %v3865 = vrot.slane %v3849, 7
        %v3866 = vrot.slane %v3850, 7
        %v3867 = vrot.slane %v3851, 7
        %v3868 = vrot.slane %v3852, 7
        %v3869 = vrot.slane %v3853, 7
        %v3870 = vrot.slane %v3854, 7
        %v3871 = vrot.slane %v3855, 7
        %v3872 = vrot.slane %v3856, 7
        %v3873 = vrot.slane %v3857, 7
        %v3874 = vrot.slane %v3858, 7
        %v3875 = vsel %vm1846, %v3873, %v3874
        %v3876 = vsel %vm1846, %v3872, %v3873
        %v3877 = vsel %vm1846, %v3871, %v3872
        %v3878 = vsel %vm1846, %v3870, %v3871
        %v3879 = vsel %vm1846, %v3869, %v3870
        %v3880 = vsel %vm1846, %v3868, %v3869
        %v3881 = vsel %vm1846, %v3867, %v3868
        %v3882 = vsel %vm1846, %v3866, %v3867
        %v3883 = vsel %vm1846, %v3865, %v3866
        %v3884 = vsel %vm1846, %v3864, %v3865
        %v3885 = vsel %vm1846, %v3863, %v3864
        %v3886 = vsel %vm1846, %v3862, %v3863
        %v3887 = vsel %vm1846, %v3861, %v3862
        %v3888 = vsel %vm1846, %v3860, %v3861
        %v3889 = vsel %vm1846, %v3859, %v3860
        %v3890 = vsel %vm1846, %v3874, %v3859
        %v3891 = vmul.f32 %v874, %v3890
        %v3892 = vmul.f32 %v877, %v3889
        %v3893 = vmul.f32 %v880, %v3888
        %v3894 = vmul.f32 %v883, %v3887
        %v3895 = vmul.f32 %v886, %v3886
        %v3896 = vmul.f32 %v889, %v3885
        %v3897 = vmul.f32 %v892, %v3884
        %v3898 = vmul.f32 %v895, %v3883
        %v3899 = vmul.f32 %v898, %v3882
        %v3900 = vmul.f32 %v901, %v3881
        %v3901 = vmul.f32 %v904, %v3880
        %v3902 = vmul.f32 %v907, %v3879
        %v3903 = vmul.f32 %v910, %v3878
        %v3904 = vmul.f32 %v913, %v3877
        %v3905 = vmul.f32 %v916, %v3876
        %v3906 = vmul.f32 %v919, %v3875
        %3907 = vrot.lane.b32.xlu0 %v3890, 1
        %v3908 = vpop.permute.xlu0 %3907
        %3909 = vrot.lane.b32.xlu0 %v3889, 1
        %v3910 = vpop.permute.xlu0 %3909
        %3911 = vrot.lane.b32.xlu0 %v3888, 1
        %v3912 = vpop.permute.xlu0 %3911
        %3913 = vrot.lane.b32.xlu0 %v3887, 1
        %v3914 = vpop.permute.xlu0 %3913
        %3915 = vrot.lane.b32.xlu0 %v3886, 1
        %v3916 = vpop.permute.xlu0 %3915
        %3917 = vrot.lane.b32.xlu0 %v3885, 1
        %v3918 = vpop.permute.xlu0 %3917
        %3919 = vrot.lane.b32.xlu0 %v3884, 1
        %v3920 = vpop.permute.xlu0 %3919
        %3921 = vrot.lane.b32.xlu0 %v3883, 1
        %v3922 = vpop.permute.xlu0 %3921
        %3923 = vrot.lane.b32.xlu0 %v3882, 1
        %v3924 = vpop.permute.xlu0 %3923
        %3925 = vrot.lane.b32.xlu0 %v3881, 1
        %v3926 = vpop.permute.xlu0 %3925
        %3927 = vrot.lane.b32.xlu0 %v3880, 1
        %v3928 = vpop.permute.xlu0 %3927
        %3929 = vrot.lane.b32.xlu0 %v3879, 1
        %v3930 = vpop.permute.xlu0 %3929
        %3931 = vrot.lane.b32.xlu0 %v3878, 1
        %v3932 = vpop.permute.xlu0 %3931
        %3933 = vrot.lane.b32.xlu0 %v3877, 1
        %v3934 = vpop.permute.xlu0 %3933
        %3935 = vrot.lane.b32.xlu0 %v3876, 1
        %v3936 = vpop.permute.xlu0 %3935
        %3937 = vrot.lane.b32.xlu0 %v3875, 1
        %v3938 = vpop.permute.xlu0 %3937
        %v3939 = vmul.f32 %v1717, %v3908
        %v3940 = vmul.f32 %v1718, %v3910
        %v3941 = vmul.f32 %v1719, %v3912
        %v3942 = vmul.f32 %v1720, %v3914
        %v3943 = vmul.f32 %v1721, %v3916
        %v3944 = vmul.f32 %v1722, %v3918
        %v3945 = vmul.f32 %v1723, %v3920
        %v3946 = vmul.f32 %v1724, %v3922
        %v3947 = vmul.f32 %v1725, %v3924
        %v3948 = vmul.f32 %v1726, %v3926
        %v3949 = vmul.f32 %v1727, %v3928
        %v3950 = vmul.f32 %v1728, %v3930
        %v3951 = vmul.f32 %v1729, %v3932
        %v3952 = vmul.f32 %v1730, %v3934
        %v3953 = vmul.f32 %v1731, %v3936
        %v3954 = vmul.f32 %v1732, %v3938
        %v3955 = vadd.f32 %v3891, %v3939
        %v3956 = vadd.f32 %v3892, %v3940
        %v3957 = vadd.f32 %v3893, %v3941
        %v3958 = vadd.f32 %v3894, %v3942
        %v3959 = vadd.f32 %v3895, %v3943
        %v3960 = vadd.f32 %v3896, %v3944
        %v3961 = vadd.f32 %v3897, %v3945
        %v3962 = vadd.f32 %v3898, %v3946
        %v3963 = vadd.f32 %v3899, %v3947
        %v3964 = vadd.f32 %v3900, %v3948
        %v3965 = vadd.f32 %v3901, %v3949
        %v3966 = vadd.f32 %v3902, %v3950
        %v3967 = vadd.f32 %v3903, %v3951
        %v3968 = vadd.f32 %v3904, %v3952
        %v3969 = vadd.f32 %v3905, %v3953
        %v3970 = vadd.f32 %v3906, %v3954
        %3971 = vrot.lane.b32.xlu0 %v3890, 127
        %v3972 = vpop.permute.xlu0 %3971
        %3973 = vrot.lane.b32.xlu0 %v3889, 127
        %v3974 = vpop.permute.xlu0 %3973
        %3975 = vrot.lane.b32.xlu0 %v3888, 127
        %v3976 = vpop.permute.xlu0 %3975
        %3977 = vrot.lane.b32.xlu0 %v3887, 127
        %v3978 = vpop.permute.xlu0 %3977
        %3979 = vrot.lane.b32.xlu0 %v3886, 127
        %v3980 = vpop.permute.xlu0 %3979
        %3981 = vrot.lane.b32.xlu0 %v3885, 127
        %v3982 = vpop.permute.xlu0 %3981
        %3983 = vrot.lane.b32.xlu0 %v3884, 127
        %v3984 = vpop.permute.xlu0 %3983
        %3985 = vrot.lane.b32.xlu0 %v3883, 127
        %v3986 = vpop.permute.xlu0 %3985
        %3987 = vrot.lane.b32.xlu0 %v3882, 127
        %v3988 = vpop.permute.xlu0 %3987
        %3989 = vrot.lane.b32.xlu0 %v3881, 127
        %v3990 = vpop.permute.xlu0 %3989
        %3991 = vrot.lane.b32.xlu0 %v3880, 127
        %v3992 = vpop.permute.xlu0 %3991
        %3993 = vrot.lane.b32.xlu0 %v3879, 127
        %v3994 = vpop.permute.xlu0 %3993
        %3995 = vrot.lane.b32.xlu0 %v3878, 127
        %v3996 = vpop.permute.xlu0 %3995
        %3997 = vrot.lane.b32.xlu0 %v3877, 127
        %v3998 = vpop.permute.xlu0 %3997
        %3999 = vrot.lane.b32.xlu0 %v3876, 127
        %v4000 = vpop.permute.xlu0 %3999
        %4001 = vrot.lane.b32.xlu0 %v3875, 127
        %v4002 = vpop.permute.xlu0 %4001
        %v4003 = vmul.f32 %v1734, %v3972
        %v4004 = vmul.f32 %v1735, %v3974
        %v4005 = vmul.f32 %v1736, %v3976
        %v4006 = vmul.f32 %v1737, %v3978
        %v4007 = vmul.f32 %v1738, %v3980
        %v4008 = vmul.f32 %v1739, %v3982
        %v4009 = vmul.f32 %v1740, %v3984
        %v4010 = vmul.f32 %v1741, %v3986
        %v4011 = vmul.f32 %v1742, %v3988
        %v4012 = vmul.f32 %v1743, %v3990
        %v4013 = vmul.f32 %v1744, %v3992
        %v4014 = vmul.f32 %v1745, %v3994
        %v4015 = vmul.f32 %v1746, %v3996
        %v4016 = vmul.f32 %v1747, %v3998
        %v4017 = vmul.f32 %v1748, %v4000
        %v4018 = vmul.f32 %v1749, %v4002
        %v4019 = vadd.f32 %v3955, %v4003
        %v4020 = vadd.f32 %v3956, %v4004
        %v4021 = vadd.f32 %v3957, %v4005
        %v4022 = vadd.f32 %v3958, %v4006
        %v4023 = vadd.f32 %v3959, %v4007
        %v4024 = vadd.f32 %v3960, %v4008
        %v4025 = vadd.f32 %v3961, %v4009
        %v4026 = vadd.f32 %v3962, %v4010
        %v4027 = vadd.f32 %v3963, %v4011
        %v4028 = vadd.f32 %v3964, %v4012
        %v4029 = vadd.f32 %v3965, %v4013
        %v4030 = vadd.f32 %v3966, %v4014
        %v4031 = vadd.f32 %v3967, %v4015
        %v4032 = vadd.f32 %v3968, %v4016
        %v4033 = vadd.f32 %v3969, %v4017
        %v4034 = vadd.f32 %v3970, %v4018
        %v4035 = vmul.f32 %v1668, %v4019
        %v4036 = vmul.f32 %v1669, %v4020
        %v4037 = vmul.f32 %v1670, %v4021
        %v4038 = vmul.f32 %v1671, %v4022
        %v4039 = vmul.f32 %v1672, %v4023
        %v4040 = vmul.f32 %v1673, %v4024
        %v4041 = vmul.f32 %v1674, %v4025
        %v4042 = vmul.f32 %v1675, %v4026
        %v4043 = vmul.f32 %v1676, %v4027
        %v4044 = vmul.f32 %v1677, %v4028
        %v4045 = vmul.f32 %v1678, %v4029
        %v4046 = vmul.f32 %v1679, %v4030
        %v4047 = vmul.f32 %v1680, %v4031
        %v4048 = vmul.f32 %v1681, %v4032
        %v4049 = vmul.f32 %v1682, %v4033
        %v4050 = vmul.f32 %v1683, %v4034
        %v4051 = vadd.f32 %v4035, 0.0
        %v4052 = vadd.f32 %v4036, 0.0
        %v4053 = vadd.f32 %v4037, 0.0
        %v4054 = vadd.f32 %v4038, 0.0
        %v4055 = vadd.f32 %v4039, 0.0
        %v4056 = vadd.f32 %v4040, 0.0
        %v4057 = vadd.f32 %v4041, 0.0
        %v4058 = vadd.f32 %v4042, 0.0
        %v4059 = vadd.f32 %v4043, 0.0
        %v4060 = vadd.f32 %v4044, 0.0
        %v4061 = vadd.f32 %v4045, 0.0
        %v4062 = vadd.f32 %v4046, 0.0
        %v4063 = vadd.f32 %v4047, 0.0
        %v4064 = vadd.f32 %v4048, 0.0
        %v4065 = vadd.f32 %v4049, 0.0
        %v4066 = vadd.f32 %v4050, 0.0
        %v4067 = vmul.f32 %v874, %v3843
        %v4068 = vmul.f32 %v877, %v3844
        %v4069 = vmul.f32 %v880, %v3845
        %v4070 = vmul.f32 %v883, %v3846
        %v4071 = vmul.f32 %v886, %v3847
        %v4072 = vmul.f32 %v889, %v3848
        %v4073 = vmul.f32 %v892, %v3849
        %v4074 = vmul.f32 %v895, %v3850
        %v4075 = vmul.f32 %v898, %v3851
        %v4076 = vmul.f32 %v901, %v3852
        %v4077 = vmul.f32 %v904, %v3853
        %v4078 = vmul.f32 %v907, %v3854
        %v4079 = vmul.f32 %v910, %v3855
        %v4080 = vmul.f32 %v913, %v3856
        %v4081 = vmul.f32 %v916, %v3857
        %v4082 = vmul.f32 %v919, %v3858
        %4083 = vrot.lane.b32.xlu0 %v3843, 1
        %v4084 = vpop.permute.xlu0 %4083
        %4085 = vrot.lane.b32.xlu0 %v3844, 1
        %v4086 = vpop.permute.xlu0 %4085
        %4087 = vrot.lane.b32.xlu0 %v3845, 1
        %v4088 = vpop.permute.xlu0 %4087
        %4089 = vrot.lane.b32.xlu0 %v3846, 1
        %v4090 = vpop.permute.xlu0 %4089
        %4091 = vrot.lane.b32.xlu0 %v3847, 1
        %v4092 = vpop.permute.xlu0 %4091
        %4093 = vrot.lane.b32.xlu0 %v3848, 1
        %v4094 = vpop.permute.xlu0 %4093
        %4095 = vrot.lane.b32.xlu0 %v3849, 1
        %v4096 = vpop.permute.xlu0 %4095
        %4097 = vrot.lane.b32.xlu0 %v3850, 1
        %v4098 = vpop.permute.xlu0 %4097
        %4099 = vrot.lane.b32.xlu0 %v3851, 1
        %v4100 = vpop.permute.xlu0 %4099
        %4101 = vrot.lane.b32.xlu0 %v3852, 1
        %v4102 = vpop.permute.xlu0 %4101
        %4103 = vrot.lane.b32.xlu0 %v3853, 1
        %v4104 = vpop.permute.xlu0 %4103
        %4105 = vrot.lane.b32.xlu0 %v3854, 1
        %v4106 = vpop.permute.xlu0 %4105
        %4107 = vrot.lane.b32.xlu0 %v3855, 1
        %v4108 = vpop.permute.xlu0 %4107
        %4109 = vrot.lane.b32.xlu0 %v3856, 1
        %v4110 = vpop.permute.xlu0 %4109
        %4111 = vrot.lane.b32.xlu0 %v3857, 1
        %v4112 = vpop.permute.xlu0 %4111
        %4113 = vrot.lane.b32.xlu0 %v3858, 1
        %v4114 = vpop.permute.xlu0 %4113
        %v4115 = vmul.f32 %v1717, %v4084
        %v4116 = vmul.f32 %v1718, %v4086
        %v4117 = vmul.f32 %v1719, %v4088
        %v4118 = vmul.f32 %v1720, %v4090
        %v4119 = vmul.f32 %v1721, %v4092
        %v4120 = vmul.f32 %v1722, %v4094
        %v4121 = vmul.f32 %v1723, %v4096
        %v4122 = vmul.f32 %v1724, %v4098
        %v4123 = vmul.f32 %v1725, %v4100
        %v4124 = vmul.f32 %v1726, %v4102
        %v4125 = vmul.f32 %v1727, %v4104
        %v4126 = vmul.f32 %v1728, %v4106
        %v4127 = vmul.f32 %v1729, %v4108
        %v4128 = vmul.f32 %v1730, %v4110
        %v4129 = vmul.f32 %v1731, %v4112
        %v4130 = vmul.f32 %v1732, %v4114
        %v4131 = vadd.f32 %v4067, %v4115
        %v4132 = vadd.f32 %v4068, %v4116
        %v4133 = vadd.f32 %v4069, %v4117
        %v4134 = vadd.f32 %v4070, %v4118
        %v4135 = vadd.f32 %v4071, %v4119
        %v4136 = vadd.f32 %v4072, %v4120
        %v4137 = vadd.f32 %v4073, %v4121
        %v4138 = vadd.f32 %v4074, %v4122
        %v4139 = vadd.f32 %v4075, %v4123
        %v4140 = vadd.f32 %v4076, %v4124
        %v4141 = vadd.f32 %v4077, %v4125
        %v4142 = vadd.f32 %v4078, %v4126
        %v4143 = vadd.f32 %v4079, %v4127
        %v4144 = vadd.f32 %v4080, %v4128
        %v4145 = vadd.f32 %v4081, %v4129
        %v4146 = vadd.f32 %v4082, %v4130
        %4147 = vrot.lane.b32.xlu0 %v3843, 127
        %v4148 = vpop.permute.xlu0 %4147
        %4149 = vrot.lane.b32.xlu0 %v3844, 127
        %v4150 = vpop.permute.xlu0 %4149
        %4151 = vrot.lane.b32.xlu0 %v3845, 127
        %v4152 = vpop.permute.xlu0 %4151
        %4153 = vrot.lane.b32.xlu0 %v3846, 127
        %v4154 = vpop.permute.xlu0 %4153
        %4155 = vrot.lane.b32.xlu0 %v3847, 127
        %v4156 = vpop.permute.xlu0 %4155
        %4157 = vrot.lane.b32.xlu0 %v3848, 127
        %v4158 = vpop.permute.xlu0 %4157
        %4159 = vrot.lane.b32.xlu0 %v3849, 127
        %v4160 = vpop.permute.xlu0 %4159
        %4161 = vrot.lane.b32.xlu0 %v3850, 127
        %v4162 = vpop.permute.xlu0 %4161
        %4163 = vrot.lane.b32.xlu0 %v3851, 127
        %v4164 = vpop.permute.xlu0 %4163
        %4165 = vrot.lane.b32.xlu0 %v3852, 127
        %v4166 = vpop.permute.xlu0 %4165
        %4167 = vrot.lane.b32.xlu0 %v3853, 127
        %v4168 = vpop.permute.xlu0 %4167
        %4169 = vrot.lane.b32.xlu0 %v3854, 127
        %v4170 = vpop.permute.xlu0 %4169
        %4171 = vrot.lane.b32.xlu0 %v3855, 127
        %v4172 = vpop.permute.xlu0 %4171
        %4173 = vrot.lane.b32.xlu0 %v3856, 127
        %v4174 = vpop.permute.xlu0 %4173
        %4175 = vrot.lane.b32.xlu0 %v3857, 127
        %v4176 = vpop.permute.xlu0 %4175
        %4177 = vrot.lane.b32.xlu0 %v3858, 127
        %v4178 = vpop.permute.xlu0 %4177
        %v4179 = vmul.f32 %v1734, %v4148
        %v4180 = vmul.f32 %v1735, %v4150
        %v4181 = vmul.f32 %v1736, %v4152
        %v4182 = vmul.f32 %v1737, %v4154
        %v4183 = vmul.f32 %v1738, %v4156
        %v4184 = vmul.f32 %v1739, %v4158
        %v4185 = vmul.f32 %v1740, %v4160
        %v4186 = vmul.f32 %v1741, %v4162
        %v4187 = vmul.f32 %v1742, %v4164
        %v4188 = vmul.f32 %v1743, %v4166
        %v4189 = vmul.f32 %v1744, %v4168
        %v4190 = vmul.f32 %v1745, %v4170
        %v4191 = vmul.f32 %v1746, %v4172
        %v4192 = vmul.f32 %v1747, %v4174
        %v4193 = vmul.f32 %v1748, %v4176
        %v4194 = vmul.f32 %v1749, %v4178
        %v4195 = vadd.f32 %v4131, %v4179
        %v4196 = vadd.f32 %v4132, %v4180
        %v4197 = vadd.f32 %v4133, %v4181
        %v4198 = vadd.f32 %v4134, %v4182
        %v4199 = vadd.f32 %v4135, %v4183
        %v4200 = vadd.f32 %v4136, %v4184
        %v4201 = vadd.f32 %v4137, %v4185
        %v4202 = vadd.f32 %v4138, %v4186
        %v4203 = vadd.f32 %v4139, %v4187
        %v4204 = vadd.f32 %v4140, %v4188
        %v4205 = vadd.f32 %v4141, %v4189
        %v4206 = vadd.f32 %v4142, %v4190
        %v4207 = vadd.f32 %v4143, %v4191
        %v4208 = vadd.f32 %v4144, %v4192
        %v4209 = vadd.f32 %v4145, %v4193
        %v4210 = vadd.f32 %v4146, %v4194
        %v4211 = vmul.f32 %v1408, %v4195
        %v4212 = vmul.f32 %v1411, %v4196
        %v4213 = vmul.f32 %v1414, %v4197
        %v4214 = vmul.f32 %v1417, %v4198
        %v4215 = vmul.f32 %v1420, %v4199
        %v4216 = vmul.f32 %v1423, %v4200
        %v4217 = vmul.f32 %v1426, %v4201
        %v4218 = vmul.f32 %v1429, %v4202
        %v4219 = vmul.f32 %v1432, %v4203
        %v4220 = vmul.f32 %v1435, %v4204
        %v4221 = vmul.f32 %v1438, %v4205
        %v4222 = vmul.f32 %v1441, %v4206
        %v4223 = vmul.f32 %v1444, %v4207
        %v4224 = vmul.f32 %v1447, %v4208
        %v4225 = vmul.f32 %v1450, %v4209
        %v4226 = vmul.f32 %v1453, %v4210
        %v4227 = vadd.f32 %v4051, %v4211
        %v4228 = vadd.f32 %v4052, %v4212
        %v4229 = vadd.f32 %v4053, %v4213
        %v4230 = vadd.f32 %v4054, %v4214
        %v4231 = vadd.f32 %v4055, %v4215
        %v4232 = vadd.f32 %v4056, %v4216
        %v4233 = vadd.f32 %v4057, %v4217
        %v4234 = vadd.f32 %v4058, %v4218
        %v4235 = vadd.f32 %v4059, %v4219
        %v4236 = vadd.f32 %v4060, %v4220
        %v4237 = vadd.f32 %v4061, %v4221
        %v4238 = vadd.f32 %v4062, %v4222
        %v4239 = vadd.f32 %v4063, %v4223
        %v4240 = vadd.f32 %v4064, %v4224
        %v4241 = vadd.f32 %v4065, %v4225
        %v4242 = vadd.f32 %v4066, %v4226
        %v4243 = vrot.slane %v3843, 1
        %v4244 = vrot.slane %v3844, 1
        %v4245 = vrot.slane %v3845, 1
        %v4246 = vrot.slane %v3846, 1
        %v4247 = vrot.slane %v3847, 1
        %v4248 = vrot.slane %v3848, 1
        %v4249 = vrot.slane %v3849, 1
        %v4250 = vrot.slane %v3850, 1
        %v4251 = vrot.slane %v3851, 1
        %v4252 = vrot.slane %v3852, 1
        %v4253 = vrot.slane %v3853, 1
        %v4254 = vrot.slane %v3854, 1
        %v4255 = vrot.slane %v3855, 1
        %v4256 = vrot.slane %v3856, 1
        %v4257 = vrot.slane %v3857, 1
        %v4258 = vrot.slane %v3858, 1
        %v4259 = vsel %vm2231, %v4257, %v4258
        %v4260 = vsel %vm2231, %v4256, %v4257
        %v4261 = vsel %vm2231, %v4255, %v4256
        %v4262 = vsel %vm2231, %v4254, %v4255
        %v4263 = vsel %vm2231, %v4253, %v4254
        %v4264 = vsel %vm2231, %v4252, %v4253
        %v4265 = vsel %vm2231, %v4251, %v4252
        %v4266 = vsel %vm2231, %v4250, %v4251
        %v4267 = vsel %vm2231, %v4249, %v4250
        %v4268 = vsel %vm2231, %v4248, %v4249
        %v4269 = vsel %vm2231, %v4247, %v4248
        %v4270 = vsel %vm2231, %v4246, %v4247
        %v4271 = vsel %vm2231, %v4245, %v4246
        %v4272 = vsel %vm2231, %v4244, %v4245
        %v4273 = vsel %vm2231, %v4243, %v4244
        %v4274 = vsel %vm2231, %v4258, %v4243
        %v4275 = vmul.f32 %v874, %v4273
        %v4276 = vmul.f32 %v877, %v4272
        %v4277 = vmul.f32 %v880, %v4271
        %v4278 = vmul.f32 %v883, %v4270
        %v4279 = vmul.f32 %v886, %v4269
        %v4280 = vmul.f32 %v889, %v4268
        %v4281 = vmul.f32 %v892, %v4267
        %v4282 = vmul.f32 %v895, %v4266
        %v4283 = vmul.f32 %v898, %v4265
        %v4284 = vmul.f32 %v901, %v4264
        %v4285 = vmul.f32 %v904, %v4263
        %v4286 = vmul.f32 %v907, %v4262
        %v4287 = vmul.f32 %v910, %v4261
        %v4288 = vmul.f32 %v913, %v4260
        %v4289 = vmul.f32 %v916, %v4259
        %v4290 = vmul.f32 %v919, %v4274
        %4291 = vrot.lane.b32.xlu0 %v4273, 1
        %v4292 = vpop.permute.xlu0 %4291
        %4293 = vrot.lane.b32.xlu0 %v4272, 1
        %v4294 = vpop.permute.xlu0 %4293
        %4295 = vrot.lane.b32.xlu0 %v4271, 1
        %v4296 = vpop.permute.xlu0 %4295
        %4297 = vrot.lane.b32.xlu0 %v4270, 1
        %v4298 = vpop.permute.xlu0 %4297
        %4299 = vrot.lane.b32.xlu0 %v4269, 1
        %v4300 = vpop.permute.xlu0 %4299
        %4301 = vrot.lane.b32.xlu0 %v4268, 1
        %v4302 = vpop.permute.xlu0 %4301
        %4303 = vrot.lane.b32.xlu0 %v4267, 1
        %v4304 = vpop.permute.xlu0 %4303
        %4305 = vrot.lane.b32.xlu0 %v4266, 1
        %v4306 = vpop.permute.xlu0 %4305
        %4307 = vrot.lane.b32.xlu0 %v4265, 1
        %v4308 = vpop.permute.xlu0 %4307
        %4309 = vrot.lane.b32.xlu0 %v4264, 1
        %v4310 = vpop.permute.xlu0 %4309
        %4311 = vrot.lane.b32.xlu0 %v4263, 1
        %v4312 = vpop.permute.xlu0 %4311
        %4313 = vrot.lane.b32.xlu0 %v4262, 1
        %v4314 = vpop.permute.xlu0 %4313
        %4315 = vrot.lane.b32.xlu0 %v4261, 1
        %v4316 = vpop.permute.xlu0 %4315
        %4317 = vrot.lane.b32.xlu0 %v4260, 1
        %v4318 = vpop.permute.xlu0 %4317
        %4319 = vrot.lane.b32.xlu0 %v4259, 1
        %v4320 = vpop.permute.xlu0 %4319
        %4321 = vrot.lane.b32.xlu0 %v4274, 1
        %v4322 = vpop.permute.xlu0 %4321
        %v4323 = vmul.f32 %v1717, %v4292
        %v4324 = vmul.f32 %v1718, %v4294
        %v4325 = vmul.f32 %v1719, %v4296
        %v4326 = vmul.f32 %v1720, %v4298
        %v4327 = vmul.f32 %v1721, %v4300
        %v4328 = vmul.f32 %v1722, %v4302
        %v4329 = vmul.f32 %v1723, %v4304
        %v4330 = vmul.f32 %v1724, %v4306
        %v4331 = vmul.f32 %v1725, %v4308
        %v4332 = vmul.f32 %v1726, %v4310
        %v4333 = vmul.f32 %v1727, %v4312
        %v4334 = vmul.f32 %v1728, %v4314
        %v4335 = vmul.f32 %v1729, %v4316
        %v4336 = vmul.f32 %v1730, %v4318
        %v4337 = vmul.f32 %v1731, %v4320
        %v4338 = vmul.f32 %v1732, %v4322
        %v4339 = vadd.f32 %v4275, %v4323
        %v4340 = vadd.f32 %v4276, %v4324
        %v4341 = vadd.f32 %v4277, %v4325
        %v4342 = vadd.f32 %v4278, %v4326
        %v4343 = vadd.f32 %v4279, %v4327
        %v4344 = vadd.f32 %v4280, %v4328
        %v4345 = vadd.f32 %v4281, %v4329
        %v4346 = vadd.f32 %v4282, %v4330
        %v4347 = vadd.f32 %v4283, %v4331
        %v4348 = vadd.f32 %v4284, %v4332
        %v4349 = vadd.f32 %v4285, %v4333
        %v4350 = vadd.f32 %v4286, %v4334
        %v4351 = vadd.f32 %v4287, %v4335
        %v4352 = vadd.f32 %v4288, %v4336
        %v4353 = vadd.f32 %v4289, %v4337
        %v4354 = vadd.f32 %v4290, %v4338
        %4355 = vrot.lane.b32.xlu0 %v4273, 127
        %v4356 = vpop.permute.xlu0 %4355
        %4357 = vrot.lane.b32.xlu0 %v4272, 127
        %v4358 = vpop.permute.xlu0 %4357
        %4359 = vrot.lane.b32.xlu0 %v4271, 127
        %v4360 = vpop.permute.xlu0 %4359
        %4361 = vrot.lane.b32.xlu0 %v4270, 127
        %v4362 = vpop.permute.xlu0 %4361
        %4363 = vrot.lane.b32.xlu0 %v4269, 127
        %v4364 = vpop.permute.xlu0 %4363
        %4365 = vrot.lane.b32.xlu0 %v4268, 127
        %v4366 = vpop.permute.xlu0 %4365
        %4367 = vrot.lane.b32.xlu0 %v4267, 127
        %v4368 = vpop.permute.xlu0 %4367
        %4369 = vrot.lane.b32.xlu0 %v4266, 127
        %v4370 = vpop.permute.xlu0 %4369
        %4371 = vrot.lane.b32.xlu0 %v4265, 127
        %v4372 = vpop.permute.xlu0 %4371
        %4373 = vrot.lane.b32.xlu0 %v4264, 127
        %v4374 = vpop.permute.xlu0 %4373
        %4375 = vrot.lane.b32.xlu0 %v4263, 127
        %v4376 = vpop.permute.xlu0 %4375
        %4377 = vrot.lane.b32.xlu0 %v4262, 127
        %v4378 = vpop.permute.xlu0 %4377
        %4379 = vrot.lane.b32.xlu0 %v4261, 127
        %v4380 = vpop.permute.xlu0 %4379
        %4381 = vrot.lane.b32.xlu0 %v4260, 127
        %v4382 = vpop.permute.xlu0 %4381
        %4383 = vrot.lane.b32.xlu0 %v4259, 127
        %v4384 = vpop.permute.xlu0 %4383
        %4385 = vrot.lane.b32.xlu0 %v4274, 127
        %v4386 = vpop.permute.xlu0 %4385
        %v4387 = vmul.f32 %v1734, %v4356
        %v4388 = vmul.f32 %v1735, %v4358
        %v4389 = vmul.f32 %v1736, %v4360
        %v4390 = vmul.f32 %v1737, %v4362
        %v4391 = vmul.f32 %v1738, %v4364
        %v4392 = vmul.f32 %v1739, %v4366
        %v4393 = vmul.f32 %v1740, %v4368
        %v4394 = vmul.f32 %v1741, %v4370
        %v4395 = vmul.f32 %v1742, %v4372
        %v4396 = vmul.f32 %v1743, %v4374
        %v4397 = vmul.f32 %v1744, %v4376
        %v4398 = vmul.f32 %v1745, %v4378
        %v4399 = vmul.f32 %v1746, %v4380
        %v4400 = vmul.f32 %v1747, %v4382
        %v4401 = vmul.f32 %v1748, %v4384
        %v4402 = vmul.f32 %v1749, %v4386
        %v4403 = vadd.f32 %v4339, %v4387
        %v4404 = vadd.f32 %v4340, %v4388
        %v4405 = vadd.f32 %v4341, %v4389
        %v4406 = vadd.f32 %v4342, %v4390
        %v4407 = vadd.f32 %v4343, %v4391
        %v4408 = vadd.f32 %v4344, %v4392
        %v4409 = vadd.f32 %v4345, %v4393
        %v4410 = vadd.f32 %v4346, %v4394
        %v4411 = vadd.f32 %v4347, %v4395
        %v4412 = vadd.f32 %v4348, %v4396
        %v4413 = vadd.f32 %v4349, %v4397
        %v4414 = vadd.f32 %v4350, %v4398
        %v4415 = vadd.f32 %v4351, %v4399
        %v4416 = vadd.f32 %v4352, %v4400
        %v4417 = vadd.f32 %v4353, %v4401
        %v4418 = vadd.f32 %v4354, %v4402
        %v4419 = vmul.f32 %v1700, %v4403
        %v4420 = vmul.f32 %v1701, %v4404
        %v4421 = vmul.f32 %v1702, %v4405
        %v4422 = vmul.f32 %v1703, %v4406
        %v4423 = vmul.f32 %v1704, %v4407
        %v4424 = vmul.f32 %v1705, %v4408
        %v4425 = vmul.f32 %v1706, %v4409
        %v4426 = vmul.f32 %v1707, %v4410
        %v4427 = vmul.f32 %v1708, %v4411
        %v4428 = vmul.f32 %v1709, %v4412
        %v4429 = vmul.f32 %v1710, %v4413
        %v4430 = vmul.f32 %v1711, %v4414
        %v4431 = vmul.f32 %v1712, %v4415
        %v4432 = vmul.f32 %v1713, %v4416
        %v4433 = vmul.f32 %v1714, %v4417
        %v4434 = vmul.f32 %v1715, %v4418
        %v4435 = vadd.f32 %v4227, %v4419
        %v4436 = vadd.f32 %v4228, %v4420
        %v4437 = vadd.f32 %v4229, %v4421
        %v4438 = vadd.f32 %v4230, %v4422
        %v4439 = vadd.f32 %v4231, %v4423
        %v4440 = vadd.f32 %v4232, %v4424
        %v4441 = vadd.f32 %v4233, %v4425
        %v4442 = vadd.f32 %v4234, %v4426
        %v4443 = vadd.f32 %v4235, %v4427
        %v4444 = vadd.f32 %v4236, %v4428
        %v4445 = vadd.f32 %v4237, %v4429
        %v4446 = vadd.f32 %v4238, %v4430
        %v4447 = vadd.f32 %v4239, %v4431
        %v4448 = vadd.f32 %v4240, %v4432
        %v4449 = vadd.f32 %v4241, %v4433
        %v4450 = vadd.f32 %v4242, %v4434
        %v4451 = vsub.f32 %v3843, %v4435
        %v4452 = vsub.f32 %v3844, %v4436
        %v4453 = vsub.f32 %v3845, %v4437
        %v4454 = vsub.f32 %v3846, %v4438
        %v4455 = vsub.f32 %v3847, %v4439
        %v4456 = vsub.f32 %v3848, %v4440
        %v4457 = vsub.f32 %v3849, %v4441
        %v4458 = vsub.f32 %v3850, %v4442
        %v4459 = vsub.f32 %v3851, %v4443
        %v4460 = vsub.f32 %v3852, %v4444
        %v4461 = vsub.f32 %v3853, %v4445
        %v4462 = vsub.f32 %v3854, %v4446
        %v4463 = vsub.f32 %v3855, %v4447
        %v4464 = vsub.f32 %v3856, %v4448
        %v4465 = vsub.f32 %v3857, %v4449
        %v4466 = vsub.f32 %v3858, %v4450
        %v4467 = vmul.f32 %v4451, 255.0
        %v4468 = vmul.f32 %v4452, 255.0
        %v4469 = vmul.f32 %v4453, 255.0
        %v4470 = vmul.f32 %v4454, 255.0
        %v4471 = vmul.f32 %v4455, 255.0
        %v4472 = vmul.f32 %v4456, 255.0
        %v4473 = vmul.f32 %v4457, 255.0
        %v4474 = vmul.f32 %v4458, 255.0
        %v4475 = vmul.f32 %v4459, 255.0
        %v4476 = vmul.f32 %v4460, 255.0
        %v4477 = vmul.f32 %v4461, 255.0
        %v4478 = vmul.f32 %v4462, 255.0
        %v4479 = vmul.f32 %v4463, 255.0
        %v4480 = vmul.f32 %v4464, 255.0
        %v4481 = vmul.f32 %v4465, 255.0
        %v4482 = vmul.f32 %v4466, 255.0
        %4483 = vmatpush.xpose.msra.mxu0 %v1781
        %4484 = vmatpush.xpose.msra.mxu0 %v1780
        %4485 = vmatpush.xpose.msra.mxu0 %v1779
        %4486 = vmatpush.xpose.msra.mxu0 %v1778
        %4487 = vmatpush.xpose.msra.mxu0 %v1777
        %4488 = vmatpush.xpose.msra.mxu0 %v1776
        %4489 = vmatpush.xpose.msra.mxu0 %v1775
        %4490 = vmatpush.xpose.msra.mxu0 %v1774
        %4491 = vmatpush.xpose.msra.mxu0 %v1773
        %4492 = vmatpush.xpose.msra.mxu0 %v1772
        %4493 = vmatpush.xpose.msra.mxu0 %v1771
        %4494 = vmatpush.xpose.msra.mxu0 %v1770
        %4495 = vmatpush.xpose.msra.mxu0 %v1769
        %4496 = vmatpush.xpose.msra.mxu0 %v1768
        %4497 = vmatpush.xpose.msra.mxu0 %v1767
        %4498 = vmatpush.xpose.msra.mxu0 %v1766
        %4499 = vmatmul.f32.gmra.mxu0 %v4467
        %v4500 = vpop.f32.mrf.mxu0
        %v4501 = vadd.f32 0.0, %v4500
        %4502 = vmatmul.f32.gmra.mxu0 %v4468
        %v4503 = vpop.f32.mrf.mxu0
        %v4504 = vadd.f32 0.0, %v4503
        %4505 = vmatmul.f32.gmra.mxu0 %v4469
        %v4506 = vpop.f32.mrf.mxu0
        %v4507 = vadd.f32 0.0, %v4506
        %4508 = vmatmul.f32.gmra.mxu0 %v4470
        %v4509 = vpop.f32.mrf.mxu0
        %v4510 = vadd.f32 0.0, %v4509
        %4511 = vmatmul.f32.gmra.mxu0 %v4471
        %v4512 = vpop.f32.mrf.mxu0
        %v4513 = vadd.f32 0.0, %v4512
        %4514 = vmatmul.f32.gmra.mxu0 %v4472
        %v4515 = vpop.f32.mrf.mxu0
        %v4516 = vadd.f32 0.0, %v4515
        %4517 = vmatmul.f32.gmra.mxu0 %v4473
        %v4518 = vpop.f32.mrf.mxu0
        %v4519 = vadd.f32 0.0, %v4518
        %4520 = vmatmul.f32.gmra.mxu0 %v4474
        %v4521 = vpop.f32.mrf.mxu0
        %v4522 = vadd.f32 0.0, %v4521
        %4523 = vmatmul.f32.gmra.mxu0 %v4475
        %v4524 = vpop.f32.mrf.mxu0
        %v4525 = vadd.f32 0.0, %v4524
        %4526 = vmatmul.f32.gmra.mxu0 %v4476
        %v4527 = vpop.f32.mrf.mxu0
        %v4528 = vadd.f32 0.0, %v4527
        %4529 = vmatmul.f32.gmra.mxu0 %v4477
        %v4530 = vpop.f32.mrf.mxu0
        %v4531 = vadd.f32 0.0, %v4530
        %4532 = vmatmul.f32.gmra.mxu0 %v4478
        %v4533 = vpop.f32.mrf.mxu0
        %v4534 = vadd.f32 0.0, %v4533
        %4535 = vmatmul.f32.gmra.mxu0 %v4479
        %v4536 = vpop.f32.mrf.mxu0
        %v4537 = vadd.f32 0.0, %v4536
        %4538 = vmatmul.f32.gmra.mxu0 %v4480
        %v4539 = vpop.f32.mrf.mxu0
        %v4540 = vadd.f32 0.0, %v4539
        %4541 = vmatmul.f32.gmra.mxu0 %v4481
        %v4542 = vpop.f32.mrf.mxu0
        %v4543 = vadd.f32 0.0, %v4542
        %4544 = vmatmul.f32.gmra.mxu0 %v4482
        %v4545 = vpop.f32.mrf.mxu0
        %v4546 = vadd.f32 0.0, %v4545
        %4547 = vdwg.mxu0
        %4548 = vmatpush.msra.mxu0 %v4546
        %4549 = vmatpush.msra.mxu0 %v4543
        %4550 = vmatpush.msra.mxu0 %v4540
        %4551 = vmatpush.msra.mxu0 %v4537
        %4552 = vmatpush.msra.mxu0 %v4534
        %4553 = vmatpush.msra.mxu0 %v4531
        %4554 = vmatpush.msra.mxu0 %v4528
        %4555 = vmatpush.msra.mxu0 %v4525
        %4556 = vmatpush.msra.mxu0 %v4522
        %4557 = vmatpush.msra.mxu0 %v4519
        %4558 = vmatpush.msra.mxu0 %v4516
        %4559 = vmatpush.msra.mxu0 %v4513
        %4560 = vmatpush.msra.mxu0 %v4510
        %4561 = vmatpush.msra.mxu0 %v4507
        %4562 = vmatpush.msra.mxu0 %v4504
        %4563 = vmatpush.msra.mxu0 %v4501
        %4564 = vmatmul.f32.gmra.mxu0 %v1750
        %v4565 = vpop.f32.mrf.mxu0
        %v4566 = vadd.f32 0.0, %v4565
        %4567 = vmatmul.f32.gmra.mxu0 %v1751
        %v4568 = vpop.f32.mrf.mxu0
        %v4569 = vadd.f32 0.0, %v4568
        %4570 = vmatmul.f32.gmra.mxu0 %v1752
        %v4571 = vpop.f32.mrf.mxu0
        %v4572 = vadd.f32 0.0, %v4571
        %4573 = vmatmul.f32.gmra.mxu0 %v1753
        %v4574 = vpop.f32.mrf.mxu0
        %v4575 = vadd.f32 0.0, %v4574
        %4576 = vmatmul.f32.gmra.mxu0 %v1754
        %v4577 = vpop.f32.mrf.mxu0
        %v4578 = vadd.f32 0.0, %v4577
        %4579 = vmatmul.f32.gmra.mxu0 %v1755
        %v4580 = vpop.f32.mrf.mxu0
        %v4581 = vadd.f32 0.0, %v4580
        %4582 = vmatmul.f32.gmra.mxu0 %v1756
        %v4583 = vpop.f32.mrf.mxu0
        %v4584 = vadd.f32 0.0, %v4583
        %4585 = vmatmul.f32.gmra.mxu0 %v1757
        %v4586 = vpop.f32.mrf.mxu0
        %v4587 = vadd.f32 0.0, %v4586
        %4588 = vmatmul.f32.gmra.mxu0 %v1758
        %v4589 = vpop.f32.mrf.mxu0
        %v4590 = vadd.f32 0.0, %v4589
        %4591 = vmatmul.f32.gmra.mxu0 %v1759
        %v4592 = vpop.f32.mrf.mxu0
        %v4593 = vadd.f32 0.0, %v4592
        %4594 = vmatmul.f32.gmra.mxu0 %v1760
        %v4595 = vpop.f32.mrf.mxu0
        %v4596 = vadd.f32 0.0, %v4595
        %4597 = vmatmul.f32.gmra.mxu0 %v1761
        %v4598 = vpop.f32.mrf.mxu0
        %v4599 = vadd.f32 0.0, %v4598
        %4600 = vmatmul.f32.gmra.mxu0 %v1762
        %v4601 = vpop.f32.mrf.mxu0
        %v4602 = vadd.f32 0.0, %v4601
        %4603 = vmatmul.f32.gmra.mxu0 %v1763
        %v4604 = vpop.f32.mrf.mxu0
        %v4605 = vadd.f32 0.0, %v4604
        %4606 = vmatmul.f32.gmra.mxu0 %v1764
        %v4607 = vpop.f32.mrf.mxu0
        %v4608 = vadd.f32 0.0, %v4607
        %4609 = vmatmul.f32.gmra.mxu0 %v1765
        %v4610 = vpop.f32.mrf.mxu0
        %v4611 = vadd.f32 0.0, %v4610
        %4612 = vdwg.mxu0
        %v4613 = vmul.f32 %v4566, %v1798
        %v4614 = vmul.f32 %v4569, %v1799
        %v4615 = vmul.f32 %v4572, %v1800
        %v4616 = vmul.f32 %v4575, %v1801
        %v4617 = vmul.f32 %v4578, %v1802
        %v4618 = vmul.f32 %v4581, %v1803
        %v4619 = vmul.f32 %v4584, %v1804
        %v4620 = vmul.f32 %v4587, %v1805
        %v4621 = vmul.f32 %v4590, %v1806
        %v4622 = vmul.f32 %v4593, %v1807
        %v4623 = vmul.f32 %v4596, %v1808
        %v4624 = vmul.f32 %v4599, %v1809
        %v4625 = vmul.f32 %v4602, %v1810
        %v4626 = vmul.f32 %v4605, %v1811
        %v4627 = vmul.f32 %v4608, %v1812
        %v4628 = vmul.f32 %v4611, %v1813
        %v4629 = vround.ne.pseudo %v4613
        %v4630 = vround.ne.pseudo %v4614
        %v4631 = vround.ne.pseudo %v4615
        %v4632 = vround.ne.pseudo %v4616
        %v4633 = vround.ne.pseudo %v4617
        %v4634 = vround.ne.pseudo %v4618
        %v4635 = vround.ne.pseudo %v4619
        %v4636 = vround.ne.pseudo %v4620
        %v4637 = vround.ne.pseudo %v4621
        %v4638 = vround.ne.pseudo %v4622
        %v4639 = vround.ne.pseudo %v4623
        %v4640 = vround.ne.pseudo %v4624
        %v4641 = vround.ne.pseudo %v4625
        %v4642 = vround.ne.pseudo %v4626
        %v4643 = vround.ne.pseudo %v4627
        %v4644 = vround.ne.pseudo %v4628
        %v4645 = vmul.f32 %v4629, %v1782
        %v4646 = vmul.f32 %v4630, %v1783
        %v4647 = vmul.f32 %v4631, %v1784
        %v4648 = vmul.f32 %v4632, %v1785
        %v4649 = vmul.f32 %v4633, %v1786
        %v4650 = vmul.f32 %v4634, %v1787
        %v4651 = vmul.f32 %v4635, %v1788
        %v4652 = vmul.f32 %v4636, %v1789
        %v4653 = vmul.f32 %v4637, %v1790
        %v4654 = vmul.f32 %v4638, %v1791
        %v4655 = vmul.f32 %v4639, %v1792
        %v4656 = vmul.f32 %v4640, %v1793
        %v4657 = vmul.f32 %v4641, %v1794
        %v4658 = vmul.f32 %v4642, %v1795
        %v4659 = vmul.f32 %v4643, %v1796
        %v4660 = vmul.f32 %v4644, %v1797
        %4661 = vmatpush.msra.mxu0 %v4660
        %4662 = vmatpush.msra.mxu0 %v4659
        %4663 = vmatpush.msra.mxu0 %v4658
        %4664 = vmatpush.msra.mxu0 %v4657
        %4665 = vmatpush.msra.mxu0 %v4656
        %4666 = vmatpush.msra.mxu0 %v4655
        %4667 = vmatpush.msra.mxu0 %v4654
        %4668 = vmatpush.msra.mxu0 %v4653
        %4669 = vmatpush.msra.mxu0 %v4652
        %4670 = vmatpush.msra.mxu0 %v4651
        %4671 = vmatpush.msra.mxu0 %v4650
        %4672 = vmatpush.msra.mxu0 %v4649
        %4673 = vmatpush.msra.mxu0 %v4648
        %4674 = vmatpush.msra.mxu0 %v4647
        %4675 = vmatpush.msra.mxu0 %v4646
        %4676 = vmatpush.msra.mxu0 %v4645
        %4677 = vmatmul.f32.gmra.mxu0 %v2650
        %v4678 = vpop.f32.mrf.mxu0
        %v4679 = vadd.f32 0.0, %v4678
        %4680 = vmatmul.f32.gmra.mxu0 %v2651
        %v4681 = vpop.f32.mrf.mxu0
        %v4682 = vadd.f32 0.0, %v4681
        %4683 = vmatmul.f32.gmra.mxu0 %v2652
        %v4684 = vpop.f32.mrf.mxu0
        %v4685 = vadd.f32 0.0, %v4684
        %4686 = vmatmul.f32.gmra.mxu0 %v2653
        %v4687 = vpop.f32.mrf.mxu0
        %v4688 = vadd.f32 0.0, %v4687
        %4689 = vmatmul.f32.gmra.mxu0 %v2654
        %v4690 = vpop.f32.mrf.mxu0
        %v4691 = vadd.f32 0.0, %v4690
        %4692 = vmatmul.f32.gmra.mxu0 %v2655
        %v4693 = vpop.f32.mrf.mxu0
        %v4694 = vadd.f32 0.0, %v4693
        %4695 = vmatmul.f32.gmra.mxu0 %v2656
        %v4696 = vpop.f32.mrf.mxu0
        %v4697 = vadd.f32 0.0, %v4696
        %4698 = vmatmul.f32.gmra.mxu0 %v2657
        %v4699 = vpop.f32.mrf.mxu0
        %v4700 = vadd.f32 0.0, %v4699
        %4701 = vmatmul.f32.gmra.mxu0 %v2658
        %v4702 = vpop.f32.mrf.mxu0
        %v4703 = vadd.f32 0.0, %v4702
        %4704 = vmatmul.f32.gmra.mxu0 %v2659
        %v4705 = vpop.f32.mrf.mxu0
        %v4706 = vadd.f32 0.0, %v4705
        %4707 = vmatmul.f32.gmra.mxu0 %v2660
        %v4708 = vpop.f32.mrf.mxu0
        %v4709 = vadd.f32 0.0, %v4708
        %4710 = vmatmul.f32.gmra.mxu0 %v2661
        %v4711 = vpop.f32.mrf.mxu0
        %v4712 = vadd.f32 0.0, %v4711
        %4713 = vmatmul.f32.gmra.mxu0 %v2662
        %v4714 = vpop.f32.mrf.mxu0
        %v4715 = vadd.f32 0.0, %v4714
        %4716 = vmatmul.f32.gmra.mxu0 %v2663
        %v4717 = vpop.f32.mrf.mxu0
        %v4718 = vadd.f32 0.0, %v4717
        %4719 = vmatmul.f32.gmra.mxu0 %v2664
        %v4720 = vpop.f32.mrf.mxu0
        %v4721 = vadd.f32 0.0, %v4720
        %4722 = vmatmul.f32.gmra.mxu0 %v2665
        %v4723 = vpop.f32.mrf.mxu0
        %v4724 = vadd.f32 0.0, %v4723
        %4725 = vdwg.mxu0
        %4726 = vmatpush.msra.mxu0 %v1781
        %4727 = vmatpush.msra.mxu0 %v1780
        %4728 = vmatpush.msra.mxu0 %v1779
        %4729 = vmatpush.msra.mxu0 %v1778
        %4730 = vmatpush.msra.mxu0 %v1777
        %4731 = vmatpush.msra.mxu0 %v1776
        %4732 = vmatpush.msra.mxu0 %v1775
        %4733 = vmatpush.msra.mxu0 %v1774
        %4734 = vmatpush.msra.mxu0 %v1773
        %4735 = vmatpush.msra.mxu0 %v1772
        %4736 = vmatpush.msra.mxu0 %v1771
        %4737 = vmatpush.msra.mxu0 %v1770
        %4738 = vmatpush.msra.mxu0 %v1769
        %4739 = vmatpush.msra.mxu0 %v1768
        %4740 = vmatpush.msra.mxu0 %v1767
        %4741 = vmatpush.msra.mxu0 %v1766
        %4742 = vmatmul.f32.gmra.mxu0 %v4679
        %v4743 = vpop.f32.mrf.mxu0
        %v4744 = vadd.f32 0.0, %v4743
        %4745 = vmatmul.f32.gmra.mxu0 %v4682
        %v4746 = vpop.f32.mrf.mxu0
        %v4747 = vadd.f32 0.0, %v4746
        %4748 = vmatmul.f32.gmra.mxu0 %v4685
        %v4749 = vpop.f32.mrf.mxu0
        %v4750 = vadd.f32 0.0, %v4749
        %4751 = vmatmul.f32.gmra.mxu0 %v4688
        %v4752 = vpop.f32.mrf.mxu0
        %v4753 = vadd.f32 0.0, %v4752
        %4754 = vmatmul.f32.gmra.mxu0 %v4691
        %v4755 = vpop.f32.mrf.mxu0
        %v4756 = vadd.f32 0.0, %v4755
        %4757 = vmatmul.f32.gmra.mxu0 %v4694
        %v4758 = vpop.f32.mrf.mxu0
        %v4759 = vadd.f32 0.0, %v4758
        %4760 = vmatmul.f32.gmra.mxu0 %v4697
        %v4761 = vpop.f32.mrf.mxu0
        %v4762 = vadd.f32 0.0, %v4761
        %4763 = vmatmul.f32.gmra.mxu0 %v4700
        %v4764 = vpop.f32.mrf.mxu0
        %v4765 = vadd.f32 0.0, %v4764
        %4766 = vmatmul.f32.gmra.mxu0 %v4703
        %v4767 = vpop.f32.mrf.mxu0
        %v4768 = vadd.f32 0.0, %v4767
        %4769 = vmatmul.f32.gmra.mxu0 %v4706
        %v4770 = vpop.f32.mrf.mxu0
        %v4771 = vadd.f32 0.0, %v4770
        %4772 = vmatmul.f32.gmra.mxu0 %v4709
        %v4773 = vpop.f32.mrf.mxu0
        %v4774 = vadd.f32 0.0, %v4773
        %4775 = vmatmul.f32.gmra.mxu0 %v4712
        %v4776 = vpop.f32.mrf.mxu0
        %v4777 = vadd.f32 0.0, %v4776
        %4778 = vmatmul.f32.gmra.mxu0 %v4715
        %v4779 = vpop.f32.mrf.mxu0
        %v4780 = vadd.f32 0.0, %v4779
        %4781 = vmatmul.f32.gmra.mxu0 %v4718
        %v4782 = vpop.f32.mrf.mxu0
        %v4783 = vadd.f32 0.0, %v4782
        %4784 = vmatmul.f32.gmra.mxu0 %v4721
        %v4785 = vpop.f32.mrf.mxu0
        %v4786 = vadd.f32 0.0, %v4785
        %4787 = vmatmul.f32.gmra.mxu0 %v4724
        %v4788 = vpop.f32.mrf.mxu0
        %v4789 = vadd.f32 0.0, %v4788
        %4790 = vdwg.mxu0
        %v4791 = vmul.f32 %v4744, 0.003921569
        %v4792 = vmul.f32 %v4747, 0.003921569
        %v4793 = vmul.f32 %v4750, 0.003921569
        %v4794 = vmul.f32 %v4753, 0.003921569
        %v4795 = vmul.f32 %v4756, 0.003921569
        %v4796 = vmul.f32 %v4759, 0.003921569
        %v4797 = vmul.f32 %v4762, 0.003921569
        %v4798 = vmul.f32 %v4765, 0.003921569
        %v4799 = vmul.f32 %v4768, 0.003921569
        %v4800 = vmul.f32 %v4771, 0.003921569
        %v4801 = vmul.f32 %v4774, 0.003921569
        %v4802 = vmul.f32 %v4777, 0.003921569
        %v4803 = vmul.f32 %v4780, 0.003921569
        %v4804 = vmul.f32 %v4783, 0.003921569
        %v4805 = vmul.f32 %v4786, 0.003921569
        %v4806 = vmul.f32 %v4789, 0.003921569
        %v4807 = vadd.f32 %v4435, %v4791
        %v4808 = vadd.f32 %v4436, %v4792
        %v4809 = vadd.f32 %v4437, %v4793
        %v4810 = vadd.f32 %v4438, %v4794
        %v4811 = vadd.f32 %v4439, %v4795
        %v4812 = vadd.f32 %v4440, %v4796
        %v4813 = vadd.f32 %v4441, %v4797
        %v4814 = vadd.f32 %v4442, %v4798
        %v4815 = vadd.f32 %v4443, %v4799
        %v4816 = vadd.f32 %v4444, %v4800
        %v4817 = vadd.f32 %v4445, %v4801
        %v4818 = vadd.f32 %v4446, %v4802
        %v4819 = vadd.f32 %v4447, %v4803
        %v4820 = vadd.f32 %v4448, %v4804
        %v4821 = vadd.f32 %v4449, %v4805
        %v4822 = vadd.f32 %v4450, %v4806
        %s4823 = scalar_lea.vmem %s400, 256 [#allocation10]
        %4824 = vst [vmem:[%s4823] sm:$0xff] %v4807
        %4825 = vst [vmem:[%s4823 + $0x8] sm:$0xff] %v4808
        %4826 = vst [vmem:[%s4823 + $0x10] sm:$0xff] %v4809
        %4827 = vst [vmem:[%s4823 + $0x18] sm:$0xff] %v4810
        %4828 = vst [vmem:[%s4823 + $0x20] sm:$0xff] %v4811
        %4829 = vst [vmem:[%s4823 + $0x28] sm:$0xff] %v4812
        %4830 = vst [vmem:[%s4823 + $0x30] sm:$0xff] %v4813
        %4831 = vst [vmem:[%s4823 + $0x38] sm:$0xff] %v4814
        %4832 = vst [vmem:[%s4823 + $0x40] sm:$0xff] %v4815
        %4833 = vst [vmem:[%s4823 + $0x48] sm:$0xff] %v4816
        %4834 = vst [vmem:[%s4823 + $0x50] sm:$0xff] %v4817
        %4835 = vst [vmem:[%s4823 + $0x58] sm:$0xff] %v4818
        %4836 = vst [vmem:[%s4823 + $0x60] sm:$0xff] %v4819
        %4837 = vst [vmem:[%s4823 + $0x68] sm:$0xff] %v4820
        %4838 = vst [vmem:[%s4823 + $0x70] sm:$0xff] %v4821
        %4839 = vst [vmem:[%s4823 + $0x78] sm:$0xff] %v4822
        %s4840 = sand.u32 %s215, 1
        %s4841 = scalar_lea.sflag [#allocation4], %s4840
        %s4842 = sand.u32 %s215, 1
        %s4843 = smul.addr %s4842, 384
        %s4844 = scalar_lea.vmem [#allocation10], %s4843
        // Predicated region
        $region69: #{tpu_custom_call.1} parent=51 // pred_check
          %p4845 = pneg %p225
        $region70: #{tpu_custom_call.1} parent=51 // pred_check_branch
          %4847 = sbr.rel (%p4845) target = $region72
        $region71: #{tpu_custom_call.1} parent=51 // pred_region
          %4849 = vsyncadd %s4841, 0
          %s4850 = smul.addr %s29, 48
          %s4851 = smul.addr %s4850, 8
          %s4852 = scalar_lea.hbm %s8, %s4851
          %s4853 = sshll.u32 %s4844, 4
          %s4854 = int_to_ptr.vmem [resolvable:$true] %s4853
          %s4855 = sshll.u32 %s4852, 4
          %s4856 = int_to_ptr.hbm [resolvable:$true] %s4855
          %4861 = dma.vmem_to_hbm [thread:$0]  %s4854, 6144, %s4856, %s4841, 128, 128, 8
        $region72: #{tpu_custom_call.1} parent=51 // pred_fallthru
          _
      $region52: #{tpu_custom_call.1} parent=5 // pred_fallthru
        _
      %p4862 = scmp.le.s32.totalorder 2, %s24
      // Predicated region
      $region73: #{tpu_custom_call.1} parent=5 // pred_check
        %p4863 = pneg %p4862
      $region74: #{tpu_custom_call.1} parent=5 // pred_check_branch
        %4865 = sbr.rel (%p4863) target = $region76
      $region75: #{tpu_custom_call.1} parent=5 // pred_region
        %s4866 = ssub.s32 %s24, 2
        // Predicated region
        $region77: #{tpu_custom_call.1} parent=75 // pred_check
          %p4867 = pneg %p231
        $region78: #{tpu_custom_call.1} parent=75 // pred_check_branch
          %4869 = sbr.rel (%p4867) target = $region80
        $region79: #{tpu_custom_call.1} parent=75 // pred_region
          %s4870 = sand.u32 %s216, 1
          %s4871 = scalar_lea.sflag [#allocation4], %s4870
          %s4872 = sand.u32 %s216, 1
          %s4873 = smul.addr %s4872, 384
          %s4874 = scalar_lea.vmem [#allocation10], %s4873
          %4876 = dma.done %s4871, 6144
        $region80: #{tpu_custom_call.1} parent=75 // pred_fallthru
          _
      $region76: #{tpu_custom_call.1} parent=5 // pred_fallthru
        _
    $region6: #{tpu_custom_call.1} parent=1 // loop_footer
      %s28 = sadd.s32 1, %s24
    $region7: #{tpu_custom_call.1} parent=1 // loop_footer_branch
      %23 = sbr.rel target = $region3
    $region8: #{tpu_custom_call.1} parent=1 // loop_exit
      _
    %4877 = vsyncpa [#allocation3], 1
    %s4878 = scalar_lea.sflag [#allocation3], 1
    %4879 = vsyncpa %s4878, 1
    %4880 = vsyncpa [#allocation6], 1
    %s4881 = scalar_lea.sflag [#allocation6], 1
    %4882 = vsyncpa %s4881, 1
    %4883 = vsyncpa [#allocation9], 1
    %4884 = vsyncpa [#allocation4], 1
    %s4885 = scalar_lea.sflag [#allocation4], 1
    %4886 = vsyncpa %s4885, 1

</llo_original>
